<compile_context>
chip_gen: v6e
topology: v6e:2x2x1
jax: 0.10.0
libtpu: 0.0.40
codegen_flags: <defaults>
</compile_context>

<pallas_src>
import math

import jax
import jax.numpy as jnp
from jax import lax
from jax.experimental import pallas as pl
from jax.experimental.pallas import tpu as pltpu

NUM_HEADS = 16     # fixed: nn.BatchNorm2d(16) in the reference module
BN_EPS = 1e-5      # nn.BatchNorm2d default eps
LN_EPS = 1e-6      # nn.LayerNorm(eps=1e-6)


def _layer_norm(x, gamma, beta, eps):
    mu = jnp.mean(x, axis=-1, keepdims=True)
    var = jnp.mean(jnp.square(x - mu), axis=-1, keepdims=True)
    return (x - mu) * lax.rsqrt(var + eps) * gamma + beta


def block_kernel(
    x_ref,                       # (R, H)  R = TB*S activation rows
    mask_ref,                    # (R, R)  additive block-diagonal seq mask
    ln1_g_ref, ln1_b_ref,        # (1, H)
    wq_ref, bq_ref,              # (H, H) bf16 / (1, H)  (BN1 scale + 1/sqrt(Dh) folded)
    wk_ref,                      # (H, H) bf16           (K bias cancels in softmax)
    wv_ref, bv_ref,              # (H, H) bf16 / (1, H)
    wo_ref, bo_ref,              # (H, H) bf16 (BN2 scale folded) / (1, H) (BN2 shift folded)
    ln2_g_ref, ln2_b_ref,        # (1, H)
    w1_ref, b1_ref,              # (H, 4H) bf16 / (1, 4H)
    w2_ref, b2_ref,              # (4H, H) bf16 / (1, H)
    o_ref,                       # (R, H)
    ctx_ref,                     # (R, H) f32 scratch: per-head context assembly
):
    R, H = x_ref.shape
    Dh = H // NUM_HEADS
    bf16 = jnp.bfloat16

    x = x_ref[...].astype(jnp.float32)

    # ---------------- attention_norm (LayerNorm, f32) ----------------
    xn = _layer_norm(x, ln1_g_ref[...], ln1_b_ref[...], LN_EPS)
    xn_bf = xn.astype(bf16)

    # ------------- dense Q/K/V projections: full-width MXU dots -------------
    q = jnp.dot(xn_bf, wq_ref[...], preferred_element_type=jnp.float32) + bq_ref[...]
    k = jnp.dot(xn_bf, wk_ref[...], preferred_element_type=jnp.float32)
    v = jnp.dot(xn_bf, wv_ref[...], preferred_element_type=jnp.float32) + bv_ref[...]

    mask = mask_ref[...]

    # ---------------- per-head attention (f32, lane-axis softmax) -----------
    # head_dim is tiny (H/16) so these matmuls are negligible; the additive
    # block-diagonal mask keeps the TB sequences inside this slab independent.
    for n in range(NUM_HEADS):
        lo, hi = n * Dh, (n + 1) * Dh
        s = jnp.einsum('qd,kd->qk', q[:, lo:hi], k[:, lo:hi],
                       preferred_element_type=jnp.float32) + mask     # (R, R)
        s = s - jnp.max(s, axis=-1, keepdims=True)
        e = jnp.exp(s)
        p_attn = e * pl.reciprocal(jnp.sum(e, axis=-1, keepdims=True), approx=True)
        # attn_dropout(p=0.0) -> identity
        ctx_ref[:, lo:hi] = jnp.dot(p_attn, v[:, lo:hi],
                                    preferred_element_type=jnp.float32)

    # ------------- output projection (BN2 folded) + residual 1 -------------
    attn_out = jnp.dot(ctx_ref[...].astype(bf16), wo_ref[...],
                       preferred_element_type=jnp.float32) + bo_ref[...]
    # proj_dropout(p=0.0) -> identity
    x1 = attn_out + x

    # ---------------- ffn_norm + MLP ----------------
    xn2 = _layer_norm(x1, ln2_g_ref[...], ln2_b_ref[...], LN_EPS)
    h1 = jnp.dot(xn2.astype(bf16), w1_ref[...],
                 preferred_element_type=jnp.float32) + b1_ref[...]
    # exact (erf) GELU, matching torch.nn.functional.gelu default
    h1 = 0.5 * h1 * (1.0 + lax.erf(h1 * (1.0 / math.sqrt(2.0))))
    # Mlp dropout(p=0.1) -> identity in eval mode
    h2 = jnp.dot(h1.astype(bf16), w2_ref[...],
                 preferred_element_type=jnp.float32) + b2_ref[...]

    o_ref[...] = (h2 + x1).astype(o_ref.dtype)                 # residual 2


def _arrange_params(raw, H):
    """Fold eval-mode BatchNorms exactly into the dense 2-D projection weights
    and cast matmul weights to bf16.  Column order n*Dh+d <-> (head n, dim d)."""
    NH = NUM_HEADS
    Dh = H // NH
    f32, bf16 = jnp.float32, jnp.bfloat16

    # BatchNorm2d(16) eval-mode affine, channel == head.
    inv1 = (raw['bn1_g'] * lax.rsqrt(raw['bn1_v'] + BN_EPS)).reshape(NH)
    q_col_scale = jnp.repeat(inv1 / math.sqrt(Dh), Dh)                  # (H,)
    # BN1 shift (beta - mean*inv1) is constant along the softmax axis -> cancels.
    inv2 = (raw['bn2_g'] * lax.rsqrt(raw['bn2_v'] + BN_EPS)).reshape(NH)
    bn2_scale_col = jnp.repeat(inv2, Dh)                                 # (H,)
    bn2_shift_col = jnp.repeat(
        raw['bn2_b'].reshape(NH) - raw['bn2_m'].reshape(NH) * inv2, Dh)  # (H,)

    wq = (raw['wq'] * q_col_scale[None, :]).astype(bf16)
    bq = (raw['bq'] * q_col_scale[None, :]).astype(f32)
    wk = raw['wk'].astype(bf16)          # K bias cancels along the key axis
    wv = raw['wv'].astype(bf16)
    bv = raw['bv'].astype(f32)
    wo = (raw['wo'] * bn2_scale_col[:, None]).astype(bf16)
    bo = (raw['bo'] + bn2_shift_col[None, :] @ raw['wo']).astype(f32)

    return dict(
        ln1_g=raw['ln1_g'], ln1_b=raw['ln1_b'],
        wq=wq, bq=bq, wk=wk, wv=wv, bv=bv, wo=wo, bo=bo,
        ln2_g=raw['ln2_g'], ln2_b=raw['ln2_b'],
        w1=raw['w1'].astype(bf16), b1=raw['b1'],
        w2=raw['w2'].astype(bf16), b2=raw['b2'],
    )


def _choose_batch_tile(B, S):
    """Sequences per grid step: amortize per-step pipeline overhead (~0.35us)
    while (a) keeping the grid length >= 2 so both v7x TensorCores get work and
    (b) bounding the block-diagonal-mask attention waste ((TB*S)^2 scores)."""
    target_rows = 128
    cap = max(1, min(B, target_rows // max(S, 1), 8))
    if B >= 2:
        cap = min(cap, max(1, B // 2))
    tb = 1
    for cand in range(1, cap + 1):
        if B % cand == 0:
            tb = cand
    return tb


def block_forward(x, raw_params):
    """x: (B, S, H) float32. Eval-mode forward of `Block`. Returns (B, S, H)."""
    B, S, H = x.shape
    assert H % NUM_HEADS == 0
    p = _arrange_params(raw_params, H)

    TB = _choose_batch_tile(B, S)
    rows = TB * S
    n_blocks = B // TB

    # Additive block-diagonal mask: TB sequences share one attention slab but
    # never attend across each other (exact: exp(-1e30 - max) == 0).
    seq_id = jnp.arange(rows, dtype=jnp.int32) // S
    attn_mask = jnp.where(seq_id[:, None] == seq_id[None, :],
                          0.0, -1e30).astype(jnp.float32)

    x2d = x.reshape(B * S, H)

    def pinned(a):   # whole array resident in VMEM, same block every grid step
        nd = a.ndim
        return pl.BlockSpec(a.shape, lambda i, nd=nd: (0,) * nd)

    args = (
        x2d, attn_mask,
        p['ln1_g'], p['ln1_b'],
        p['wq'], p['bq'], p['wk'], p['wv'], p['bv'],
        p['wo'], p['bo'],
        p['ln2_g'], p['ln2_b'],
        p['w1'], p['b1'], p['w2'], p['b2'],
    )
    in_specs = [pl.BlockSpec((rows, H), lambda i: (i, 0))]
    in_specs += [pinned(a) for a in args[1:]]

    # TODO(synk): at realistic hidden sizes on v7x (64 MiB VMEM), the pinned
    # bf16 weights should be single-buffered (pl.Buffered(1)) or the MLP
    # weights K-tiled over an extra reduction grid axis to stay in budget.
    out2d = pl.pallas_call(
        block_kernel,
        out_shape=jax.ShapeDtypeStruct((B * S, H), x.dtype),
        grid=(n_blocks,),
        in_specs=in_specs,
        out_specs=pl.BlockSpec((rows, H), lambda i: (i, 0)),
        scratch_shapes=[pltpu.VMEM((rows, H), jnp.float32)],
        compiler_params=pltpu.CompilerParams(
            dimension_semantics=("parallel",),     # megacore-shard batch (v7x)
            vmem_limit_bytes=32 * 1024 * 1024,
        ),
    )(*args)
    return out2d.reshape(B, S, H)


def init_params(key, hidden_size):
    """Deterministic synthetic parameters. Linear weights stored as (in, out)
    so that y = x @ W + b (i.e. PyTorch weight transposed)."""
    H = hidden_size
    keys = jax.random.split(key, 6)

    def linear(k, fan_in, fan_out, b_std=0.02):
        kw, kb = jax.random.split(k)
        w = jax.random.normal(kw, (fan_in, fan_out), jnp.float32) / math.sqrt(fan_in)
        b = jax.random.normal(kb, (1, fan_out), jnp.float32) * b_std
        return w, b

    wq, bq = linear(keys[0], H, H)
    wk, bk = linear(keys[1], H, H)
    wv, bv = linear(keys[2], H, H)
    wo, bo = linear(keys[3], H, H)
    w1, b1 = linear(keys[4], H, 4 * H, b_std=1e-6)   # Mlp.fc1 (bias ~ N(0,1e-6))
    w2, b2 = linear(keys[5], 4 * H, H, b_std=1e-6)   # Mlp.fc2

    ones_h = jnp.ones((1, H), jnp.float32)
    zeros_h = jnp.zeros((1, H), jnp.float32)
    ones_c = jnp.ones((1, NUM_HEADS), jnp.float32)
    zeros_c = jnp.zeros((1, NUM_HEADS), jnp.float32)

    return dict(
        ln1_g=ones_h, ln1_b=zeros_h,
        wq=wq, bq=bq, wk=wk, bk=bk, wv=wv, bv=bv, wo=wo, bo=bo,
        # BatchNorm2d(16): weight=1, bias=0, running_mean=0, running_var=1
        bn1_g=ones_c, bn1_b=zeros_c, bn1_m=zeros_c, bn1_v=ones_c,
        bn2_g=ones_c, bn2_b=zeros_c, bn2_m=zeros_c, bn2_v=ones_c,
        ln2_g=ones_h, ln2_b=zeros_h,
        w1=w1, b1=b1, w2=w2, b2=b2,
    )


def block_reference(x, raw):
    """Pure-JAX f32 reference (eval-mode semantics of the PyTorch module)."""
    B, S, H = x.shape
    NH = NUM_HEADS
    Dh = H // NH

    def ln(v, g, b):
        mu = jnp.mean(v, -1, keepdims=True)
        var = jnp.mean(jnp.square(v - mu), -1, keepdims=True)
        return (v - mu) / jnp.sqrt(var + LN_EPS) * g + b

    h = x
    xn = ln(x, raw['ln1_g'], raw['ln1_b'])
    q = xn @ raw['wq'] + raw['bq']
    k = xn @ raw['wk'] + raw['bk']
    v = xn @ raw['wv'] + raw['bv']

    def heads(t):
        return jnp.transpose(t.reshape(B, S, NH, Dh), (0, 2, 1, 3))

    qh, kh, vh = heads(q), heads(k), heads(v)
    s = jnp.einsum('bnqd,bnkd->bnqk', qh, kh) / math.sqrt(Dh)

    def bn(t, g, b, m, var):
        g, b, m, var = (a.reshape(1, NH, 1, 1) for a in (g, b, m, var))
        return (t - m) / jnp.sqrt(var + BN_EPS) * g + b

    s = bn(s, raw['bn1_g'], raw['bn1_b'], raw['bn1_m'], raw['bn1_v'])
    p = jax.nn.softmax(s, axis=-1)
    c = jnp.einsum('bnqk,bnkd->bnqd', p, vh)
    c = bn(c, raw['bn2_g'], raw['bn2_b'], raw['bn2_m'], raw['bn2_v'])
    c = jnp.transpose(c, (0, 2, 1, 3)).reshape(B, S, H)
    attn = c @ raw['wo'] + raw['bo']
    x1 = attn + h
    xn2 = ln(x1, raw['ln2_g'], raw['ln2_b'])
    y = xn2 @ raw['w1'] + raw['b1']
    y = 0.5 * y * (1.0 + lax.erf(y * (1.0 / math.sqrt(2.0))))
    y = y @ raw['w2'] + raw['b2']
    return y + x1


if __name__ == "__main__":
    hidden_size = 32          # divisible by NUM_HEADS=16 -> head_size=2
    B, S = 2, 8

    key = jax.random.PRNGKey(0)
    k_x, k_p = jax.random.split(key)
    x = jax.random.normal(k_x, (B, S, hidden_size), jnp.float32)
    params = init_params(k_p, hidden_size)

    out = jax.block_until_ready(block_forward(x, params))
    assert out.shape == (B, S, hidden_size)
    assert bool(jnp.all(jnp.isfinite(out)))

    # loose tolerance: kernel uses bf16 matmul operands + approx reciprocal
    ref = block_reference(x, params)
    max_err = float(jnp.max(jnp.abs(out - ref)))
    assert max_err < 0.2, f"kernel/reference mismatch: max abs err = {max_err}"
    print("KERNEL_OK")
</pallas_src>

<mosaic_0001>
module attributes {stable_mosaic.version = 11 : i64} {
  func.func @block_kernel(%arg0: i32, %arg1: memref<8x32xf32, #tpu.memory_space<vmem>>, %arg2: memref<8x8xf32, #tpu.memory_space<vmem>>, %arg3: memref<1x32xf32, #tpu.memory_space<vmem>>, %arg4: memref<1x32xf32, #tpu.memory_space<vmem>>, %arg5: memref<32x32xbf16, #tpu.memory_space<vmem>>, %arg6: memref<1x32xf32, #tpu.memory_space<vmem>>, %arg7: memref<32x32xbf16, #tpu.memory_space<vmem>>, %arg8: memref<32x32xbf16, #tpu.memory_space<vmem>>, %arg9: memref<1x32xf32, #tpu.memory_space<vmem>>, %arg10: memref<32x32xbf16, #tpu.memory_space<vmem>>, %arg11: memref<1x32xf32, #tpu.memory_space<vmem>>, %arg12: memref<1x32xf32, #tpu.memory_space<vmem>>, %arg13: memref<1x32xf32, #tpu.memory_space<vmem>>, %arg14: memref<32x128xbf16, #tpu.memory_space<vmem>>, %arg15: memref<1x128xf32, #tpu.memory_space<vmem>>, %arg16: memref<128x32xbf16, #tpu.memory_space<vmem>>, %arg17: memref<1x32xf32, #tpu.memory_space<vmem>>, %arg18: memref<8x32xf32, #tpu.memory_space<vmem>>, %arg19: memref<8x32xf32, #tpu.memory_space<vmem>>) attributes {dimension_semantics = [#tpu.dimension_semantics<parallel>], iteration_bounds = array<i64: 2>, scalar_prefetch = 0 : i64, scratch_operands = 1 : i64, tpu.core_type = #tpu.core_type<tc>, window_params = [{transform_indices = @transform_0, window_bounds = array<i64: 8, 32>}, {pipeline_mode = #tpu.pipeline_mode<synchronous>, transform_indices = @transform_1, window_bounds = array<i64: 8, 8>}, {pipeline_mode = #tpu.pipeline_mode<synchronous>, transform_indices = @transform_2, window_bounds = array<i64: 1, 32>}, {pipeline_mode = #tpu.pipeline_mode<synchronous>, transform_indices = @transform_3, window_bounds = array<i64: 1, 32>}, {pipeline_mode = #tpu.pipeline_mode<synchronous>, transform_indices = @transform_4, window_bounds = array<i64: 32, 32>}, {pipeline_mode = #tpu.pipeline_mode<synchronous>, transform_indices = @transform_5, window_bounds = array<i64: 1, 32>}, {pipeline_mode = #tpu.pipeline_mode<synchronous>, transform_indices = @transform_6, window_bounds = array<i64: 32, 32>}, {pipeline_mode = #tpu.pipeline_mode<synchronous>, transform_indices = @transform_7, window_bounds = array<i64: 32, 32>}, {pipeline_mode = #tpu.pipeline_mode<synchronous>, transform_indices = @transform_8, window_bounds = array<i64: 1, 32>}, {pipeline_mode = #tpu.pipeline_mode<synchronous>, transform_indices = @transform_9, window_bounds = array<i64: 32, 32>}, {pipeline_mode = #tpu.pipeline_mode<synchronous>, transform_indices = @transform_10, window_bounds = array<i64: 1, 32>}, {pipeline_mode = #tpu.pipeline_mode<synchronous>, transform_indices = @transform_11, window_bounds = array<i64: 1, 32>}, {pipeline_mode = #tpu.pipeline_mode<synchronous>, transform_indices = @transform_12, window_bounds = array<i64: 1, 32>}, {pipeline_mode = #tpu.pipeline_mode<synchronous>, transform_indices = @transform_13, window_bounds = array<i64: 32, 128>}, {pipeline_mode = #tpu.pipeline_mode<synchronous>, transform_indices = @transform_14, window_bounds = array<i64: 1, 128>}, {pipeline_mode = #tpu.pipeline_mode<synchronous>, transform_indices = @transform_15, window_bounds = array<i64: 128, 32>}, {pipeline_mode = #tpu.pipeline_mode<synchronous>, transform_indices = @transform_16, window_bounds = array<i64: 1, 32>}, {transform_indices = @transform_17, window_bounds = array<i64: 8, 32>}]} {
    %c0 = arith.constant 0 : index
    %c0_0 = arith.constant 0 : index
    %0 = vector.load %arg1[%c0, %c0_0] : memref<8x32xf32, #tpu.memory_space<vmem>>, vector<8x32xf32>
    %c0_1 = arith.constant 0 : index
    %c0_2 = arith.constant 0 : index
    %1 = vector.load %arg3[%c0_1, %c0_2] : memref<1x32xf32, #tpu.memory_space<vmem>>, vector<1x32xf32>
    %c0_3 = arith.constant 0 : index
    %c0_4 = arith.constant 0 : index
    %2 = vector.load %arg4[%c0_3, %c0_4] : memref<1x32xf32, #tpu.memory_space<vmem>>, vector<1x32xf32>
    %cst = arith.constant dense<0.000000e+00> : vector<8xf32>
    %3 = vector.multi_reduction <add>, %0, %cst [1] : vector<8x32xf32> to vector<8xf32>
    %4 = vector.shape_cast %3 : vector<8xf32> to vector<8x1xf32>
    %cst_5 = arith.constant 3.200000e+01 : f32
    %5 = vector.broadcast %cst_5 : f32 to vector<8x1xf32>
    %6 = arith.divf %4, %5 : vector<8x1xf32>
    %7 = vector.broadcast %6 : vector<8x1xf32> to vector<8x32xf32>
    %8 = arith.subf %0, %7 : vector<8x32xf32>
    %9 = arith.mulf %8, %8 : vector<8x32xf32>
    %cst_6 = arith.constant dense<0.000000e+00> : vector<8xf32>
    %10 = vector.multi_reduction <add>, %9, %cst_6 [1] : vector<8x32xf32> to vector<8xf32>
    %11 = vector.shape_cast %10 : vector<8xf32> to vector<8x1xf32>
    %cst_7 = arith.constant 3.200000e+01 : f32
    %12 = vector.broadcast %cst_7 : f32 to vector<8x1xf32>
    %13 = arith.divf %11, %12 : vector<8x1xf32>
    %14 = vector.broadcast %6 : vector<8x1xf32> to vector<8x32xf32>
    %15 = arith.subf %0, %14 : vector<8x32xf32>
    %cst_8 = arith.constant 9.99999997E-7 : f32
    %16 = vector.broadcast %cst_8 : f32 to vector<8x1xf32>
    %17 = arith.addf %13, %16 : vector<8x1xf32>
    %18 = math.rsqrt %17 : vector<8x1xf32>
    %19 = vector.broadcast %18 : vector<8x1xf32> to vector<8x32xf32>
    %20 = arith.mulf %15, %19 : vector<8x32xf32>
    %21 = vector.broadcast %1 : vector<1x32xf32> to vector<8x32xf32>
    %22 = arith.mulf %20, %21 : vector<8x32xf32>
    %23 = vector.broadcast %2 : vector<1x32xf32> to vector<8x32xf32>
    %24 = arith.addf %22, %23 : vector<8x32xf32>
    %25 = arith.truncf %24 : vector<8x32xf32> to vector<8x32xbf16>
    %c0_9 = arith.constant 0 : index
    %c0_10 = arith.constant 0 : index
    %26 = vector.load %arg5[%c0_9, %c0_10] : memref<32x32xbf16, #tpu.memory_space<vmem>>, vector<32x32xbf16>
    %cst_11 = arith.constant dense<0.000000e+00> : vector<8x32xf32>
    %27 = tpu.matmul %25, %26, %cst_11 {dimension_numbers = #tpu.dot_dimension_numbers<[1], [0], [0], [1], [0, 0, 1, 1], [], []>} : vector<8x32xbf16>, vector<32x32xbf16>, vector<8x32xf32> -> vector<8x32xf32>
    %c0_12 = arith.constant 0 : index
    %c0_13 = arith.constant 0 : index
    %28 = vector.load %arg6[%c0_12, %c0_13] : memref<1x32xf32, #tpu.memory_space<vmem>>, vector<1x32xf32>
    %29 = vector.broadcast %28 : vector<1x32xf32> to vector<8x32xf32>
    %30 = arith.addf %27, %29 : vector<8x32xf32>
    %c0_14 = arith.constant 0 : index
    %c0_15 = arith.constant 0 : index
    %31 = vector.load %arg7[%c0_14, %c0_15] : memref<32x32xbf16, #tpu.memory_space<vmem>>, vector<32x32xbf16>
    %cst_16 = arith.constant dense<0.000000e+00> : vector<8x32xf32>
    %32 = tpu.matmul %25, %31, %cst_16 {dimension_numbers = #tpu.dot_dimension_numbers<[1], [0], [0], [1], [0, 0, 1, 1], [], []>} : vector<8x32xbf16>, vector<32x32xbf16>, vector<8x32xf32> -> vector<8x32xf32>
    %c0_17 = arith.constant 0 : index
    %c0_18 = arith.constant 0 : index
    %33 = vector.load %arg8[%c0_17, %c0_18] : memref<32x32xbf16, #tpu.memory_space<vmem>>, vector<32x32xbf16>
    %cst_19 = arith.constant dense<0.000000e+00> : vector<8x32xf32>
    %34 = tpu.matmul %25, %33, %cst_19 {dimension_numbers = #tpu.dot_dimension_numbers<[1], [0], [0], [1], [0, 0, 1, 1], [], []>} : vector<8x32xbf16>, vector<32x32xbf16>, vector<8x32xf32> -> vector<8x32xf32>
    %c0_20 = arith.constant 0 : index
    %c0_21 = arith.constant 0 : index
    %35 = vector.load %arg9[%c0_20, %c0_21] : memref<1x32xf32, #tpu.memory_space<vmem>>, vector<1x32xf32>
    %36 = vector.broadcast %35 : vector<1x32xf32> to vector<8x32xf32>
    %37 = arith.addf %34, %36 : vector<8x32xf32>
    %c0_22 = arith.constant 0 : index
    %c0_23 = arith.constant 0 : index
    %38 = vector.load %arg2[%c0_22, %c0_23] : memref<8x8xf32, #tpu.memory_space<vmem>>, vector<8x8xf32>
    %39 = vector.extract_strided_slice %30 {offsets = [0, 0], sizes = [8, 2], strides = [1, 1]} : vector<8x32xf32> to vector<8x2xf32>
    %40 = vector.extract_strided_slice %32 {offsets = [0, 0], sizes = [8, 2], strides = [1, 1]} : vector<8x32xf32> to vector<8x2xf32>
    "tpu.trace_start"() <{level = 10 : i32, message = "qd,kd->qk"}> : () -> ()
    %cst_24 = arith.constant dense<0.000000e+00> : vector<8x8xf32>
    %41 = tpu.matmul %39, %40, %cst_24 {dimension_numbers = #tpu.dot_dimension_numbers<[1], [1], [0], [0], [0, 0, 1, 0], [], []>} : vector<8x2xf32>, vector<8x2xf32>, vector<8x8xf32> -> vector<8x8xf32>
    "tpu.trace_stop"() : () -> ()
    %42 = arith.addf %41, %38 : vector<8x8xf32>
    %cst_25 = arith.constant dense<0xFF800000> : vector<8xf32>
    %43 = vector.multi_reduction <maximumf>, %42, %cst_25 [1] : vector<8x8xf32> to vector<8xf32>
    %44 = vector.shape_cast %43 : vector<8xf32> to vector<8x1xf32>
    %45 = vector.broadcast %44 : vector<8x1xf32> to vector<8x8xf32>
    %46 = arith.subf %42, %45 : vector<8x8xf32>
    %47 = math.exp %46 : vector<8x8xf32>
    %cst_26 = arith.constant dense<0.000000e+00> : vector<8xf32>
    %48 = vector.multi_reduction <add>, %47, %cst_26 [1] : vector<8x8xf32> to vector<8xf32>
    %49 = vector.shape_cast %48 : vector<8xf32> to vector<8x1xf32>
    %50 = tpu.reciprocal %49 {approx = true} : vector<8x1xf32> -> vector<8x1xf32>
    %51 = vector.broadcast %50 : vector<8x1xf32> to vector<8x8xf32>
    %52 = arith.mulf %47, %51 : vector<8x8xf32>
    %53 = vector.extract_strided_slice %37 {offsets = [0, 0], sizes = [8, 2], strides = [1, 1]} : vector<8x32xf32> to vector<8x2xf32>
    %cst_27 = arith.constant dense<0.000000e+00> : vector<8x2xf32>
    %54 = tpu.matmul %52, %53, %cst_27 {dimension_numbers = #tpu.dot_dimension_numbers<[1], [0], [0], [1], [0, 0, 1, 1], [], []>} : vector<8x8xf32>, vector<8x2xf32>, vector<8x2xf32> -> vector<8x2xf32>
    %c0_28 = arith.constant 0 : index
    %c0_29 = arith.constant 0 : index
    %55 = vector.load %arg19[%c0_28, %c0_29] : memref<8x32xf32, #tpu.memory_space<vmem>>, vector<8x2xf32>
    tpu.vector_store %arg19[%c0_28, %c0_29], %54 {strides = array<i32>} : memref<8x32xf32, #tpu.memory_space<vmem>>, vector<8x2xf32>,
    %56 = vector.extract_strided_slice %30 {offsets = [0, 2], sizes = [8, 2], strides = [1, 1]} : vector<8x32xf32> to vector<8x2xf32>
    %57 = vector.extract_strided_slice %32 {offsets = [0, 2], sizes = [8, 2], strides = [1, 1]} : vector<8x32xf32> to vector<8x2xf32>
    "tpu.trace_start"() <{level = 10 : i32, message = "qd,kd->qk"}> : () -> ()
    %cst_30 = arith.constant dense<0.000000e+00> : vector<8x8xf32>
    %58 = tpu.matmul %56, %57, %cst_30 {dimension_numbers = #tpu.dot_dimension_numbers<[1], [1], [0], [0], [0, 0, 1, 0], [], []>} : vector<8x2xf32>, vector<8x2xf32>, vector<8x8xf32> -> vector<8x8xf32>
    "tpu.trace_stop"() : () -> ()
    %59 = arith.addf %58, %38 : vector<8x8xf32>
    %cst_31 = arith.constant dense<0xFF800000> : vector<8xf32>
    %60 = vector.multi_reduction <maximumf>, %59, %cst_31 [1] : vector<8x8xf32> to vector<8xf32>
    %61 = vector.shape_cast %60 : vector<8xf32> to vector<8x1xf32>
    %62 = vector.broadcast %61 : vector<8x1xf32> to vector<8x8xf32>
    %63 = arith.subf %59, %62 : vector<8x8xf32>
    %64 = math.exp %63 : vector<8x8xf32>
    %cst_32 = arith.constant dense<0.000000e+00> : vector<8xf32>
    %65 = vector.multi_reduction <add>, %64, %cst_32 [1] : vector<8x8xf32> to vector<8xf32>
    %66 = vector.shape_cast %65 : vector<8xf32> to vector<8x1xf32>
    %67 = tpu.reciprocal %66 {approx = true} : vector<8x1xf32> -> vector<8x1xf32>
    %68 = vector.broadcast %67 : vector<8x1xf32> to vector<8x8xf32>
    %69 = arith.mulf %64, %68 : vector<8x8xf32>
    %70 = vector.extract_strided_slice %37 {offsets = [0, 2], sizes = [8, 2], strides = [1, 1]} : vector<8x32xf32> to vector<8x2xf32>
    %cst_33 = arith.constant dense<0.000000e+00> : vector<8x2xf32>
    %71 = tpu.matmul %69, %70, %cst_33 {dimension_numbers = #tpu.dot_dimension_numbers<[1], [0], [0], [1], [0, 0, 1, 1], [], []>} : vector<8x8xf32>, vector<8x2xf32>, vector<8x2xf32> -> vector<8x2xf32>
    %c0_34 = arith.constant 0 : index
    %c2 = arith.constant 2 : index
    %72 = vector.load %arg19[%c0_34, %c2] : memref<8x32xf32, #tpu.memory_space<vmem>>, vector<8x2xf32>
    tpu.vector_store %arg19[%c0_34, %c2], %71 {strides = array<i32>} : memref<8x32xf32, #tpu.memory_space<vmem>>, vector<8x2xf32>,
    %73 = vector.extract_strided_slice %30 {offsets = [0, 4], sizes = [8, 2], strides = [1, 1]} : vector<8x32xf32> to vector<8x2xf32>
    %74 = vector.extract_strided_slice %32 {offsets = [0, 4], sizes = [8, 2], strides = [1, 1]} : vector<8x32xf32> to vector<8x2xf32>
    "tpu.trace_start"() <{level = 10 : i32, message = "qd,kd->qk"}> : () -> ()
    %cst_35 = arith.constant dense<0.000000e+00> : vector<8x8xf32>
    %75 = tpu.matmul %73, %74, %cst_35 {dimension_numbers = #tpu.dot_dimension_numbers<[1], [1], [0], [0], [0, 0, 1, 0], [], []>} : vector<8x2xf32>, vector<8x2xf32>, vector<8x8xf32> -> vector<8x8xf32>
    "tpu.trace_stop"() : () -> ()
    %76 = arith.addf %75, %38 : vector<8x8xf32>
    %cst_36 = arith.constant dense<0xFF800000> : vector<8xf32>
    %77 = vector.multi_reduction <maximumf>, %76, %cst_36 [1] : vector<8x8xf32> to vector<8xf32>
    %78 = vector.shape_cast %77 : vector<8xf32> to vector<8x1xf32>
    %79 = vector.broadcast %78 : vector<8x1xf32> to vector<8x8xf32>
    %80 = arith.subf %76, %79 : vector<8x8xf32>
    %81 = math.exp %80 : vector<8x8xf32>
    %cst_37 = arith.constant dense<0.000000e+00> : vector<8xf32>
    %82 = vector.multi_reduction <add>, %81, %cst_37 [1] : vector<8x8xf32> to vector<8xf32>
    %83 = vector.shape_cast %82 : vector<8xf32> to vector<8x1xf32>
    %84 = tpu.reciprocal %83 {approx = true} : vector<8x1xf32> -> vector<8x1xf32>
    %85 = vector.broadcast %84 : vector<8x1xf32> to vector<8x8xf32>
    %86 = arith.mulf %81, %85 : vector<8x8xf32>
    %87 = vector.extract_strided_slice %37 {offsets = [0, 4], sizes = [8, 2], strides = [1, 1]} : vector<8x32xf32> to vector<8x2xf32>
    %cst_38 = arith.constant dense<0.000000e+00> : vector<8x2xf32>
    %88 = tpu.matmul %86, %87, %cst_38 {dimension_numbers = #tpu.dot_dimension_numbers<[1], [0], [0], [1], [0, 0, 1, 1], [], []>} : vector<8x8xf32>, vector<8x2xf32>, vector<8x2xf32> -> vector<8x2xf32>
    %c0_39 = arith.constant 0 : index
    %c4 = arith.constant 4 : index
    %89 = vector.load %arg19[%c0_39, %c4] : memref<8x32xf32, #tpu.memory_space<vmem>>, vector<8x2xf32>
    tpu.vector_store %arg19[%c0_39, %c4], %88 {strides = array<i32>} : memref<8x32xf32, #tpu.memory_space<vmem>>, vector<8x2xf32>,
    %90 = vector.extract_strided_slice %30 {offsets = [0, 6], sizes = [8, 2], strides = [1, 1]} : vector<8x32xf32> to vector<8x2xf32>
    %91 = vector.extract_strided_slice %32 {offsets = [0, 6], sizes = [8, 2], strides = [1, 1]} : vector<8x32xf32> to vector<8x2xf32>
    "tpu.trace_start"() <{level = 10 : i32, message = "qd,kd->qk"}> : () -> ()
    %cst_40 = arith.constant dense<0.000000e+00> : vector<8x8xf32>
    %92 = tpu.matmul %90, %91, %cst_40 {dimension_numbers = #tpu.dot_dimension_numbers<[1], [1], [0], [0], [0, 0, 1, 0], [], []>} : vector<8x2xf32>, vector<8x2xf32>, vector<8x8xf32> -> vector<8x8xf32>
    "tpu.trace_stop"() : () -> ()
    %93 = arith.addf %92, %38 : vector<8x8xf32>
    %cst_41 = arith.constant dense<0xFF800000> : vector<8xf32>
    %94 = vector.multi_reduction <maximumf>, %93, %cst_41 [1] : vector<8x8xf32> to vector<8xf32>
    %95 = vector.shape_cast %94 : vector<8xf32> to vector<8x1xf32>
    %96 = vector.broadcast %95 : vector<8x1xf32> to vector<8x8xf32>
    %97 = arith.subf %93, %96 : vector<8x8xf32>
    %98 = math.exp %97 : vector<8x8xf32>
    %cst_42 = arith.constant dense<0.000000e+00> : vector<8xf32>
    %99 = vector.multi_reduction <add>, %98, %cst_42 [1] : vector<8x8xf32> to vector<8xf32>
    %100 = vector.shape_cast %99 : vector<8xf32> to vector<8x1xf32>
    %101 = tpu.reciprocal %100 {approx = true} : vector<8x1xf32> -> vector<8x1xf32>
    %102 = vector.broadcast %101 : vector<8x1xf32> to vector<8x8xf32>
    %103 = arith.mulf %98, %102 : vector<8x8xf32>
    %104 = vector.extract_strided_slice %37 {offsets = [0, 6], sizes = [8, 2], strides = [1, 1]} : vector<8x32xf32> to vector<8x2xf32>
    %cst_43 = arith.constant dense<0.000000e+00> : vector<8x2xf32>
    %105 = tpu.matmul %103, %104, %cst_43 {dimension_numbers = #tpu.dot_dimension_numbers<[1], [0], [0], [1], [0, 0, 1, 1], [], []>} : vector<8x8xf32>, vector<8x2xf32>, vector<8x2xf32> -> vector<8x2xf32>
    %c0_44 = arith.constant 0 : index
    %c6 = arith.constant 6 : index
    %106 = vector.load %arg19[%c0_44, %c6] : memref<8x32xf32, #tpu.memory_space<vmem>>, vector<8x2xf32>
    tpu.vector_store %arg19[%c0_44, %c6], %105 {strides = array<i32>} : memref<8x32xf32, #tpu.memory_space<vmem>>, vector<8x2xf32>,
    %107 = vector.extract_strided_slice %30 {offsets = [0, 8], sizes = [8, 2], strides = [1, 1]} : vector<8x32xf32> to vector<8x2xf32>
    %108 = vector.extract_strided_slice %32 {offsets = [0, 8], sizes = [8, 2], strides = [1, 1]} : vector<8x32xf32> to vector<8x2xf32>
    "tpu.trace_start"() <{level = 10 : i32, message = "qd,kd->qk"}> : () -> ()
    %cst_45 = arith.constant dense<0.000000e+00> : vector<8x8xf32>
    %109 = tpu.matmul %107, %108, %cst_45 {dimension_numbers = #tpu.dot_dimension_numbers<[1], [1], [0], [0], [0, 0, 1, 0], [], []>} : vector<8x2xf32>, vector<8x2xf32>, vector<8x8xf32> -> vector<8x8xf32>
    "tpu.trace_stop"() : () -> ()
    %110 = arith.addf %109, %38 : vector<8x8xf32>
    %cst_46 = arith.constant dense<0xFF800000> : vector<8xf32>
    %111 = vector.multi_reduction <maximumf>, %110, %cst_46 [1] : vector<8x8xf32> to vector<8xf32>
    %112 = vector.shape_cast %111 : vector<8xf32> to vector<8x1xf32>
    %113 = vector.broadcast %112 : vector<8x1xf32> to vector<8x8xf32>
    %114 = arith.subf %110, %113 : vector<8x8xf32>
    %115 = math.exp %114 : vector<8x8xf32>
    %cst_47 = arith.constant dense<0.000000e+00> : vector<8xf32>
    %116 = vector.multi_reduction <add>, %115, %cst_47 [1] : vector<8x8xf32> to vector<8xf32>
    %117 = vector.shape_cast %116 : vector<8xf32> to vector<8x1xf32>
    %118 = tpu.reciprocal %117 {approx = true} : vector<8x1xf32> -> vector<8x1xf32>
    %119 = vector.broadcast %118 : vector<8x1xf32> to vector<8x8xf32>
    %120 = arith.mulf %115, %119 : vector<8x8xf32>
    %121 = vector.extract_strided_slice %37 {offsets = [0, 8], sizes = [8, 2], strides = [1, 1]} : vector<8x32xf32> to vector<8x2xf32>
    %cst_48 = arith.constant dense<0.000000e+00> : vector<8x2xf32>
    %122 = tpu.matmul %120, %121, %cst_48 {dimension_numbers = #tpu.dot_dimension_numbers<[1], [0], [0], [1], [0, 0, 1, 1], [], []>} : vector<8x8xf32>, vector<8x2xf32>, vector<8x2xf32> -> vector<8x2xf32>
    %c0_49 = arith.constant 0 : index
    %c8 = arith.constant 8 : index
    %123 = vector.load %arg19[%c0_49, %c8] : memref<8x32xf32, #tpu.memory_space<vmem>>, vector<8x2xf32>
    tpu.vector_store %arg19[%c0_49, %c8], %122 {strides = array<i32>} : memref<8x32xf32, #tpu.memory_space<vmem>>, vector<8x2xf32>,
    %124 = vector.extract_strided_slice %30 {offsets = [0, 10], sizes = [8, 2], strides = [1, 1]} : vector<8x32xf32> to vector<8x2xf32>
    %125 = vector.extract_strided_slice %32 {offsets = [0, 10], sizes = [8, 2], strides = [1, 1]} : vector<8x32xf32> to vector<8x2xf32>
    "tpu.trace_start"() <{level = 10 : i32, message = "qd,kd->qk"}> : () -> ()
    %cst_50 = arith.constant dense<0.000000e+00> : vector<8x8xf32>
    %126 = tpu.matmul %124, %125, %cst_50 {dimension_numbers = #tpu.dot_dimension_numbers<[1], [1], [0], [0], [0, 0, 1, 0], [], []>} : vector<8x2xf32>, vector<8x2xf32>, vector<8x8xf32> -> vector<8x8xf32>
    "tpu.trace_stop"() : () -> ()
    %127 = arith.addf %126, %38 : vector<8x8xf32>
    %cst_51 = arith.constant dense<0xFF800000> : vector<8xf32>
    %128 = vector.multi_reduction <maximumf>, %127, %cst_51 [1] : vector<8x8xf32> to vector<8xf32>
    %129 = vector.shape_cast %128 : vector<8xf32> to vector<8x1xf32>
    %130 = vector.broadcast %129 : vector<8x1xf32> to vector<8x8xf32>
    %131 = arith.subf %127, %130 : vector<8x8xf32>
    %132 = math.exp %131 : vector<8x8xf32>
    %cst_52 = arith.constant dense<0.000000e+00> : vector<8xf32>
    %133 = vector.multi_reduction <add>, %132, %cst_52 [1] : vector<8x8xf32> to vector<8xf32>
    %134 = vector.shape_cast %133 : vector<8xf32> to vector<8x1xf32>
    %135 = tpu.reciprocal %134 {approx = true} : vector<8x1xf32> -> vector<8x1xf32>
    %136 = vector.broadcast %135 : vector<8x1xf32> to vector<8x8xf32>
    %137 = arith.mulf %132, %136 : vector<8x8xf32>
    %138 = vector.extract_strided_slice %37 {offsets = [0, 10], sizes = [8, 2], strides = [1, 1]} : vector<8x32xf32> to vector<8x2xf32>
    %cst_53 = arith.constant dense<0.000000e+00> : vector<8x2xf32>
    %139 = tpu.matmul %137, %138, %cst_53 {dimension_numbers = #tpu.dot_dimension_numbers<[1], [0], [0], [1], [0, 0, 1, 1], [], []>} : vector<8x8xf32>, vector<8x2xf32>, vector<8x2xf32> -> vector<8x2xf32>
    %c0_54 = arith.constant 0 : index
    %c10 = arith.constant 10 : index
    %140 = vector.load %arg19[%c0_54, %c10] : memref<8x32xf32, #tpu.memory_space<vmem>>, vector<8x2xf32>
    tpu.vector_store %arg19[%c0_54, %c10], %139 {strides = array<i32>} : memref<8x32xf32, #tpu.memory_space<vmem>>, vector<8x2xf32>,
    %141 = vector.extract_strided_slice %30 {offsets = [0, 12], sizes = [8, 2], strides = [1, 1]} : vector<8x32xf32> to vector<8x2xf32>
    %142 = vector.extract_strided_slice %32 {offsets = [0, 12], sizes = [8, 2], strides = [1, 1]} : vector<8x32xf32> to vector<8x2xf32>
    "tpu.trace_start"() <{level = 10 : i32, message = "qd,kd->qk"}> : () -> ()
    %cst_55 = arith.constant dense<0.000000e+00> : vector<8x8xf32>
    %143 = tpu.matmul %141, %142, %cst_55 {dimension_numbers = #tpu.dot_dimension_numbers<[1], [1], [0], [0], [0, 0, 1, 0], [], []>} : vector<8x2xf32>, vector<8x2xf32>, vector<8x8xf32> -> vector<8x8xf32>
    "tpu.trace_stop"() : () -> ()
    %144 = arith.addf %143, %38 : vector<8x8xf32>
    %cst_56 = arith.constant dense<0xFF800000> : vector<8xf32>
    %145 = vector.multi_reduction <maximumf>, %144, %cst_56 [1] : vector<8x8xf32> to vector<8xf32>
    %146 = vector.shape_cast %145 : vector<8xf32> to vector<8x1xf32>
    %147 = vector.broadcast %146 : vector<8x1xf32> to vector<8x8xf32>
    %148 = arith.subf %144, %147 : vector<8x8xf32>
    %149 = math.exp %148 : vector<8x8xf32>
    %cst_57 = arith.constant dense<0.000000e+00> : vector<8xf32>
    %150 = vector.multi_reduction <add>, %149, %cst_57 [1] : vector<8x8xf32> to vector<8xf32>
    %151 = vector.shape_cast %150 : vector<8xf32> to vector<8x1xf32>
    %152 = tpu.reciprocal %151 {approx = true} : vector<8x1xf32> -> vector<8x1xf32>
    %153 = vector.broadcast %152 : vector<8x1xf32> to vector<8x8xf32>
    %154 = arith.mulf %149, %153 : vector<8x8xf32>
    %155 = vector.extract_strided_slice %37 {offsets = [0, 12], sizes = [8, 2], strides = [1, 1]} : vector<8x32xf32> to vector<8x2xf32>
    %cst_58 = arith.constant dense<0.000000e+00> : vector<8x2xf32>
    %156 = tpu.matmul %154, %155, %cst_58 {dimension_numbers = #tpu.dot_dimension_numbers<[1], [0], [0], [1], [0, 0, 1, 1], [], []>} : vector<8x8xf32>, vector<8x2xf32>, vector<8x2xf32> -> vector<8x2xf32>
    %c0_59 = arith.constant 0 : index
    %c12 = arith.constant 12 : index
    %157 = vector.load %arg19[%c0_59, %c12] : memref<8x32xf32, #tpu.memory_space<vmem>>, vector<8x2xf32>
    tpu.vector_store %arg19[%c0_59, %c12], %156 {strides = array<i32>} : memref<8x32xf32, #tpu.memory_space<vmem>>, vector<8x2xf32>,
    %158 = vector.extract_strided_slice %30 {offsets = [0, 14], sizes = [8, 2], strides = [1, 1]} : vector<8x32xf32> to vector<8x2xf32>
    %159 = vector.extract_strided_slice %32 {offsets = [0, 14], sizes = [8, 2], strides = [1, 1]} : vector<8x32xf32> to vector<8x2xf32>
    "tpu.trace_start"() <{level = 10 : i32, message = "qd,kd->qk"}> : () -> ()
    %cst_60 = arith.constant dense<0.000000e+00> : vector<8x8xf32>
    %160 = tpu.matmul %158, %159, %cst_60 {dimension_numbers = #tpu.dot_dimension_numbers<[1], [1], [0], [0], [0, 0, 1, 0], [], []>} : vector<8x2xf32>, vector<8x2xf32>, vector<8x8xf32> -> vector<8x8xf32>
    "tpu.trace_stop"() : () -> ()
    %161 = arith.addf %160, %38 : vector<8x8xf32>
    %cst_61 = arith.constant dense<0xFF800000> : vector<8xf32>
    %162 = vector.multi_reduction <maximumf>, %161, %cst_61 [1] : vector<8x8xf32> to vector<8xf32>
    %163 = vector.shape_cast %162 : vector<8xf32> to vector<8x1xf32>
    %164 = vector.broadcast %163 : vector<8x1xf32> to vector<8x8xf32>
    %165 = arith.subf %161, %164 : vector<8x8xf32>
    %166 = math.exp %165 : vector<8x8xf32>
    %cst_62 = arith.constant dense<0.000000e+00> : vector<8xf32>
    %167 = vector.multi_reduction <add>, %166, %cst_62 [1] : vector<8x8xf32> to vector<8xf32>
    %168 = vector.shape_cast %167 : vector<8xf32> to vector<8x1xf32>
    %169 = tpu.reciprocal %168 {approx = true} : vector<8x1xf32> -> vector<8x1xf32>
    %170 = vector.broadcast %169 : vector<8x1xf32> to vector<8x8xf32>
    %171 = arith.mulf %166, %170 : vector<8x8xf32>
    %172 = vector.extract_strided_slice %37 {offsets = [0, 14], sizes = [8, 2], strides = [1, 1]} : vector<8x32xf32> to vector<8x2xf32>
    %cst_63 = arith.constant dense<0.000000e+00> : vector<8x2xf32>
    %173 = tpu.matmul %171, %172, %cst_63 {dimension_numbers = #tpu.dot_dimension_numbers<[1], [0], [0], [1], [0, 0, 1, 1], [], []>} : vector<8x8xf32>, vector<8x2xf32>, vector<8x2xf32> -> vector<8x2xf32>
    %c0_64 = arith.constant 0 : index
    %c14 = arith.constant 14 : index
    %174 = vector.load %arg19[%c0_64, %c14] : memref<8x32xf32, #tpu.memory_space<vmem>>, vector<8x2xf32>
    tpu.vector_store %arg19[%c0_64, %c14], %173 {strides = array<i32>} : memref<8x32xf32, #tpu.memory_space<vmem>>, vector<8x2xf32>,
    %175 = vector.extract_strided_slice %30 {offsets = [0, 16], sizes = [8, 2], strides = [1, 1]} : vector<8x32xf32> to vector<8x2xf32>
    %176 = vector.extract_strided_slice %32 {offsets = [0, 16], sizes = [8, 2], strides = [1, 1]} : vector<8x32xf32> to vector<8x2xf32>
    "tpu.trace_start"() <{level = 10 : i32, message = "qd,kd->qk"}> : () -> ()
    %cst_65 = arith.constant dense<0.000000e+00> : vector<8x8xf32>
    %177 = tpu.matmul %175, %176, %cst_65 {dimension_numbers = #tpu.dot_dimension_numbers<[1], [1], [0], [0], [0, 0, 1, 0], [], []>} : vector<8x2xf32>, vector<8x2xf32>, vector<8x8xf32> -> vector<8x8xf32>
    "tpu.trace_stop"() : () -> ()
    %178 = arith.addf %177, %38 : vector<8x8xf32>
    %cst_66 = arith.constant dense<0xFF800000> : vector<8xf32>
    %179 = vector.multi_reduction <maximumf>, %178, %cst_66 [1] : vector<8x8xf32> to vector<8xf32>
    %180 = vector.shape_cast %179 : vector<8xf32> to vector<8x1xf32>
    %181 = vector.broadcast %180 : vector<8x1xf32> to vector<8x8xf32>
    %182 = arith.subf %178, %181 : vector<8x8xf32>
    %183 = math.exp %182 : vector<8x8xf32>
    %cst_67 = arith.constant dense<0.000000e+00> : vector<8xf32>
    %184 = vector.multi_reduction <add>, %183, %cst_67 [1] : vector<8x8xf32> to vector<8xf32>
    %185 = vector.shape_cast %184 : vector<8xf32> to vector<8x1xf32>
    %186 = tpu.reciprocal %185 {approx = true} : vector<8x1xf32> -> vector<8x1xf32>
    %187 = vector.broadcast %186 : vector<8x1xf32> to vector<8x8xf32>
    %188 = arith.mulf %183, %187 : vector<8x8xf32>
    %189 = vector.extract_strided_slice %37 {offsets = [0, 16], sizes = [8, 2], strides = [1, 1]} : vector<8x32xf32> to vector<8x2xf32>
    %cst_68 = arith.constant dense<0.000000e+00> : vector<8x2xf32>
    %190 = tpu.matmul %188, %189, %cst_68 {dimension_numbers = #tpu.dot_dimension_numbers<[1], [0], [0], [1], [0, 0, 1, 1], [], []>} : vector<8x8xf32>, vector<8x2xf32>, vector<8x2xf32> -> vector<8x2xf32>
    %c0_69 = arith.constant 0 : index
    %c16 = arith.constant 16 : index
    %191 = vector.load %arg19[%c0_69, %c16] : memref<8x32xf32, #tpu.memory_space<vmem>>, vector<8x2xf32>
    tpu.vector_store %arg19[%c0_69, %c16], %190 {strides = array<i32>} : memref<8x32xf32, #tpu.memory_space<vmem>>, vector<8x2xf32>,
    %192 = vector.extract_strided_slice %30 {offsets = [0, 18], sizes = [8, 2], strides = [1, 1]} : vector<8x32xf32> to vector<8x2xf32>
    %193 = vector.extract_strided_slice %32 {offsets = [0, 18], sizes = [8, 2], strides = [1, 1]} : vector<8x32xf32> to vector<8x2xf32>
    "tpu.trace_start"() <{level = 10 : i32, message = "qd,kd->qk"}> : () -> ()
    %cst_70 = arith.constant dense<0.000000e+00> : vector<8x8xf32>
    %194 = tpu.matmul %192, %193, %cst_70 {dimension_numbers = #tpu.dot_dimension_numbers<[1], [1], [0], [0], [0, 0, 1, 0], [], []>} : vector<8x2xf32>, vector<8x2xf32>, vector<8x8xf32> -> vector<8x8xf32>
    "tpu.trace_stop"() : () -> ()
    %195 = arith.addf %194, %38 : vector<8x8xf32>
    %cst_71 = arith.constant dense<0xFF800000> : vector<8xf32>
    %196 = vector.multi_reduction <maximumf>, %195, %cst_71 [1] : vector<8x8xf32> to vector<8xf32>
    %197 = vector.shape_cast %196 : vector<8xf32> to vector<8x1xf32>
    %198 = vector.broadcast %197 : vector<8x1xf32> to vector<8x8xf32>
    %199 = arith.subf %195, %198 : vector<8x8xf32>
    %200 = math.exp %199 : vector<8x8xf32>
    %cst_72 = arith.constant dense<0.000000e+00> : vector<8xf32>
    %201 = vector.multi_reduction <add>, %200, %cst_72 [1] : vector<8x8xf32> to vector<8xf32>
    %202 = vector.shape_cast %201 : vector<8xf32> to vector<8x1xf32>
    %203 = tpu.reciprocal %202 {approx = true} : vector<8x1xf32> -> vector<8x1xf32>
    %204 = vector.broadcast %203 : vector<8x1xf32> to vector<8x8xf32>
    %205 = arith.mulf %200, %204 : vector<8x8xf32>
    %206 = vector.extract_strided_slice %37 {offsets = [0, 18], sizes = [8, 2], strides = [1, 1]} : vector<8x32xf32> to vector<8x2xf32>
    %cst_73 = arith.constant dense<0.000000e+00> : vector<8x2xf32>
    %207 = tpu.matmul %205, %206, %cst_73 {dimension_numbers = #tpu.dot_dimension_numbers<[1], [0], [0], [1], [0, 0, 1, 1], [], []>} : vector<8x8xf32>, vector<8x2xf32>, vector<8x2xf32> -> vector<8x2xf32>
    %c0_74 = arith.constant 0 : index
    %c18 = arith.constant 18 : index
    %208 = vector.load %arg19[%c0_74, %c18] : memref<8x32xf32, #tpu.memory_space<vmem>>, vector<8x2xf32>
    tpu.vector_store %arg19[%c0_74, %c18], %207 {strides = array<i32>} : memref<8x32xf32, #tpu.memory_space<vmem>>, vector<8x2xf32>,
    %209 = vector.extract_strided_slice %30 {offsets = [0, 20], sizes = [8, 2], strides = [1, 1]} : vector<8x32xf32> to vector<8x2xf32>
    %210 = vector.extract_strided_slice %32 {offsets = [0, 20], sizes = [8, 2], strides = [1, 1]} : vector<8x32xf32> to vector<8x2xf32>
    "tpu.trace_start"() <{level = 10 : i32, message = "qd,kd->qk"}> : () -> ()
    %cst_75 = arith.constant dense<0.000000e+00> : vector<8x8xf32>
    %211 = tpu.matmul %209, %210, %cst_75 {dimension_numbers = #tpu.dot_dimension_numbers<[1], [1], [0], [0], [0, 0, 1, 0], [], []>} : vector<8x2xf32>, vector<8x2xf32>, vector<8x8xf32> -> vector<8x8xf32>
    "tpu.trace_stop"() : () -> ()
    %212 = arith.addf %211, %38 : vector<8x8xf32>
    %cst_76 = arith.constant dense<0xFF800000> : vector<8xf32>
    %213 = vector.multi_reduction <maximumf>, %212, %cst_76 [1] : vector<8x8xf32> to vector<8xf32>
    %214 = vector.shape_cast %213 : vector<8xf32> to vector<8x1xf32>
    %215 = vector.broadcast %214 : vector<8x1xf32> to vector<8x8xf32>
    %216 = arith.subf %212, %215 : vector<8x8xf32>
    %217 = math.exp %216 : vector<8x8xf32>
    %cst_77 = arith.constant dense<0.000000e+00> : vector<8xf32>
    %218 = vector.multi_reduction <add>, %217, %cst_77 [1] : vector<8x8xf32> to vector<8xf32>
    %219 = vector.shape_cast %218 : vector<8xf32> to vector<8x1xf32>
    %220 = tpu.reciprocal %219 {approx = true} : vector<8x1xf32> -> vector<8x1xf32>
    %221 = vector.broadcast %220 : vector<8x1xf32> to vector<8x8xf32>
    %222 = arith.mulf %217, %221 : vector<8x8xf32>
    %223 = vector.extract_strided_slice %37 {offsets = [0, 20], sizes = [8, 2], strides = [1, 1]} : vector<8x32xf32> to vector<8x2xf32>
    %cst_78 = arith.constant dense<0.000000e+00> : vector<8x2xf32>
    %224 = tpu.matmul %222, %223, %cst_78 {dimension_numbers = #tpu.dot_dimension_numbers<[1], [0], [0], [1], [0, 0, 1, 1], [], []>} : vector<8x8xf32>, vector<8x2xf32>, vector<8x2xf32> -> vector<8x2xf32>
    %c0_79 = arith.constant 0 : index
    %c20 = arith.constant 20 : index
    %225 = vector.load %arg19[%c0_79, %c20] : memref<8x32xf32, #tpu.memory_space<vmem>>, vector<8x2xf32>
    tpu.vector_store %arg19[%c0_79, %c20], %224 {strides = array<i32>} : memref<8x32xf32, #tpu.memory_space<vmem>>, vector<8x2xf32>,
    %226 = vector.extract_strided_slice %30 {offsets = [0, 22], sizes = [8, 2], strides = [1, 1]} : vector<8x32xf32> to vector<8x2xf32>
    %227 = vector.extract_strided_slice %32 {offsets = [0, 22], sizes = [8, 2], strides = [1, 1]} : vector<8x32xf32> to vector<8x2xf32>
    "tpu.trace_start"() <{level = 10 : i32, message = "qd,kd->qk"}> : () -> ()
    %cst_80 = arith.constant dense<0.000000e+00> : vector<8x8xf32>
    %228 = tpu.matmul %226, %227, %cst_80 {dimension_numbers = #tpu.dot_dimension_numbers<[1], [1], [0], [0], [0, 0, 1, 0], [], []>} : vector<8x2xf32>, vector<8x2xf32>, vector<8x8xf32> -> vector<8x8xf32>
    "tpu.trace_stop"() : () -> ()
    %229 = arith.addf %228, %38 : vector<8x8xf32>
    %cst_81 = arith.constant dense<0xFF800000> : vector<8xf32>
    %230 = vector.multi_reduction <maximumf>, %229, %cst_81 [1] : vector<8x8xf32> to vector<8xf32>
    %231 = vector.shape_cast %230 : vector<8xf32> to vector<8x1xf32>
    %232 = vector.broadcast %231 : vector<8x1xf32> to vector<8x8xf32>
    %233 = arith.subf %229, %232 : vector<8x8xf32>
    %234 = math.exp %233 : vector<8x8xf32>
    %cst_82 = arith.constant dense<0.000000e+00> : vector<8xf32>
    %235 = vector.multi_reduction <add>, %234, %cst_82 [1] : vector<8x8xf32> to vector<8xf32>
    %236 = vector.shape_cast %235 : vector<8xf32> to vector<8x1xf32>
    %237 = tpu.reciprocal %236 {approx = true} : vector<8x1xf32> -> vector<8x1xf32>
    %238 = vector.broadcast %237 : vector<8x1xf32> to vector<8x8xf32>
    %239 = arith.mulf %234, %238 : vector<8x8xf32>
    %240 = vector.extract_strided_slice %37 {offsets = [0, 22], sizes = [8, 2], strides = [1, 1]} : vector<8x32xf32> to vector<8x2xf32>
    %cst_83 = arith.constant dense<0.000000e+00> : vector<8x2xf32>
    %241 = tpu.matmul %239, %240, %cst_83 {dimension_numbers = #tpu.dot_dimension_numbers<[1], [0], [0], [1], [0, 0, 1, 1], [], []>} : vector<8x8xf32>, vector<8x2xf32>, vector<8x2xf32> -> vector<8x2xf32>
    %c0_84 = arith.constant 0 : index
    %c22 = arith.constant 22 : index
    %242 = vector.load %arg19[%c0_84, %c22] : memref<8x32xf32, #tpu.memory_space<vmem>>, vector<8x2xf32>
    tpu.vector_store %arg19[%c0_84, %c22], %241 {strides = array<i32>} : memref<8x32xf32, #tpu.memory_space<vmem>>, vector<8x2xf32>,
    %243 = vector.extract_strided_slice %30 {offsets = [0, 24], sizes = [8, 2], strides = [1, 1]} : vector<8x32xf32> to vector<8x2xf32>
    %244 = vector.extract_strided_slice %32 {offsets = [0, 24], sizes = [8, 2], strides = [1, 1]} : vector<8x32xf32> to vector<8x2xf32>
    "tpu.trace_start"() <{level = 10 : i32, message = "qd,kd->qk"}> : () -> ()
    %cst_85 = arith.constant dense<0.000000e+00> : vector<8x8xf32>
    %245 = tpu.matmul %243, %244, %cst_85 {dimension_numbers = #tpu.dot_dimension_numbers<[1], [1], [0], [0], [0, 0, 1, 0], [], []>} : vector<8x2xf32>, vector<8x2xf32>, vector<8x8xf32> -> vector<8x8xf32>
    "tpu.trace_stop"() : () -> ()
    %246 = arith.addf %245, %38 : vector<8x8xf32>
    %cst_86 = arith.constant dense<0xFF800000> : vector<8xf32>
    %247 = vector.multi_reduction <maximumf>, %246, %cst_86 [1] : vector<8x8xf32> to vector<8xf32>
    %248 = vector.shape_cast %247 : vector<8xf32> to vector<8x1xf32>
    %249 = vector.broadcast %248 : vector<8x1xf32> to vector<8x8xf32>
    %250 = arith.subf %246, %249 : vector<8x8xf32>
    %251 = math.exp %250 : vector<8x8xf32>
    %cst_87 = arith.constant dense<0.000000e+00> : vector<8xf32>
    %252 = vector.multi_reduction <add>, %251, %cst_87 [1] : vector<8x8xf32> to vector<8xf32>
    %253 = vector.shape_cast %252 : vector<8xf32> to vector<8x1xf32>
    %254 = tpu.reciprocal %253 {approx = true} : vector<8x1xf32> -> vector<8x1xf32>
    %255 = vector.broadcast %254 : vector<8x1xf32> to vector<8x8xf32>
    %256 = arith.mulf %251, %255 : vector<8x8xf32>
    %257 = vector.extract_strided_slice %37 {offsets = [0, 24], sizes = [8, 2], strides = [1, 1]} : vector<8x32xf32> to vector<8x2xf32>
    %cst_88 = arith.constant dense<0.000000e+00> : vector<8x2xf32>
    %258 = tpu.matmul %256, %257, %cst_88 {dimension_numbers = #tpu.dot_dimension_numbers<[1], [0], [0], [1], [0, 0, 1, 1], [], []>} : vector<8x8xf32>, vector<8x2xf32>, vector<8x2xf32> -> vector<8x2xf32>
    %c0_89 = arith.constant 0 : index
    %c24 = arith.constant 24 : index
    %259 = vector.load %arg19[%c0_89, %c24] : memref<8x32xf32, #tpu.memory_space<vmem>>, vector<8x2xf32>
    tpu.vector_store %arg19[%c0_89, %c24], %258 {strides = array<i32>} : memref<8x32xf32, #tpu.memory_space<vmem>>, vector<8x2xf32>,
    %260 = vector.extract_strided_slice %30 {offsets = [0, 26], sizes = [8, 2], strides = [1, 1]} : vector<8x32xf32> to vector<8x2xf32>
    %261 = vector.extract_strided_slice %32 {offsets = [0, 26], sizes = [8, 2], strides = [1, 1]} : vector<8x32xf32> to vector<8x2xf32>
    "tpu.trace_start"() <{level = 10 : i32, message = "qd,kd->qk"}> : () -> ()
    %cst_90 = arith.constant dense<0.000000e+00> : vector<8x8xf32>
    %262 = tpu.matmul %260, %261, %cst_90 {dimension_numbers = #tpu.dot_dimension_numbers<[1], [1], [0], [0], [0, 0, 1, 0], [], []>} : vector<8x2xf32>, vector<8x2xf32>, vector<8x8xf32> -> vector<8x8xf32>
    "tpu.trace_stop"() : () -> ()
    %263 = arith.addf %262, %38 : vector<8x8xf32>
    %cst_91 = arith.constant dense<0xFF800000> : vector<8xf32>
    %264 = vector.multi_reduction <maximumf>, %263, %cst_91 [1] : vector<8x8xf32> to vector<8xf32>
    %265 = vector.shape_cast %264 : vector<8xf32> to vector<8x1xf32>
    %266 = vector.broadcast %265 : vector<8x1xf32> to vector<8x8xf32>
    %267 = arith.subf %263, %266 : vector<8x8xf32>
    %268 = math.exp %267 : vector<8x8xf32>
    %cst_92 = arith.constant dense<0.000000e+00> : vector<8xf32>
    %269 = vector.multi_reduction <add>, %268, %cst_92 [1] : vector<8x8xf32> to vector<8xf32>
    %270 = vector.shape_cast %269 : vector<8xf32> to vector<8x1xf32>
    %271 = tpu.reciprocal %270 {approx = true} : vector<8x1xf32> -> vector<8x1xf32>
    %272 = vector.broadcast %271 : vector<8x1xf32> to vector<8x8xf32>
    %273 = arith.mulf %268, %272 : vector<8x8xf32>
    %274 = vector.extract_strided_slice %37 {offsets = [0, 26], sizes = [8, 2], strides = [1, 1]} : vector<8x32xf32> to vector<8x2xf32>
    %cst_93 = arith.constant dense<0.000000e+00> : vector<8x2xf32>
    %275 = tpu.matmul %273, %274, %cst_93 {dimension_numbers = #tpu.dot_dimension_numbers<[1], [0], [0], [1], [0, 0, 1, 1], [], []>} : vector<8x8xf32>, vector<8x2xf32>, vector<8x2xf32> -> vector<8x2xf32>
    %c0_94 = arith.constant 0 : index
    %c26 = arith.constant 26 : index
    %276 = vector.load %arg19[%c0_94, %c26] : memref<8x32xf32, #tpu.memory_space<vmem>>, vector<8x2xf32>
    tpu.vector_store %arg19[%c0_94, %c26], %275 {strides = array<i32>} : memref<8x32xf32, #tpu.memory_space<vmem>>, vector<8x2xf32>,
    %277 = vector.extract_strided_slice %30 {offsets = [0, 28], sizes = [8, 2], strides = [1, 1]} : vector<8x32xf32> to vector<8x2xf32>
    %278 = vector.extract_strided_slice %32 {offsets = [0, 28], sizes = [8, 2], strides = [1, 1]} : vector<8x32xf32> to vector<8x2xf32>
    "tpu.trace_start"() <{level = 10 : i32, message = "qd,kd->qk"}> : () -> ()
    %cst_95 = arith.constant dense<0.000000e+00> : vector<8x8xf32>
    %279 = tpu.matmul %277, %278, %cst_95 {dimension_numbers = #tpu.dot_dimension_numbers<[1], [1], [0], [0], [0, 0, 1, 0], [], []>} : vector<8x2xf32>, vector<8x2xf32>, vector<8x8xf32> -> vector<8x8xf32>
    "tpu.trace_stop"() : () -> ()
    %280 = arith.addf %279, %38 : vector<8x8xf32>
    %cst_96 = arith.constant dense<0xFF800000> : vector<8xf32>
    %281 = vector.multi_reduction <maximumf>, %280, %cst_96 [1] : vector<8x8xf32> to vector<8xf32>
    %282 = vector.shape_cast %281 : vector<8xf32> to vector<8x1xf32>
    %283 = vector.broadcast %282 : vector<8x1xf32> to vector<8x8xf32>
    %284 = arith.subf %280, %283 : vector<8x8xf32>
    %285 = math.exp %284 : vector<8x8xf32>
    %cst_97 = arith.constant dense<0.000000e+00> : vector<8xf32>
    %286 = vector.multi_reduction <add>, %285, %cst_97 [1] : vector<8x8xf32> to vector<8xf32>
    %287 = vector.shape_cast %286 : vector<8xf32> to vector<8x1xf32>
    %288 = tpu.reciprocal %287 {approx = true} : vector<8x1xf32> -> vector<8x1xf32>
    %289 = vector.broadcast %288 : vector<8x1xf32> to vector<8x8xf32>
    %290 = arith.mulf %285, %289 : vector<8x8xf32>
    %291 = vector.extract_strided_slice %37 {offsets = [0, 28], sizes = [8, 2], strides = [1, 1]} : vector<8x32xf32> to vector<8x2xf32>
    %cst_98 = arith.constant dense<0.000000e+00> : vector<8x2xf32>
    %292 = tpu.matmul %290, %291, %cst_98 {dimension_numbers = #tpu.dot_dimension_numbers<[1], [0], [0], [1], [0, 0, 1, 1], [], []>} : vector<8x8xf32>, vector<8x2xf32>, vector<8x2xf32> -> vector<8x2xf32>
    %c0_99 = arith.constant 0 : index
    %c28 = arith.constant 28 : index
    %293 = vector.load %arg19[%c0_99, %c28] : memref<8x32xf32, #tpu.memory_space<vmem>>, vector<8x2xf32>
    tpu.vector_store %arg19[%c0_99, %c28], %292 {strides = array<i32>} : memref<8x32xf32, #tpu.memory_space<vmem>>, vector<8x2xf32>,
    %294 = vector.extract_strided_slice %30 {offsets = [0, 30], sizes = [8, 2], strides = [1, 1]} : vector<8x32xf32> to vector<8x2xf32>
    %295 = vector.extract_strided_slice %32 {offsets = [0, 30], sizes = [8, 2], strides = [1, 1]} : vector<8x32xf32> to vector<8x2xf32>
    "tpu.trace_start"() <{level = 10 : i32, message = "qd,kd->qk"}> : () -> ()
    %cst_100 = arith.constant dense<0.000000e+00> : vector<8x8xf32>
    %296 = tpu.matmul %294, %295, %cst_100 {dimension_numbers = #tpu.dot_dimension_numbers<[1], [1], [0], [0], [0, 0, 1, 0], [], []>} : vector<8x2xf32>, vector<8x2xf32>, vector<8x8xf32> -> vector<8x8xf32>
    "tpu.trace_stop"() : () -> ()
    %297 = arith.addf %296, %38 : vector<8x8xf32>
    %cst_101 = arith.constant dense<0xFF800000> : vector<8xf32>
    %298 = vector.multi_reduction <maximumf>, %297, %cst_101 [1] : vector<8x8xf32> to vector<8xf32>
    %299 = vector.shape_cast %298 : vector<8xf32> to vector<8x1xf32>
    %300 = vector.broadcast %299 : vector<8x1xf32> to vector<8x8xf32>
    %301 = arith.subf %297, %300 : vector<8x8xf32>
    %302 = math.exp %301 : vector<8x8xf32>
    %cst_102 = arith.constant dense<0.000000e+00> : vector<8xf32>
    %303 = vector.multi_reduction <add>, %302, %cst_102 [1] : vector<8x8xf32> to vector<8xf32>
    %304 = vector.shape_cast %303 : vector<8xf32> to vector<8x1xf32>
    %305 = tpu.reciprocal %304 {approx = true} : vector<8x1xf32> -> vector<8x1xf32>
    %306 = vector.broadcast %305 : vector<8x1xf32> to vector<8x8xf32>
    %307 = arith.mulf %302, %306 : vector<8x8xf32>
    %308 = vector.extract_strided_slice %37 {offsets = [0, 30], sizes = [8, 2], strides = [1, 1]} : vector<8x32xf32> to vector<8x2xf32>
    %cst_103 = arith.constant dense<0.000000e+00> : vector<8x2xf32>
    %309 = tpu.matmul %307, %308, %cst_103 {dimension_numbers = #tpu.dot_dimension_numbers<[1], [0], [0], [1], [0, 0, 1, 1], [], []>} : vector<8x8xf32>, vector<8x2xf32>, vector<8x2xf32> -> vector<8x2xf32>
    %c0_104 = arith.constant 0 : index
    %c30 = arith.constant 30 : index
    %310 = vector.load %arg19[%c0_104, %c30] : memref<8x32xf32, #tpu.memory_space<vmem>>, vector<8x2xf32>
    tpu.vector_store %arg19[%c0_104, %c30], %309 {strides = array<i32>} : memref<8x32xf32, #tpu.memory_space<vmem>>, vector<8x2xf32>,
    %c0_105 = arith.constant 0 : index
    %c0_106 = arith.constant 0 : index
    %311 = vector.load %arg19[%c0_105, %c0_106] : memref<8x32xf32, #tpu.memory_space<vmem>>, vector<8x32xf32>
    %312 = arith.truncf %311 : vector<8x32xf32> to vector<8x32xbf16>
    %c0_107 = arith.constant 0 : index
    %c0_108 = arith.constant 0 : index
    %313 = vector.load %arg10[%c0_107, %c0_108] : memref<32x32xbf16, #tpu.memory_space<vmem>>, vector<32x32xbf16>
    %cst_109 = arith.constant dense<0.000000e+00> : vector<8x32xf32>
    %314 = tpu.matmul %312, %313, %cst_109 {dimension_numbers = #tpu.dot_dimension_numbers<[1], [0], [0], [1], [0, 0, 1, 1], [], []>} : vector<8x32xbf16>, vector<32x32xbf16>, vector<8x32xf32> -> vector<8x32xf32>
    %c0_110 = arith.constant 0 : index
    %c0_111 = arith.constant 0 : index
    %315 = vector.load %arg11[%c0_110, %c0_111] : memref<1x32xf32, #tpu.memory_space<vmem>>, vector<1x32xf32>
    %316 = vector.broadcast %315 : vector<1x32xf32> to vector<8x32xf32>
    %317 = arith.addf %314, %316 : vector<8x32xf32>
    %318 = arith.addf %317, %0 : vector<8x32xf32>
    %c0_112 = arith.constant 0 : index
    %c0_113 = arith.constant 0 : index
    %319 = vector.load %arg12[%c0_112, %c0_113] : memref<1x32xf32, #tpu.memory_space<vmem>>, vector<1x32xf32>
    %c0_114 = arith.constant 0 : index
    %c0_115 = arith.constant 0 : index
    %320 = vector.load %arg13[%c0_114, %c0_115] : memref<1x32xf32, #tpu.memory_space<vmem>>, vector<1x32xf32>
    %cst_116 = arith.constant dense<0.000000e+00> : vector<8xf32>
    %321 = vector.multi_reduction <add>, %318, %cst_116 [1] : vector<8x32xf32> to vector<8xf32>
    %322 = vector.shape_cast %321 : vector<8xf32> to vector<8x1xf32>
    %cst_117 = arith.constant 3.200000e+01 : f32
    %323 = vector.broadcast %cst_117 : f32 to vector<8x1xf32>
    %324 = arith.divf %322, %323 : vector<8x1xf32>
    %325 = vector.broadcast %324 : vector<8x1xf32> to vector<8x32xf32>
    %326 = arith.subf %318, %325 : vector<8x32xf32>
    %327 = arith.mulf %326, %326 : vector<8x32xf32>
    %cst_118 = arith.constant dense<0.000000e+00> : vector<8xf32>
    %328 = vector.multi_reduction <add>, %327, %cst_118 [1] : vector<8x32xf32> to vector<8xf32>
    %329 = vector.shape_cast %328 : vector<8xf32> to vector<8x1xf32>
    %cst_119 = arith.constant 3.200000e+01 : f32
    %330 = vector.broadcast %cst_119 : f32 to vector<8x1xf32>
    %331 = arith.divf %329, %330 : vector<8x1xf32>
    %332 = vector.broadcast %324 : vector<8x1xf32> to vector<8x32xf32>
    %333 = arith.subf %318, %332 : vector<8x32xf32>
    %cst_120 = arith.constant 9.99999997E-7 : f32
    %334 = vector.broadcast %cst_120 : f32 to vector<8x1xf32>
    %335 = arith.addf %331, %334 : vector<8x1xf32>
    %336 = math.rsqrt %335 : vector<8x1xf32>
    %337 = vector.broadcast %336 : vector<8x1xf32> to vector<8x32xf32>
    %338 = arith.mulf %333, %337 : vector<8x32xf32>
    %339 = vector.broadcast %319 : vector<1x32xf32> to vector<8x32xf32>
    %340 = arith.mulf %338, %339 : vector<8x32xf32>
    %341 = vector.broadcast %320 : vector<1x32xf32> to vector<8x32xf32>
    %342 = arith.addf %340, %341 : vector<8x32xf32>
    %343 = arith.truncf %342 : vector<8x32xf32> to vector<8x32xbf16>
    %c0_121 = arith.constant 0 : index
    %c0_122 = arith.constant 0 : index
    %344 = vector.load %arg14[%c0_121, %c0_122] : memref<32x128xbf16, #tpu.memory_space<vmem>>, vector<32x128xbf16>
    %cst_123 = arith.constant dense<0.000000e+00> : vector<8x128xf32>
    %345 = tpu.matmul %343, %344, %cst_123 {dimension_numbers = #tpu.dot_dimension_numbers<[1], [0], [0], [1], [0, 0, 1, 1], [], []>} : vector<8x32xbf16>, vector<32x128xbf16>, vector<8x128xf32> -> vector<8x128xf32>
    %c0_124 = arith.constant 0 : index
    %c0_125 = arith.constant 0 : index
    %346 = vector.load %arg15[%c0_124, %c0_125] : memref<1x128xf32, #tpu.memory_space<vmem>>, vector<1x128xf32>
    %347 = vector.broadcast %346 : vector<1x128xf32> to vector<8x128xf32>
    %348 = arith.addf %345, %347 : vector<8x128xf32>
    %cst_126 = arith.constant 5.000000e-01 : f32
    %349 = vector.broadcast %cst_126 : f32 to vector<8x128xf32>
    %350 = arith.mulf %349, %348 : vector<8x128xf32>
    %cst_127 = arith.constant 0.707106769 : f32
    %351 = vector.broadcast %cst_127 : f32 to vector<8x128xf32>
    %352 = arith.mulf %348, %351 : vector<8x128xf32>
    %353 = math.erf %352 : vector<8x128xf32>
    %cst_128 = arith.constant 1.000000e+00 : f32
    %354 = vector.broadcast %cst_128 : f32 to vector<8x128xf32>
    %355 = arith.addf %354, %353 : vector<8x128xf32>
    %356 = arith.mulf %350, %355 : vector<8x128xf32>
    %357 = arith.truncf %356 : vector<8x128xf32> to vector<8x128xbf16>
    %c0_129 = arith.constant 0 : index
    %c0_130 = arith.constant 0 : index
    %358 = vector.load %arg16[%c0_129, %c0_130] : memref<128x32xbf16, #tpu.memory_space<vmem>>, vector<128x32xbf16>
    %cst_131 = arith.constant dense<0.000000e+00> : vector<8x32xf32>
    %359 = tpu.matmul %357, %358, %cst_131 {dimension_numbers = #tpu.dot_dimension_numbers<[1], [0], [0], [1], [0, 0, 1, 1], [], []>} : vector<8x128xbf16>, vector<128x32xbf16>, vector<8x32xf32> -> vector<8x32xf32>
    %c0_132 = arith.constant 0 : index
    %c0_133 = arith.constant 0 : index
    %360 = vector.load %arg17[%c0_132, %c0_133] : memref<1x32xf32, #tpu.memory_space<vmem>>, vector<1x32xf32>
    %361 = vector.broadcast %360 : vector<1x32xf32> to vector<8x32xf32>
    %362 = arith.addf %359, %361 : vector<8x32xf32>
    %363 = arith.addf %362, %318 : vector<8x32xf32>
    %c0_134 = arith.constant 0 : index
    %c0_135 = arith.constant 0 : index
    %364 = vector.load %arg18[%c0_134, %c0_135] : memref<8x32xf32, #tpu.memory_space<vmem>>, vector<8x32xf32>
    tpu.vector_store %arg18[%c0_134, %c0_135], %363 {strides = array<i32>} : memref<8x32xf32, #tpu.memory_space<vmem>>, vector<8x32xf32>,
    return
  }
  func.func @transform_0(%arg0: i32) -> (i32, i32) {
    %c0_i32 = arith.constant 0 : i32
    %c0_i32_0 = arith.constant 0 : i32
    return %arg0, %c0_i32 : i32, i32
  }
  func.func @transform_1(%arg0: i32) -> (i32, i32) {
    %c0_i32 = arith.constant 0 : i32
    %c0_i32_0 = arith.constant 0 : i32
    %c0_i32_1 = arith.constant 0 : i32
    return %c0_i32, %c0_i32_0 : i32, i32
  }
  func.func @transform_2(%arg0: i32) -> (i32, i32) {
    %c0_i32 = arith.constant 0 : i32
    %c0_i32_0 = arith.constant 0 : i32
    %c0_i32_1 = arith.constant 0 : i32
    return %c0_i32, %c0_i32_0 : i32, i32
  }
  func.func @transform_3(%arg0: i32) -> (i32, i32) {
    %c0_i32 = arith.constant 0 : i32
    %c0_i32_0 = arith.constant 0 : i32
    %c0_i32_1 = arith.constant 0 : i32
    return %c0_i32, %c0_i32_0 : i32, i32
  }
  func.func @transform_4(%arg0: i32) -> (i32, i32) {
    %c0_i32 = arith.constant 0 : i32
    %c0_i32_0 = arith.constant 0 : i32
    %c0_i32_1 = arith.constant 0 : i32
    return %c0_i32, %c0_i32_0 : i32, i32
  }
  func.func @transform_5(%arg0: i32) -> (i32, i32) {
    %c0_i32 = arith.constant 0 : i32
    %c0_i32_0 = arith.constant 0 : i32
    %c0_i32_1 = arith.constant 0 : i32
    return %c0_i32, %c0_i32_0 : i32, i32
  }
  func.func @transform_6(%arg0: i32) -> (i32, i32) {
    %c0_i32 = arith.constant 0 : i32
    %c0_i32_0 = arith.constant 0 : i32
    %c0_i32_1 = arith.constant 0 : i32
    return %c0_i32, %c0_i32_0 : i32, i32
  }
  func.func @transform_7(%arg0: i32) -> (i32, i32) {
    %c0_i32 = arith.constant 0 : i32
    %c0_i32_0 = arith.constant 0 : i32
    %c0_i32_1 = arith.constant 0 : i32
    return %c0_i32, %c0_i32_0 : i32, i32
  }
  func.func @transform_8(%arg0: i32) -> (i32, i32) {
    %c0_i32 = arith.constant 0 : i32
    %c0_i32_0 = arith.constant 0 : i32
    %c0_i32_1 = arith.constant 0 : i32
    return %c0_i32, %c0_i32_0 : i32, i32
  }
  func.func @transform_9(%arg0: i32) -> (i32, i32) {
    %c0_i32 = arith.constant 0 : i32
    %c0_i32_0 = arith.constant 0 : i32
    %c0_i32_1 = arith.constant 0 : i32
    return %c0_i32, %c0_i32_0 : i32, i32
  }
  func.func @transform_10(%arg0: i32) -> (i32, i32) {
    %c0_i32 = arith.constant 0 : i32
    %c0_i32_0 = arith.constant 0 : i32
    %c0_i32_1 = arith.constant 0 : i32
    return %c0_i32, %c0_i32_0 : i32, i32
  }
  func.func @transform_11(%arg0: i32) -> (i32, i32) {
    %c0_i32 = arith.constant 0 : i32
    %c0_i32_0 = arith.constant 0 : i32
    %c0_i32_1 = arith.constant 0 : i32
    return %c0_i32, %c0_i32_0 : i32, i32
  }
  func.func @transform_12(%arg0: i32) -> (i32, i32) {
    %c0_i32 = arith.constant 0 : i32
    %c0_i32_0 = arith.constant 0 : i32
    %c0_i32_1 = arith.constant 0 : i32
    return %c0_i32, %c0_i32_0 : i32, i32
  }
  func.func @transform_13(%arg0: i32) -> (i32, i32) {
    %c0_i32 = arith.constant 0 : i32
    %c0_i32_0 = arith.constant 0 : i32
    %c0_i32_1 = arith.constant 0 : i32
    return %c0_i32, %c0_i32_0 : i32, i32
  }
  func.func @transform_14(%arg0: i32) -> (i32, i32) {
    %c0_i32 = arith.constant 0 : i32
    %c0_i32_0 = arith.constant 0 : i32
    %c0_i32_1 = arith.constant 0 : i32
    return %c0_i32, %c0_i32_0 : i32, i32
  }
  func.func @transform_15(%arg0: i32) -> (i32, i32) {
    %c0_i32 = arith.constant 0 : i32
    %c0_i32_0 = arith.constant 0 : i32
    %c0_i32_1 = arith.constant 0 : i32
    return %c0_i32, %c0_i32_0 : i32, i32
  }
  func.func @transform_16(%arg0: i32) -> (i32, i32) {
    %c0_i32 = arith.constant 0 : i32
    %c0_i32_0 = arith.constant 0 : i32
    %c0_i32_1 = arith.constant 0 : i32
    return %c0_i32, %c0_i32_0 : i32, i32
  }
  func.func @transform_17(%arg0: i32) -> (i32, i32) {
    %c0_i32 = arith.constant 0 : i32
    %c0_i32_0 = arith.constant 0 : i32
    return %arg0, %c0_i32 : i32, i32
  }
}

</mosaic_0001>

<llo_original>
// kernel: tpu_custom_call.1
$region0: #{tpu_custom_call.1}
  #allocation0 [shape = 'u32[]', space=smem, size = 0x4, offset = 0x4, fixed_abs, tag = 'smem constant byte address 0x4 - core index']
  #allocation1 [shape = 'u32[144,128]{1,0:T(1,128)}', space=vmem, size = 0x12000, scoped, tag = 'internal scratch']
  #allocation2 [shape = 'f32[8,32]{1,0:T(8,128)}', space=vmem, size = 0x1000, scoped, tag = 'scratch operand']
  %s0 = inlined_call_operand.vmem [shape: f32[16,32], index: 0, kind: input, shape index: {}]
  %s1 = inlined_call_operand.hbm [shape: f32[8,8], index: 1, kind: input, shape index: {}]
  %s2 = inlined_call_operand.hbm [shape: f32[1,32], index: 2, kind: input, shape index: {}]
  %s3 = inlined_call_operand.hbm [shape: f32[1,32], index: 3, kind: input, shape index: {}]
  %s4 = inlined_call_operand.vmem [shape: bf16[32,32], index: 4, kind: input, shape index: {}]
  %s5 = inlined_call_operand.hbm [shape: f32[1,32], index: 5, kind: input, shape index: {}]
  %s6 = inlined_call_operand.vmem [shape: bf16[32,32], index: 6, kind: input, shape index: {}]
  %s7 = inlined_call_operand.vmem [shape: bf16[32,32], index: 7, kind: input, shape index: {}]
  %s8 = inlined_call_operand.hbm [shape: f32[1,32], index: 8, kind: input, shape index: {}]
  %s9 = inlined_call_operand.vmem [shape: bf16[32,32], index: 9, kind: input, shape index: {}]
  %s10 = inlined_call_operand.vmem [shape: f32[1,32], index: 10, kind: input, shape index: {}]
  %s11 = inlined_call_operand.vmem [shape: f32[1,32], index: 11, kind: input, shape index: {}]
  %s12 = inlined_call_operand.vmem [shape: f32[1,32], index: 12, kind: input, shape index: {}]
  %s13 = inlined_call_operand.vmem [shape: bf16[32,128], index: 13, kind: input, shape index: {}]
  %s14 = inlined_call_operand.vmem [shape: f32[1,128], index: 14, kind: input, shape index: {}]
  %s15 = inlined_call_operand.vmem [shape: bf16[128,32], index: 15, kind: input, shape index: {}]
  %s16 = inlined_call_operand.vmem [shape: f32[1,32], index: 16, kind: input, shape index: {}]
  %s17 = inlined_call_operand.hbm [shape: f32[16,32], index: 17, kind: output, shape index: {}]
  %s18 = sld [smem:[#allocation0]]
  $region121: #{tpu_custom_call.1} parent=0
    _
  %s20 = ssub.s32 1, %s18
  %s21 = scalar_select 0, %s20, %s18
  $region1: #{tpu_custom_call.1} parent=0
    #allocation3 [shape = 'u8[4096]{0}', space=vmem, size = 0x1000, scoped, tag = 'input window, operand 1, single buffered']
    #allocation4 [shape = 's32[2]{0}', space=sflag, size = 0x8, scoped, tag = 'scoped memory for tpu_custom_call.1']
    #allocation5 [shape = 's32[2]{0}', space=sflag, size = 0x8, scoped, tag = 'scoped memory for tpu_custom_call.1']
    #allocation6 [shape = 'u8[512]{0}', space=vmem, size = 0x400, scoped, tag = 'input window, operand 2, single buffered']
    #allocation7 [shape = 's32[1]{0}', space=sflag, size = 0x4, scoped, tag = 'scoped memory for tpu_custom_call.1']
    #allocation8 [shape = 'u8[512]{0}', space=vmem, size = 0x400, scoped, tag = 'input window, operand 3, single buffered']
    #allocation9 [shape = 'u8[512]{0}', space=vmem, size = 0x400, scoped, tag = 'input window, operand 5, single buffered']
    #allocation10 [shape = 's32[1]{0}', space=sflag, size = 0x4, scoped, tag = 'scoped memory for tpu_custom_call.1']
    #allocation11 [shape = 'u8[512]{0}', space=vmem, size = 0x400, scoped, tag = 'input window, operand 8, single buffered']
    #allocation12 [shape = 'u8[8192]{0}', space=vmem, size = 0x2000, scoped, tag = 'output window, operand 0']
    %22 = vsyncpa [#allocation4], 0
    %23 = vsyncpa [#allocation7], 0
    %24 = vsyncpa [#allocation10], 0
    %25 = vsyncpa [#allocation5], 0
    %s26 = scalar_lea.sflag [#allocation5], 1
    %27 = vsyncpa %s26, 0
    loop: start=0, step=1, limit=4
    $region2: #{tpu_custom_call.1} parent=1 // loop_pre_header
      _
    $region3: #{tpu_custom_call.1} parent=1 // loop_header
      %s29 = sphi 0, %s33
      %p30 = scmp.ge.s32.totalorder %s29, 4
      %s39 = sphi 0, %s41
      %s42 = sphi 0, %s39
      %s43 = sphi 0, %s42
      %s59 = sphi 0, %s43
      %s63 = sphi 0, %s63
      %s65 = sphi 0, %s63
      %s66 = sphi 0, %s65
      %s80 = sphi 0, %s66
      %s84 = sphi 0, %s84
      %s86 = sphi 0, %s84
      %s87 = sphi 0, %s86
      %s101 = sphi 0, %s87
      %s105 = sphi 0, %s105
      %s107 = sphi 0, %s105
      %s108 = sphi 0, %s107
      %s122 = sphi 0, %s108
      %s126 = sphi 0, %s126
      %s128 = sphi 0, %s126
      %s129 = sphi 0, %s128
      %s143 = sphi 0, %s129
      %s147 = sphi 0, %s147
      %s149 = sphi 0, %s147
      %s150 = sphi 0, %s149
      %s164 = sphi 0, %s150
      %s168 = sphi 0, %s168
      %s170 = sphi 0, %s168
      %s171 = sphi 0, %s170
      %s185 = sphi 0, %s171
      %s189 = sphi 0, %s189
      %s191 = sphi 0, %s189
      %s192 = sphi 0, %s191
      %s206 = sphi 0, %s192
      %s210 = sphi 0, %s210
      %s212 = sphi 0, %s210
      %s213 = sphi 0, %s212
      %s227 = sphi 0, %s213
      %s231 = sphi 0, %s231
      %s233 = sphi 0, %s231
      %s234 = sphi 0, %s233
      %s248 = sphi 0, %s234
      %s252 = sphi 0, %s252
      %s254 = sphi 0, %s252
      %s255 = sphi 0, %s254
      %s269 = sphi 0, %s255
      %s273 = sphi 0, %s273
      %s275 = sphi 0, %s273
      %s276 = sphi 0, %s275
      %s290 = sphi 0, %s276
      %s294 = sphi 0, %s294
      %s296 = sphi 0, %s294
      %s297 = sphi 0, %s296
      %s311 = sphi 0, %s297
      %s315 = sphi 0, %s315
      %s317 = sphi 0, %s315
      %s318 = sphi 0, %s317
      %s332 = sphi 0, %s318
      %s336 = sphi 0, %s336
      %s338 = sphi 0, %s336
      %s339 = sphi 0, %s338
      %s353 = sphi 0, %s339
      %s357 = sphi 0, %s357
      %s359 = sphi 0, %s357
      %s360 = sphi 0, %s359
      %s374 = sphi 0, %s360
      %s378 = sphi 0, %s378
      %s380 = sphi 0, %s378
      %s381 = sphi 0, %s380
      %s395 = sphi 0, %s381
      %s401 = sphi 0, %s403
      %s404 = sphi 0, %s401
      %s405 = sphi 0, %s404
      %s421 = sphi 0, %s405
    $region4: #{tpu_custom_call.1} parent=1 // loop_header_branch
      %32 = sbr.rel (%p30) target = $region8
    $region5: #{tpu_custom_call.1} parent=1 // loop_body
      %s34 = ssub.s32 %s29, 1
      %s35 = ssub.s32 %s29, 2
      %s36 = sadd.s32 %s29, 1
      %s37 = ssub.s32 %s29, %s36
      %p38 = scmp.eq.s32.totalorder %s37, 0
      %s40 = sadd.s32 %s39, 1
      %s41 = scalar_select %p38, %s39, %s40
      %p44 = pneg %p38
      %p45 = scmp.eq.s32.totalorder %s29, 1
      %p46 = por %p44, %p45
      %p47 = scmp.ne.s32.totalorder %s39, %s42
      %p48 = scmp.eq.s32.totalorder %s29, 0
      %p49 = por %p47, %p48
      %p50 = scmp.ne.s32.totalorder %s39, %s42
      %p51 = scmp.eq.s32.totalorder %s34, 1
      %p52 = por %p50, %p51
      %p53 = scmp.ne.s32.totalorder %s42, %s43
      %p54 = scmp.eq.s32.totalorder %s34, 0
      %p55 = por %p53, %p54
      %p56 = scmp.ne.s32.totalorder %s42, %s43
      %p57 = scmp.eq.s32.totalorder %s35, 1
      %p58 = por %p56, %p57
      %p60 = scmp.ne.s32.totalorder %s43, %s59
      %p61 = scmp.eq.s32.totalorder %s35, 0
      %p62 = por %p60, %p61
      %s64 = sadd.s32 %s63, 1
      %p67 = scmp.eq.s32.totalorder %s29, 1
      %p68 = scmp.ne.s32.totalorder %s63, %s65
      %p69 = scmp.eq.s32.totalorder %s29, 0
      %p70 = por %p68, %p69
      %p71 = scmp.ne.s32.totalorder %s63, %s65
      %p72 = scmp.eq.s32.totalorder %s34, 1
      %p73 = por %p71, %p72
      %p74 = scmp.ne.s32.totalorder %s65, %s66
      %p75 = scmp.eq.s32.totalorder %s34, 0
      %p76 = por %p74, %p75
      %p77 = scmp.ne.s32.totalorder %s65, %s66
      %p78 = scmp.eq.s32.totalorder %s35, 1
      %p79 = por %p77, %p78
      %p81 = scmp.ne.s32.totalorder %s66, %s80
      %p82 = scmp.eq.s32.totalorder %s35, 0
      %p83 = por %p81, %p82
      %s85 = sadd.s32 %s84, 1
      %p88 = scmp.eq.s32.totalorder %s29, 1
      %p89 = scmp.ne.s32.totalorder %s84, %s86
      %p90 = scmp.eq.s32.totalorder %s29, 0
      %p91 = por %p89, %p90
      %p92 = scmp.ne.s32.totalorder %s84, %s86
      %p93 = scmp.eq.s32.totalorder %s34, 1
      %p94 = por %p92, %p93
      %p95 = scmp.ne.s32.totalorder %s86, %s87
      %p96 = scmp.eq.s32.totalorder %s34, 0
      %p97 = por %p95, %p96
      %p98 = scmp.ne.s32.totalorder %s86, %s87
      %p99 = scmp.eq.s32.totalorder %s35, 1
      %p100 = por %p98, %p99
      %p102 = scmp.ne.s32.totalorder %s87, %s101
      %p103 = scmp.eq.s32.totalorder %s35, 0
      %p104 = por %p102, %p103
      %s106 = sadd.s32 %s105, 1
      %p109 = scmp.eq.s32.totalorder %s29, 1
      %p110 = scmp.ne.s32.totalorder %s105, %s107
      %p111 = scmp.eq.s32.totalorder %s29, 0
      %p112 = por %p110, %p111
      %p113 = scmp.ne.s32.totalorder %s105, %s107
      %p114 = scmp.eq.s32.totalorder %s34, 1
      %p115 = por %p113, %p114
      %p116 = scmp.ne.s32.totalorder %s107, %s108
      %p117 = scmp.eq.s32.totalorder %s34, 0
      %p118 = por %p116, %p117
      %p119 = scmp.ne.s32.totalorder %s107, %s108
      %p120 = scmp.eq.s32.totalorder %s35, 1
      %p121 = por %p119, %p120
      %p123 = scmp.ne.s32.totalorder %s108, %s122
      %p124 = scmp.eq.s32.totalorder %s35, 0
      %p125 = por %p123, %p124
      %s127 = sadd.s32 %s126, 1
      %p130 = scmp.eq.s32.totalorder %s29, 1
      %p131 = scmp.ne.s32.totalorder %s126, %s128
      %p132 = scmp.eq.s32.totalorder %s29, 0
      %p133 = por %p131, %p132
      %p134 = scmp.ne.s32.totalorder %s126, %s128
      %p135 = scmp.eq.s32.totalorder %s34, 1
      %p136 = por %p134, %p135
      %p137 = scmp.ne.s32.totalorder %s128, %s129
      %p138 = scmp.eq.s32.totalorder %s34, 0
      %p139 = por %p137, %p138
      %p140 = scmp.ne.s32.totalorder %s128, %s129
      %p141 = scmp.eq.s32.totalorder %s35, 1
      %p142 = por %p140, %p141
      %p144 = scmp.ne.s32.totalorder %s129, %s143
      %p145 = scmp.eq.s32.totalorder %s35, 0
      %p146 = por %p144, %p145
      %s148 = sadd.s32 %s147, 1
      %p151 = scmp.eq.s32.totalorder %s29, 1
      %p152 = scmp.ne.s32.totalorder %s147, %s149
      %p153 = scmp.eq.s32.totalorder %s29, 0
      %p154 = por %p152, %p153
      %p155 = scmp.ne.s32.totalorder %s147, %s149
      %p156 = scmp.eq.s32.totalorder %s34, 1
      %p157 = por %p155, %p156
      %p158 = scmp.ne.s32.totalorder %s149, %s150
      %p159 = scmp.eq.s32.totalorder %s34, 0
      %p160 = por %p158, %p159
      %p161 = scmp.ne.s32.totalorder %s149, %s150
      %p162 = scmp.eq.s32.totalorder %s35, 1
      %p163 = por %p161, %p162
      %p165 = scmp.ne.s32.totalorder %s150, %s164
      %p166 = scmp.eq.s32.totalorder %s35, 0
      %p167 = por %p165, %p166
      %s169 = sadd.s32 %s168, 1
      %p172 = scmp.eq.s32.totalorder %s29, 1
      %p173 = scmp.ne.s32.totalorder %s168, %s170
      %p174 = scmp.eq.s32.totalorder %s29, 0
      %p175 = por %p173, %p174
      %p176 = scmp.ne.s32.totalorder %s168, %s170
      %p177 = scmp.eq.s32.totalorder %s34, 1
      %p178 = por %p176, %p177
      %p179 = scmp.ne.s32.totalorder %s170, %s171
      %p180 = scmp.eq.s32.totalorder %s34, 0
      %p181 = por %p179, %p180
      %p182 = scmp.ne.s32.totalorder %s170, %s171
      %p183 = scmp.eq.s32.totalorder %s35, 1
      %p184 = por %p182, %p183
      %p186 = scmp.ne.s32.totalorder %s171, %s185
      %p187 = scmp.eq.s32.totalorder %s35, 0
      %p188 = por %p186, %p187
      %s190 = sadd.s32 %s189, 1
      %p193 = scmp.eq.s32.totalorder %s29, 1
      %p194 = scmp.ne.s32.totalorder %s189, %s191
      %p195 = scmp.eq.s32.totalorder %s29, 0
      %p196 = por %p194, %p195
      %p197 = scmp.ne.s32.totalorder %s189, %s191
      %p198 = scmp.eq.s32.totalorder %s34, 1
      %p199 = por %p197, %p198
      %p200 = scmp.ne.s32.totalorder %s191, %s192
      %p201 = scmp.eq.s32.totalorder %s34, 0
      %p202 = por %p200, %p201
      %p203 = scmp.ne.s32.totalorder %s191, %s192
      %p204 = scmp.eq.s32.totalorder %s35, 1
      %p205 = por %p203, %p204
      %p207 = scmp.ne.s32.totalorder %s192, %s206
      %p208 = scmp.eq.s32.totalorder %s35, 0
      %p209 = por %p207, %p208
      %s211 = sadd.s32 %s210, 1
      %p214 = scmp.eq.s32.totalorder %s29, 1
      %p215 = scmp.ne.s32.totalorder %s210, %s212
      %p216 = scmp.eq.s32.totalorder %s29, 0
      %p217 = por %p215, %p216
      %p218 = scmp.ne.s32.totalorder %s210, %s212
      %p219 = scmp.eq.s32.totalorder %s34, 1
      %p220 = por %p218, %p219
      %p221 = scmp.ne.s32.totalorder %s212, %s213
      %p222 = scmp.eq.s32.totalorder %s34, 0
      %p223 = por %p221, %p222
      %p224 = scmp.ne.s32.totalorder %s212, %s213
      %p225 = scmp.eq.s32.totalorder %s35, 1
      %p226 = por %p224, %p225
      %p228 = scmp.ne.s32.totalorder %s213, %s227
      %p229 = scmp.eq.s32.totalorder %s35, 0
      %p230 = por %p228, %p229
      %s232 = sadd.s32 %s231, 1
      %p235 = scmp.eq.s32.totalorder %s29, 1
      %p236 = scmp.ne.s32.totalorder %s231, %s233
      %p237 = scmp.eq.s32.totalorder %s29, 0
      %p238 = por %p236, %p237
      %p239 = scmp.ne.s32.totalorder %s231, %s233
      %p240 = scmp.eq.s32.totalorder %s34, 1
      %p241 = por %p239, %p240
      %p242 = scmp.ne.s32.totalorder %s233, %s234
      %p243 = scmp.eq.s32.totalorder %s34, 0
      %p244 = por %p242, %p243
      %p245 = scmp.ne.s32.totalorder %s233, %s234
      %p246 = scmp.eq.s32.totalorder %s35, 1
      %p247 = por %p245, %p246
      %p249 = scmp.ne.s32.totalorder %s234, %s248
      %p250 = scmp.eq.s32.totalorder %s35, 0
      %p251 = por %p249, %p250
      %s253 = sadd.s32 %s252, 1
      %p256 = scmp.eq.s32.totalorder %s29, 1
      %p257 = scmp.ne.s32.totalorder %s252, %s254
      %p258 = scmp.eq.s32.totalorder %s29, 0
      %p259 = por %p257, %p258
      %p260 = scmp.ne.s32.totalorder %s252, %s254
      %p261 = scmp.eq.s32.totalorder %s34, 1
      %p262 = por %p260, %p261
      %p263 = scmp.ne.s32.totalorder %s254, %s255
      %p264 = scmp.eq.s32.totalorder %s34, 0
      %p265 = por %p263, %p264
      %p266 = scmp.ne.s32.totalorder %s254, %s255
      %p267 = scmp.eq.s32.totalorder %s35, 1
      %p268 = por %p266, %p267
      %p270 = scmp.ne.s32.totalorder %s255, %s269
      %p271 = scmp.eq.s32.totalorder %s35, 0
      %p272 = por %p270, %p271
      %s274 = sadd.s32 %s273, 1
      %p277 = scmp.eq.s32.totalorder %s29, 1
      %p278 = scmp.ne.s32.totalorder %s273, %s275
      %p279 = scmp.eq.s32.totalorder %s29, 0
      %p280 = por %p278, %p279
      %p281 = scmp.ne.s32.totalorder %s273, %s275
      %p282 = scmp.eq.s32.totalorder %s34, 1
      %p283 = por %p281, %p282
      %p284 = scmp.ne.s32.totalorder %s275, %s276
      %p285 = scmp.eq.s32.totalorder %s34, 0
      %p286 = por %p284, %p285
      %p287 = scmp.ne.s32.totalorder %s275, %s276
      %p288 = scmp.eq.s32.totalorder %s35, 1
      %p289 = por %p287, %p288
      %p291 = scmp.ne.s32.totalorder %s276, %s290
      %p292 = scmp.eq.s32.totalorder %s35, 0
      %p293 = por %p291, %p292
      %s295 = sadd.s32 %s294, 1
      %p298 = scmp.eq.s32.totalorder %s29, 1
      %p299 = scmp.ne.s32.totalorder %s294, %s296
      %p300 = scmp.eq.s32.totalorder %s29, 0
      %p301 = por %p299, %p300
      %p302 = scmp.ne.s32.totalorder %s294, %s296
      %p303 = scmp.eq.s32.totalorder %s34, 1
      %p304 = por %p302, %p303
      %p305 = scmp.ne.s32.totalorder %s296, %s297
      %p306 = scmp.eq.s32.totalorder %s34, 0
      %p307 = por %p305, %p306
      %p308 = scmp.ne.s32.totalorder %s296, %s297
      %p309 = scmp.eq.s32.totalorder %s35, 1
      %p310 = por %p308, %p309
      %p312 = scmp.ne.s32.totalorder %s297, %s311
      %p313 = scmp.eq.s32.totalorder %s35, 0
      %p314 = por %p312, %p313
      %s316 = sadd.s32 %s315, 1
      %p319 = scmp.eq.s32.totalorder %s29, 1
      %p320 = scmp.ne.s32.totalorder %s315, %s317
      %p321 = scmp.eq.s32.totalorder %s29, 0
      %p322 = por %p320, %p321
      %p323 = scmp.ne.s32.totalorder %s315, %s317
      %p324 = scmp.eq.s32.totalorder %s34, 1
      %p325 = por %p323, %p324
      %p326 = scmp.ne.s32.totalorder %s317, %s318
      %p327 = scmp.eq.s32.totalorder %s34, 0
      %p328 = por %p326, %p327
      %p329 = scmp.ne.s32.totalorder %s317, %s318
      %p330 = scmp.eq.s32.totalorder %s35, 1
      %p331 = por %p329, %p330
      %p333 = scmp.ne.s32.totalorder %s318, %s332
      %p334 = scmp.eq.s32.totalorder %s35, 0
      %p335 = por %p333, %p334
      %s337 = sadd.s32 %s336, 1
      %p340 = scmp.eq.s32.totalorder %s29, 1
      %p341 = scmp.ne.s32.totalorder %s336, %s338
      %p342 = scmp.eq.s32.totalorder %s29, 0
      %p343 = por %p341, %p342
      %p344 = scmp.ne.s32.totalorder %s336, %s338
      %p345 = scmp.eq.s32.totalorder %s34, 1
      %p346 = por %p344, %p345
      %p347 = scmp.ne.s32.totalorder %s338, %s339
      %p348 = scmp.eq.s32.totalorder %s34, 0
      %p349 = por %p347, %p348
      %p350 = scmp.ne.s32.totalorder %s338, %s339
      %p351 = scmp.eq.s32.totalorder %s35, 1
      %p352 = por %p350, %p351
      %p354 = scmp.ne.s32.totalorder %s339, %s353
      %p355 = scmp.eq.s32.totalorder %s35, 0
      %p356 = por %p354, %p355
      %s358 = sadd.s32 %s357, 1
      %p361 = scmp.eq.s32.totalorder %s29, 1
      %p362 = scmp.ne.s32.totalorder %s357, %s359
      %p363 = scmp.eq.s32.totalorder %s29, 0
      %p364 = por %p362, %p363
      %p365 = scmp.ne.s32.totalorder %s357, %s359
      %p366 = scmp.eq.s32.totalorder %s34, 1
      %p367 = por %p365, %p366
      %p368 = scmp.ne.s32.totalorder %s359, %s360
      %p369 = scmp.eq.s32.totalorder %s34, 0
      %p370 = por %p368, %p369
      %p371 = scmp.ne.s32.totalorder %s359, %s360
      %p372 = scmp.eq.s32.totalorder %s35, 1
      %p373 = por %p371, %p372
      %p375 = scmp.ne.s32.totalorder %s360, %s374
      %p376 = scmp.eq.s32.totalorder %s35, 0
      %p377 = por %p375, %p376
      %s379 = sadd.s32 %s378, 1
      %p382 = scmp.eq.s32.totalorder %s29, 1
      %p383 = scmp.ne.s32.totalorder %s378, %s380
      %p384 = scmp.eq.s32.totalorder %s29, 0
      %p385 = por %p383, %p384
      %p386 = scmp.ne.s32.totalorder %s378, %s380
      %p387 = scmp.eq.s32.totalorder %s34, 1
      %p388 = por %p386, %p387
      %p389 = scmp.ne.s32.totalorder %s380, %s381
      %p390 = scmp.eq.s32.totalorder %s34, 0
      %p391 = por %p389, %p390
      %p392 = scmp.ne.s32.totalorder %s380, %s381
      %p393 = scmp.eq.s32.totalorder %s35, 1
      %p394 = por %p392, %p393
      %p396 = scmp.ne.s32.totalorder %s381, %s395
      %p397 = scmp.eq.s32.totalorder %s35, 0
      %p398 = por %p396, %p397
      %s399 = ssub.s32 %s29, %s36
      %p400 = scmp.eq.s32.totalorder %s399, 0
      %s402 = sadd.s32 %s401, 1
      %s403 = scalar_select %p400, %s401, %s402
      %p406 = pneg %p400
      %p407 = scmp.eq.s32.totalorder %s29, 1
      %p408 = por %p406, %p407
      %p409 = scmp.ne.s32.totalorder %s401, %s404
      %p410 = scmp.eq.s32.totalorder %s29, 0
      %p411 = por %p409, %p410
      %p412 = scmp.ne.s32.totalorder %s401, %s404
      %p413 = scmp.eq.s32.totalorder %s34, 1
      %p414 = por %p412, %p413
      %p415 = scmp.ne.s32.totalorder %s404, %s405
      %p416 = scmp.eq.s32.totalorder %s34, 0
      %p417 = por %p415, %p416
      %p418 = scmp.ne.s32.totalorder %s404, %s405
      %p419 = scmp.eq.s32.totalorder %s35, 1
      %p420 = por %p418, %p419
      %p422 = scmp.ne.s32.totalorder %s405, %s421
      %p423 = scmp.eq.s32.totalorder %s35, 0
      %p424 = por %p422, %p423
      %p425 = scmp.le.s32.totalorder 1, %s29
      %p426 = scmp.lt.s32.totalorder %s29, 3
      %p427 = pnand %p425, %p426
      %p428 = pneg %p427
      // Predicated region
      $region9: #{tpu_custom_call.1} parent=5 // pred_check
        _
      $region10: #{tpu_custom_call.1} parent=5 // pred_check_branch
        %430 = sbr.rel (%p427) target = $region12
      $region11: #{tpu_custom_call.1} parent=5 // pred_region
        %s431 = ssub.s32 %s29, 1
        // Predicated region
        $region13: #{tpu_custom_call.1} parent=11 // pred_check
          %p432 = pneg %p76
        $region14: #{tpu_custom_call.1} parent=11 // pred_check_branch
          %434 = sbr.rel (%p432) target = $region16
        $region15: #{tpu_custom_call.1} parent=11 // pred_region
          %s436 = ssub.s32 128, 128
          %437 = vsyncadd [#allocation4], %s436
          %s439 = sshll.u32 [#allocation3], 4
          %s440 = int_to_ptr.vmem [resolvable:$true] %s439
          %442 = dma.hbm_to_vmem [thread:$0]  %s1, 128, %s440, [#allocation4]
        $region16: #{tpu_custom_call.1} parent=11 // pred_fallthru
          _
        // Predicated region
        $region17: #{tpu_custom_call.1} parent=11 // pred_check
          %p443 = pneg %p97
        $region18: #{tpu_custom_call.1} parent=11 // pred_check_branch
          %445 = sbr.rel (%p443) target = $region20
        $region19: #{tpu_custom_call.1} parent=11 // pred_region
          %s447 = ssub.s32 16, 16
          %448 = vsyncadd [#allocation7], %s447
          %s450 = sshll.u32 [#allocation6], 4
          %s451 = int_to_ptr.vmem [resolvable:$true] %s450
          %453 = dma.hbm_to_vmem [thread:$0]  %s2, 16, %s451, [#allocation7]
        $region20: #{tpu_custom_call.1} parent=11 // pred_fallthru
          _
        // Predicated region
        $region21: #{tpu_custom_call.1} parent=11 // pred_check
          %p454 = pneg %p118
        $region22: #{tpu_custom_call.1} parent=11 // pred_check_branch
          %456 = sbr.rel (%p454) target = $region24
        $region23: #{tpu_custom_call.1} parent=11 // pred_region
          %s458 = ssub.s32 16, 16
          %459 = vsyncadd [#allocation7], %s458
          %s461 = sshll.u32 [#allocation8], 4
          %s462 = int_to_ptr.vmem [resolvable:$true] %s461
          %464 = dma.hbm_to_vmem [thread:$0]  %s3, 16, %s462, [#allocation7]
        $region24: #{tpu_custom_call.1} parent=11 // pred_fallthru
          _
        // Predicated region
        $region25: #{tpu_custom_call.1} parent=11 // pred_check
          %p465 = pneg %p139
        $region26: #{tpu_custom_call.1} parent=11 // pred_check_branch
          %467 = sbr.rel (%p465) target = $region28
        $region27: #{tpu_custom_call.1} parent=11 // pred_region
          _
        $region28: #{tpu_custom_call.1} parent=11 // pred_fallthru
          _
        // Predicated region
        $region29: #{tpu_custom_call.1} parent=11 // pred_check
          %p468 = pneg %p160
        $region30: #{tpu_custom_call.1} parent=11 // pred_check_branch
          %470 = sbr.rel (%p468) target = $region32
        $region31: #{tpu_custom_call.1} parent=11 // pred_region
          %s472 = ssub.s32 16, 16
          %473 = vsyncadd [#allocation10], %s472
          %s475 = sshll.u32 [#allocation9], 4
          %s476 = int_to_ptr.vmem [resolvable:$true] %s475
          %478 = dma.hbm_to_vmem [thread:$0]  %s5, 16, %s476, [#allocation10]
        $region32: #{tpu_custom_call.1} parent=11 // pred_fallthru
          _
        // Predicated region
        $region33: #{tpu_custom_call.1} parent=11 // pred_check
          %p479 = pneg %p181
        $region34: #{tpu_custom_call.1} parent=11 // pred_check_branch
          %481 = sbr.rel (%p479) target = $region36
        $region35: #{tpu_custom_call.1} parent=11 // pred_region
          _
        $region36: #{tpu_custom_call.1} parent=11 // pred_fallthru
          _
        // Predicated region
        $region37: #{tpu_custom_call.1} parent=11 // pred_check
          %p482 = pneg %p202
        $region38: #{tpu_custom_call.1} parent=11 // pred_check_branch
          %484 = sbr.rel (%p482) target = $region40
        $region39: #{tpu_custom_call.1} parent=11 // pred_region
          _
        $region40: #{tpu_custom_call.1} parent=11 // pred_fallthru
          _
        // Predicated region
        $region41: #{tpu_custom_call.1} parent=11 // pred_check
          %p485 = pneg %p223
        $region42: #{tpu_custom_call.1} parent=11 // pred_check_branch
          %487 = sbr.rel (%p485) target = $region44
        $region43: #{tpu_custom_call.1} parent=11 // pred_region
          %s489 = ssub.s32 16, 16
          %490 = vsyncadd [#allocation10], %s489
          %s492 = sshll.u32 [#allocation11], 4
          %s493 = int_to_ptr.vmem [resolvable:$true] %s492
          %495 = dma.hbm_to_vmem [thread:$0]  %s8, 16, %s493, [#allocation10]
        $region44: #{tpu_custom_call.1} parent=11 // pred_fallthru
          _
        // Predicated region
        $region45: #{tpu_custom_call.1} parent=11 // pred_check
          %p496 = pneg %p244
        $region46: #{tpu_custom_call.1} parent=11 // pred_check_branch
          %498 = sbr.rel (%p496) target = $region48
        $region47: #{tpu_custom_call.1} parent=11 // pred_region
          _
        $region48: #{tpu_custom_call.1} parent=11 // pred_fallthru
          _
        // Predicated region
        $region49: #{tpu_custom_call.1} parent=11 // pred_check
          %p499 = pneg %p265
        $region50: #{tpu_custom_call.1} parent=11 // pred_check_branch
          %501 = sbr.rel (%p499) target = $region52
        $region51: #{tpu_custom_call.1} parent=11 // pred_region
          _
        $region52: #{tpu_custom_call.1} parent=11 // pred_fallthru
          _
        // Predicated region
        $region53: #{tpu_custom_call.1} parent=11 // pred_check
          %p502 = pneg %p286
        $region54: #{tpu_custom_call.1} parent=11 // pred_check_branch
          %504 = sbr.rel (%p502) target = $region56
        $region55: #{tpu_custom_call.1} parent=11 // pred_region
          _
        $region56: #{tpu_custom_call.1} parent=11 // pred_fallthru
          _
        // Predicated region
        $region57: #{tpu_custom_call.1} parent=11 // pred_check
          %p505 = pneg %p307
        $region58: #{tpu_custom_call.1} parent=11 // pred_check_branch
          %507 = sbr.rel (%p505) target = $region60
        $region59: #{tpu_custom_call.1} parent=11 // pred_region
          _
        $region60: #{tpu_custom_call.1} parent=11 // pred_fallthru
          _
        // Predicated region
        $region61: #{tpu_custom_call.1} parent=11 // pred_check
          %p508 = pneg %p328
        $region62: #{tpu_custom_call.1} parent=11 // pred_check_branch
          %510 = sbr.rel (%p508) target = $region64
        $region63: #{tpu_custom_call.1} parent=11 // pred_region
          _
        $region64: #{tpu_custom_call.1} parent=11 // pred_fallthru
          _
        // Predicated region
        $region65: #{tpu_custom_call.1} parent=11 // pred_check
          %p511 = pneg %p349
        $region66: #{tpu_custom_call.1} parent=11 // pred_check_branch
          %513 = sbr.rel (%p511) target = $region68
        $region67: #{tpu_custom_call.1} parent=11 // pred_region
          _
        $region68: #{tpu_custom_call.1} parent=11 // pred_fallthru
          _
        // Predicated region
        $region69: #{tpu_custom_call.1} parent=11 // pred_check
          %p514 = pneg %p370
        $region70: #{tpu_custom_call.1} parent=11 // pred_check_branch
          %516 = sbr.rel (%p514) target = $region72
        $region71: #{tpu_custom_call.1} parent=11 // pred_region
          _
        $region72: #{tpu_custom_call.1} parent=11 // pred_fallthru
          _
        // Predicated region
        $region73: #{tpu_custom_call.1} parent=11 // pred_check
          %p517 = pneg %p391
        $region74: #{tpu_custom_call.1} parent=11 // pred_check_branch
          %519 = sbr.rel (%p517) target = $region76
        $region75: #{tpu_custom_call.1} parent=11 // pred_region
          _
        $region76: #{tpu_custom_call.1} parent=11 // pred_fallthru
          _
      $region12: #{tpu_custom_call.1} parent=5 // pred_fallthru
        _
      %p520 = scmp.lt.s32.totalorder %s29, 2
      // Predicated region
      $region77: #{tpu_custom_call.1} parent=5 // pred_check
        %p521 = pneg %p520
      $region78: #{tpu_custom_call.1} parent=5 // pred_check_branch
        %523 = sbr.rel (%p521) target = $region80
      $region79: #{tpu_custom_call.1} parent=5 // pred_region
        // Predicated region
        $region81: #{tpu_custom_call.1} parent=79 // pred_check
          %p524 = pneg %p49
        $region82: #{tpu_custom_call.1} parent=79 // pred_check_branch
          %526 = sbr.rel (%p524) target = $region84
        $region83: #{tpu_custom_call.1} parent=79 // pred_region
          %p527 = scmp.lt.s32.totalorder %s29, 1
          %s528 = scalar_select %p527, %s29, 1
          %s529 = smul.addr %s528, 8
          %s530 = scalar_lea.vmem %s0, %s529
        $region84: #{tpu_custom_call.1} parent=79 // pred_fallthru
          _
      $region80: #{tpu_custom_call.1} parent=5 // pred_fallthru
        _
      %p531 = scmp.le.s32.totalorder 1, %s29
      %p532 = scmp.lt.s32.totalorder %s29, 3
      %p533 = pnand %p531, %p532
      %p534 = pneg %p533
      // Predicated region
      $region85: #{tpu_custom_call.1} parent=5 // pred_check
        _
      $region86: #{tpu_custom_call.1} parent=5 // pred_check_branch
        %536 = sbr.rel (%p533) target = $region88
      $region87: #{tpu_custom_call.1} parent=5 // pred_region
        %s537 = ssub.s32 %s29, 1
        // Predicated region
        $region89: #{tpu_custom_call.1} parent=87 // pred_check
          %p538 = pneg %p76
        $region90: #{tpu_custom_call.1} parent=87 // pred_check_branch
          %540 = sbr.rel (%p538) target = $region92
        $region91: #{tpu_custom_call.1} parent=87 // pred_region
          %541 = dma.done [#allocation4], 128
        $region92: #{tpu_custom_call.1} parent=87 // pred_fallthru
          _
        // Predicated region
        $region93: #{tpu_custom_call.1} parent=87 // pred_check
          %p542 = pneg %p97
        $region94: #{tpu_custom_call.1} parent=87 // pred_check_branch
          %544 = sbr.rel (%p542) target = $region96
        $region95: #{tpu_custom_call.1} parent=87 // pred_region
          %545 = dma.done [#allocation7], 16
        $region96: #{tpu_custom_call.1} parent=87 // pred_fallthru
          _
        // Predicated region
        $region97: #{tpu_custom_call.1} parent=87 // pred_check
          %p546 = pneg %p118
        $region98: #{tpu_custom_call.1} parent=87 // pred_check_branch
          %548 = sbr.rel (%p546) target = $region100
        $region99: #{tpu_custom_call.1} parent=87 // pred_region
          %549 = dma.done [#allocation7], 16
        $region100: #{tpu_custom_call.1} parent=87 // pred_fallthru
          _
        // Predicated region
        $region101: #{tpu_custom_call.1} parent=87 // pred_check
          %p550 = pneg %p160
        $region102: #{tpu_custom_call.1} parent=87 // pred_check_branch
          %552 = sbr.rel (%p550) target = $region104
        $region103: #{tpu_custom_call.1} parent=87 // pred_region
          %553 = dma.done [#allocation10], 16
        $region104: #{tpu_custom_call.1} parent=87 // pred_fallthru
          _
        // Predicated region
        $region105: #{tpu_custom_call.1} parent=87 // pred_check
          %p554 = pneg %p223
        $region106: #{tpu_custom_call.1} parent=87 // pred_check_branch
          %556 = sbr.rel (%p554) target = $region108
        $region107: #{tpu_custom_call.1} parent=87 // pred_region
          %557 = dma.done [#allocation10], 16
        $region108: #{tpu_custom_call.1} parent=87 // pred_fallthru
          _
        %p558 = scmp.lt.s32.totalorder %s34, 1
        %s559 = scalar_select %p558, %s34, 1
        %s560 = smul.addr %s559, 8
        %s561 = scalar_lea.vmem %s0, %s560
        %p562 = pneg %p55
        %p563 = pneg %p52
        %p564 = pneg %p76
        %p565 = pneg %p73
        %p566 = pneg %p97
        %p567 = pneg %p94
        %p568 = pneg %p118
        %p569 = pneg %p115
        %p570 = pneg %p139
        %p571 = pneg %p136
        %p572 = pneg %p160
        %p573 = pneg %p157
        %p574 = pneg %p181
        %p575 = pneg %p178
        %p576 = pneg %p202
        %p577 = pneg %p199
        %p578 = pneg %p223
        %p579 = pneg %p220
        %p580 = pneg %p244
        %p581 = pneg %p241
        %p582 = pneg %p265
        %p583 = pneg %p262
        %p584 = pneg %p286
        %p585 = pneg %p283
        %p586 = pneg %p307
        %p587 = pneg %p304
        %p588 = pneg %p328
        %p589 = pneg %p325
        %p590 = pneg %p349
        %p591 = pneg %p346
        %p592 = pneg %p370
        %p593 = pneg %p367
        %p594 = pneg %p391
        %p595 = pneg %p388
        %p596 = pneg %p417
        %p597 = pneg %p414
        %s598 = sand.u32 %s404, 1
        %s599 = scalar_lea.sflag [#allocation5], %s598
        %s600 = sand.u32 %s404, 1
        %s601 = smul.addr %s600, 8
        %s602 = scalar_lea.vmem [#allocation12], %s601
        %p603 = scmp.lt.s32.totalorder %s34, 1
        %s604 = scalar_select %p603, %s34, 1
        %s605 = smul.addr %s604, 8
        %s606 = scalar_lea.vmem %s0, %s605
        %v608 = vld [vmem:[%s606] sm:$0xff]
        %v609 = vld [vmem:[#allocation6] sm:$0x1]
        %v610 = vld [vmem:[#allocation8] sm:$0x1]
        %vm611 = vcmask 261120
        %v612 = vsel %vm611, %v608, 0.0
        %613 = vadd.xlane.f32.xlu0 %v612
        %v614 = vpop.xlane.xlu0 %613
        %v615 = vrcp.pop 32.0
        %v616 = vmul.f32 %v614, %v615
        %v617 = vsub.f32 %v608, %v616
        %v618 = vmul.f32 %v617, %v617
        %v619 = vsel %vm611, %v618, 0.0
        %620 = vadd.xlane.f32.xlu0 %v619
        %v621 = vpop.xlane.xlu0 %620
        %v622 = vmul.f32 %v621, %v615
        %v623 = vadd.f32 %v622, 1e-06
        %v624 = vrsqrt.pop %v623
        %v625 = vmul.f32 %v617, %v624
        %v627 = vlaneseq
        %v628 = vshrl.u32 %v627, 7
        %v629 = vsub.s32 0, %v628
        %v630 = vrot.slane %v609, %v629
        %v632 = vmul.f32 %v625, %v630
        %v634 = vlaneseq
        %v635 = vshrl.u32 %v634, 7
        %v636 = vsub.s32 0, %v635
        %v637 = vrot.slane %v610, %v636
        %v639 = vadd.f32 %v632, %v637
        %v640 = vpack.c.bf16 %v639, %v639
        %v641 = vld [vmem:[%s4] sm:$0xf]
        %v642 = vld [vmem:[%s4 + $0x4] sm:$0xf]
        %v643 = vld [vmem:[%s4 + $0x8] sm:$0xf]
        %v644 = vld [vmem:[%s4 + $0xc] sm:$0xf]
        %v645 = vld [vmem:[#allocation9] sm:$0x1]
        %v647 = vlaneseq
        %v648 = vshrl.u32 %v647, 7
        %v649 = vsub.s32 0, %v648
        %v650 = vrot.slane %v645, %v649
        %v656 = vunpack.c.l.b16 %v641
        %v657 = vunpack.c.l.b16 %v642
        %v658 = vunpack.c.l.b16 %v643
        %v659 = vunpack.c.l.b16 %v644
        %v660 = vpack.c.b16 %v657, %v656
        %v661 = vpack.c.b16 %v659, %v658
        %v665 = vsel %vm611, %v640, 0
        %667 = vmatprep.subr.bf16.mxu0 0
        %668 = vmatpush1.bf16.msra.mxu0 0
        %669 = vmatprep.subr.bf16.mxu0 0
        %670 = vmatpush1.bf16.msra.mxu0 0
        %671 = vmatprep.subr.bf16.mxu0 0
        %672 = vmatpush1.bf16.msra.mxu0 0
        %673 = vmatprep.subr.bf16.mxu0 0
        %674 = vmatpush1.bf16.msra.mxu0 0
        %675 = vmatprep.subr.bf16.mxu0 0
        %676 = vmatpush1.bf16.msra.mxu0 0
        %677 = vmatprep.subr.bf16.mxu0 0
        %678 = vmatpush1.bf16.msra.mxu0 0
        %679 = vmatprep.subr.bf16.mxu0 0
        %680 = vmatpush1.bf16.msra.mxu0 %v661
        %681 = vmatprep.subr.bf16.mxu0 0
        %682 = vmatpush1.bf16.msra.mxu0 %v660
        %683 = vmatprep.subr.bf16.mxu0 0
        %684 = vmatpush2.bf16.msra.mxu0 0
        %685 = vmatprep.subr.bf16.mxu0 0
        %686 = vmatpush2.bf16.msra.mxu0 0
        %687 = vmatprep.subr.bf16.mxu0 0
        %688 = vmatpush2.bf16.msra.mxu0 0
        %689 = vmatprep.subr.bf16.mxu0 0
        %690 = vmatpush2.bf16.msra.mxu0 0
        %691 = vmatprep.subr.bf16.mxu0 0
        %692 = vmatpush2.bf16.msra.mxu0 0
        %693 = vmatprep.subr.bf16.mxu0 0
        %694 = vmatpush2.bf16.msra.mxu0 0
        %695 = vmatprep.subr.bf16.mxu0 0
        %696 = vmatpush2.bf16.msra.mxu0 0
        %697 = vmatprep.subr.bf16.mxu0 0
        %698 = vmatpush2.bf16.msra.mxu0 0
        %699 = vmatprep.mubr.bf16.mxu0 0
        %700 = vmatmul.mubr.bf16.gmra.mxu0 %v665
        %v701 = vpop.f32.mrf.mxu0
        %v702 = vadd.f32 %v650, %v701
        %v703 = vpop.f32.mrf.mxu0
        %v704 = vpop.f32.mrf.mxu0
        %v705 = vpop.f32.mrf.mxu0
        %706 = vdwg.mxu0
        %v707 = vld [vmem:[%s6] sm:$0xf]
        %v708 = vld [vmem:[%s6 + $0x4] sm:$0xf]
        %v709 = vld [vmem:[%s6 + $0x8] sm:$0xf]
        %v710 = vld [vmem:[%s6 + $0xc] sm:$0xf]
        %v715 = vunpack.c.l.b16 %v707
        %v716 = vunpack.c.l.b16 %v708
        %v717 = vunpack.c.l.b16 %v709
        %v718 = vunpack.c.l.b16 %v710
        %v719 = vpack.c.b16 %v716, %v715
        %v720 = vpack.c.b16 %v718, %v717
        %723 = vmatprep.subr.bf16.mxu0 0
        %724 = vmatpush1.bf16.msra.mxu0 0
        %725 = vmatprep.subr.bf16.mxu0 0
        %726 = vmatpush1.bf16.msra.mxu0 0
        %727 = vmatprep.subr.bf16.mxu0 0
        %728 = vmatpush1.bf16.msra.mxu0 0
        %729 = vmatprep.subr.bf16.mxu0 0
        %730 = vmatpush1.bf16.msra.mxu0 0
        %731 = vmatprep.subr.bf16.mxu0 0
        %732 = vmatpush1.bf16.msra.mxu0 0
        %733 = vmatprep.subr.bf16.mxu0 0
        %734 = vmatpush1.bf16.msra.mxu0 0
        %735 = vmatprep.subr.bf16.mxu0 0
        %736 = vmatpush1.bf16.msra.mxu0 %v720
        %737 = vmatprep.subr.bf16.mxu0 0
        %738 = vmatpush1.bf16.msra.mxu0 %v719
        %739 = vmatprep.subr.bf16.mxu0 0
        %740 = vmatpush2.bf16.msra.mxu0 0
        %741 = vmatprep.subr.bf16.mxu0 0
        %742 = vmatpush2.bf16.msra.mxu0 0
        %743 = vmatprep.subr.bf16.mxu0 0
        %744 = vmatpush2.bf16.msra.mxu0 0
        %745 = vmatprep.subr.bf16.mxu0 0
        %746 = vmatpush2.bf16.msra.mxu0 0
        %747 = vmatprep.subr.bf16.mxu0 0
        %748 = vmatpush2.bf16.msra.mxu0 0
        %749 = vmatprep.subr.bf16.mxu0 0
        %750 = vmatpush2.bf16.msra.mxu0 0
        %751 = vmatprep.subr.bf16.mxu0 0
        %752 = vmatpush2.bf16.msra.mxu0 0
        %753 = vmatprep.subr.bf16.mxu0 0
        %754 = vmatpush2.bf16.msra.mxu0 0
        %755 = vmatprep.mubr.bf16.mxu0 0
        %756 = vmatmul.mubr.bf16.gmra.mxu0 %v665
        %v757 = vpop.f32.mrf.mxu0
        %v758 = vadd.f32 0.0, %v757
        %v759 = vpop.f32.mrf.mxu0
        %v760 = vpop.f32.mrf.mxu0
        %v761 = vpop.f32.mrf.mxu0
        %762 = vdwg.mxu0
        %v763 = vld [vmem:[%s7] sm:$0xf]
        %v764 = vld [vmem:[%s7 + $0x4] sm:$0xf]
        %v765 = vld [vmem:[%s7 + $0x8] sm:$0xf]
        %v766 = vld [vmem:[%s7 + $0xc] sm:$0xf]
        %v767 = vld [vmem:[#allocation11] sm:$0x1]
        %v769 = vlaneseq
        %v770 = vshrl.u32 %v769, 7
        %v771 = vsub.s32 0, %v770
        %v772 = vrot.slane %v767, %v771
        %v778 = vunpack.c.l.b16 %v763
        %v779 = vunpack.c.l.b16 %v764
        %v780 = vunpack.c.l.b16 %v765
        %v781 = vunpack.c.l.b16 %v766
        %v782 = vpack.c.b16 %v779, %v778
        %v783 = vpack.c.b16 %v781, %v780
        %786 = vmatprep.subr.bf16.mxu0 0
        %787 = vmatpush1.bf16.msra.mxu0 0
        %788 = vmatprep.subr.bf16.mxu0 0
        %789 = vmatpush1.bf16.msra.mxu0 0
        %790 = vmatprep.subr.bf16.mxu0 0
        %791 = vmatpush1.bf16.msra.mxu0 0
        %792 = vmatprep.subr.bf16.mxu0 0
        %793 = vmatpush1.bf16.msra.mxu0 0
        %794 = vmatprep.subr.bf16.mxu0 0
        %795 = vmatpush1.bf16.msra.mxu0 0
        %796 = vmatprep.subr.bf16.mxu0 0
        %797 = vmatpush1.bf16.msra.mxu0 0
        %798 = vmatprep.subr.bf16.mxu0 0
        %799 = vmatpush1.bf16.msra.mxu0 %v783
        %800 = vmatprep.subr.bf16.mxu0 0
        %801 = vmatpush1.bf16.msra.mxu0 %v782
        %802 = vmatprep.subr.bf16.mxu0 0
        %803 = vmatpush2.bf16.msra.mxu0 0
        %804 = vmatprep.subr.bf16.mxu0 0
        %805 = vmatpush2.bf16.msra.mxu0 0
        %806 = vmatprep.subr.bf16.mxu0 0
        %807 = vmatpush2.bf16.msra.mxu0 0
        %808 = vmatprep.subr.bf16.mxu0 0
        %809 = vmatpush2.bf16.msra.mxu0 0
        %810 = vmatprep.subr.bf16.mxu0 0
        %811 = vmatpush2.bf16.msra.mxu0 0
        %812 = vmatprep.subr.bf16.mxu0 0
        %813 = vmatpush2.bf16.msra.mxu0 0
        %814 = vmatprep.subr.bf16.mxu0 0
        %815 = vmatpush2.bf16.msra.mxu0 0
        %816 = vmatprep.subr.bf16.mxu0 0
        %817 = vmatpush2.bf16.msra.mxu0 0
        %818 = vmatprep.mubr.bf16.mxu0 0
        %819 = vmatmul.mubr.bf16.gmra.mxu0 %v665
        %v820 = vpop.f32.mrf.mxu0
        %v821 = vadd.f32 %v772, %v820
        %v822 = vpop.f32.mrf.mxu0
        %v823 = vpop.f32.mrf.mxu0
        %v824 = vpop.f32.mrf.mxu0
        %825 = vdwg.mxu0
        %v826 = vld [vmem:[#allocation3] sm:$0xff]
        %vm827 = vcmask 15360
        %v829 = vsel %vm827, %v702, 0
        %v832 = vsel %vm827, %v758, 0
        %834 = vmatprep.subr.mxu0 0.0
        %835 = vmatpush1.xpose.msra.mxu0 0.0
        %836 = vmatprep.subr.mxu0 0.0
        %837 = vmatpush1.xpose.msra.mxu0 0.0
        %838 = vmatprep.subr.mxu0 0.0
        %839 = vmatpush1.xpose.msra.mxu0 0.0
        %840 = vmatprep.subr.mxu0 0.0
        %841 = vmatpush1.xpose.msra.mxu0 0.0
        %842 = vmatprep.subr.mxu0 0.0
        %843 = vmatpush1.xpose.msra.mxu0 0.0
        %844 = vmatprep.subr.mxu0 0.0
        %845 = vmatpush1.xpose.msra.mxu0 0.0
        %846 = vmatprep.subr.mxu0 0.0
        %847 = vmatpush1.xpose.msra.mxu0 0.0
        %848 = vmatprep.subr.mxu0 0.0
        %849 = vmatpush1.xpose.msra.mxu0 0.0
        %850 = vmatprep.subr.mxu0 0.0
        %851 = vmatpush1.xpose.msra.mxu0 0.0
        %852 = vmatprep.subr.mxu0 0.0
        %853 = vmatpush1.xpose.msra.mxu0 0.0
        %854 = vmatprep.subr.mxu0 0.0
        %855 = vmatpush1.xpose.msra.mxu0 0.0
        %856 = vmatprep.subr.mxu0 0.0
        %857 = vmatpush1.xpose.msra.mxu0 0.0
        %858 = vmatprep.subr.mxu0 0.0
        %859 = vmatpush1.xpose.msra.mxu0 0.0
        %860 = vmatprep.subr.mxu0 0.0
        %861 = vmatpush1.xpose.msra.mxu0 0.0
        %862 = vmatprep.subr.mxu0 0.0
        %863 = vmatpush1.xpose.msra.mxu0 0.0
        %864 = vmatprep.subr.mxu0 0.0
        %865 = vmatpush1.xpose.msra.mxu0 %v832
        %866 = vmatprep.subr.mxu0 0.0
        %867 = vmatpush2.xpose.msra.mxu0 0.0
        %868 = vmatprep.subr.mxu0 0.0
        %869 = vmatpush2.xpose.msra.mxu0 0.0
        %870 = vmatprep.subr.mxu0 0.0
        %871 = vmatpush2.xpose.msra.mxu0 0.0
        %872 = vmatprep.subr.mxu0 0.0
        %873 = vmatpush2.xpose.msra.mxu0 0.0
        %874 = vmatprep.subr.mxu0 0.0
        %875 = vmatpush2.xpose.msra.mxu0 0.0
        %876 = vmatprep.subr.mxu0 0.0
        %877 = vmatpush2.xpose.msra.mxu0 0.0
        %878 = vmatprep.subr.mxu0 0.0
        %879 = vmatpush2.xpose.msra.mxu0 0.0
        %880 = vmatprep.subr.mxu0 0.0
        %881 = vmatpush2.xpose.msra.mxu0 0.0
        %882 = vmatprep.subr.mxu0 0.0
        %883 = vmatpush2.xpose.msra.mxu0 0.0
        %884 = vmatprep.subr.mxu0 0.0
        %885 = vmatpush2.xpose.msra.mxu0 0.0
        %886 = vmatprep.subr.mxu0 0.0
        %887 = vmatpush2.xpose.msra.mxu0 0.0
        %888 = vmatprep.subr.mxu0 0.0
        %889 = vmatpush2.xpose.msra.mxu0 0.0
        %890 = vmatprep.subr.mxu0 0.0
        %891 = vmatpush2.xpose.msra.mxu0 0.0
        %892 = vmatprep.subr.mxu0 0.0
        %893 = vmatpush2.xpose.msra.mxu0 0.0
        %894 = vmatprep.subr.mxu0 0.0
        %895 = vmatpush2.xpose.msra.mxu0 0.0
        %896 = vmatprep.subr.mxu0 0.0
        %897 = vmatpush2.xpose.msra.mxu0 0.0
        %898 = vmatprep.mubr.f32.mxu0 0.0
        %899 = vmatmul.mubr.f32.gmra.mxu0 %v829
        %v900 = vpop.f32.mrf.mxu0
        %v901 = vadd.f32 %v826, %v900
        %v902 = vpop.f32.mrf.mxu0
        %903 = vdwg.mxu0
        %vm904 = vcmask 64512
        %v905 = vsel %vm904, %v901, -inf
        %906 = vmax.xlane.f32.xlu0 %v905
        %v907 = vpop.xlane.xlu0 %906
        %v908 = vsub.f32 %v901, %v907
        %v909 = vmul.f32 %v908, 1.442695
        %v910 = vpow.pop %v909
        %v911 = vsel %vm904, %v910, 0.0
        %912 = vadd.xlane.f32.xlu0 %v911
        %v913 = vpop.xlane.xlu0 %912
        %v914 = vrcp.pop %v913
        %v915 = vmul.f32 %v910, %v914
        %v917 = vsel %vm904, %v915, 0
        %919 = vmatprep.subr.mxu0 0.0
        %920 = vmatpush1.msra.mxu0 0.0
        %921 = vmatprep.subr.mxu0 0.0
        %922 = vmatpush1.msra.mxu0 0.0
        %923 = vmatprep.subr.mxu0 0.0
        %924 = vmatpush1.msra.mxu0 0.0
        %925 = vmatprep.subr.mxu0 0.0
        %926 = vmatpush1.msra.mxu0 0.0
        %927 = vmatprep.subr.mxu0 0.0
        %928 = vmatpush1.msra.mxu0 0.0
        %929 = vmatprep.subr.mxu0 0.0
        %930 = vmatpush1.msra.mxu0 0.0
        %931 = vmatprep.subr.mxu0 0.0
        %932 = vmatpush1.msra.mxu0 0.0
        %933 = vmatprep.subr.mxu0 0.0
        %934 = vmatpush1.msra.mxu0 0.0
        %935 = vmatprep.subr.mxu0 0.0
        %936 = vmatpush1.msra.mxu0 0.0
        %937 = vmatprep.subr.mxu0 0.0
        %938 = vmatpush1.msra.mxu0 0.0
        %939 = vmatprep.subr.mxu0 0.0
        %940 = vmatpush1.msra.mxu0 0.0
        %941 = vmatprep.subr.mxu0 0.0
        %942 = vmatpush1.msra.mxu0 0.0
        %943 = vmatprep.subr.mxu0 0.0
        %944 = vmatpush1.msra.mxu0 0.0
        %945 = vmatprep.subr.mxu0 0.0
        %946 = vmatpush1.msra.mxu0 0.0
        %947 = vmatprep.subr.mxu0 0.0
        %948 = vmatpush1.msra.mxu0 0.0
        %949 = vmatprep.subr.mxu0 0.0
        %950 = vmatpush1.msra.mxu0 %v821
        %951 = vmatprep.subr.mxu0 0.0
        %952 = vmatpush2.msra.mxu0 0.0
        %953 = vmatprep.subr.mxu0 0.0
        %954 = vmatpush2.msra.mxu0 0.0
        %955 = vmatprep.subr.mxu0 0.0
        %956 = vmatpush2.msra.mxu0 0.0
        %957 = vmatprep.subr.mxu0 0.0
        %958 = vmatpush2.msra.mxu0 0.0
        %959 = vmatprep.subr.mxu0 0.0
        %960 = vmatpush2.msra.mxu0 0.0
        %961 = vmatprep.subr.mxu0 0.0
        %962 = vmatpush2.msra.mxu0 0.0
        %963 = vmatprep.subr.mxu0 0.0
        %964 = vmatpush2.msra.mxu0 0.0
        %965 = vmatprep.subr.mxu0 0.0
        %966 = vmatpush2.msra.mxu0 0.0
        %967 = vmatprep.subr.mxu0 0.0
        %968 = vmatpush2.msra.mxu0 0.0
        %969 = vmatprep.subr.mxu0 0.0
        %970 = vmatpush2.msra.mxu0 0.0
        %971 = vmatprep.subr.mxu0 0.0
        %972 = vmatpush2.msra.mxu0 0.0
        %973 = vmatprep.subr.mxu0 0.0
        %974 = vmatpush2.msra.mxu0 0.0
        %975 = vmatprep.subr.mxu0 0.0
        %976 = vmatpush2.msra.mxu0 0.0
        %977 = vmatprep.subr.mxu0 0.0
        %978 = vmatpush2.msra.mxu0 0.0
        %979 = vmatprep.subr.mxu0 0.0
        %980 = vmatpush2.msra.mxu0 0.0
        %981 = vmatprep.subr.mxu0 0.0
        %982 = vmatpush2.msra.mxu0 0.0
        %983 = vmatprep.mubr.f32.mxu0 0.0
        %984 = vmatmul.mubr.f32.gmra.mxu0 %v917
        %v985 = vpop.f32.mrf.mxu0
        %v986 = vadd.f32 0.0, %v985
        %v987 = vpop.f32.mrf.mxu0
        %988 = vdwg.mxu0
        %989 = vst.msk [vmem:[#allocation2] sm:$0xff] %vm827, %v986
        %990 = vrot.lane.b32.xlu0 %v702, 126
        %v991 = vpop.permute.xlu0 %990
        %992 = vrot.lane.b32.xlu0 %v758, 126
        %v993 = vpop.permute.xlu0 %992
        %v994 = vsel %vm827, %v991, 0
        %v996 = vsel %vm827, %v993, 0
        %998 = vmatprep.subr.mxu0 0.0
        %999 = vmatpush1.xpose.msra.mxu0 0.0
        %1000 = vmatprep.subr.mxu0 0.0
        %1001 = vmatpush1.xpose.msra.mxu0 0.0
        %1002 = vmatprep.subr.mxu0 0.0
        %1003 = vmatpush1.xpose.msra.mxu0 0.0
        %1004 = vmatprep.subr.mxu0 0.0
        %1005 = vmatpush1.xpose.msra.mxu0 0.0
        %1006 = vmatprep.subr.mxu0 0.0
        %1007 = vmatpush1.xpose.msra.mxu0 0.0
        %1008 = vmatprep.subr.mxu0 0.0
        %1009 = vmatpush1.xpose.msra.mxu0 0.0
        %1010 = vmatprep.subr.mxu0 0.0
        %1011 = vmatpush1.xpose.msra.mxu0 0.0
        %1012 = vmatprep.subr.mxu0 0.0
        %1013 = vmatpush1.xpose.msra.mxu0 0.0
        %1014 = vmatprep.subr.mxu0 0.0
        %1015 = vmatpush1.xpose.msra.mxu0 0.0
        %1016 = vmatprep.subr.mxu0 0.0
        %1017 = vmatpush1.xpose.msra.mxu0 0.0
        %1018 = vmatprep.subr.mxu0 0.0
        %1019 = vmatpush1.xpose.msra.mxu0 0.0
        %1020 = vmatprep.subr.mxu0 0.0
        %1021 = vmatpush1.xpose.msra.mxu0 0.0
        %1022 = vmatprep.subr.mxu0 0.0
        %1023 = vmatpush1.xpose.msra.mxu0 0.0
        %1024 = vmatprep.subr.mxu0 0.0
        %1025 = vmatpush1.xpose.msra.mxu0 0.0
        %1026 = vmatprep.subr.mxu0 0.0
        %1027 = vmatpush1.xpose.msra.mxu0 0.0
        %1028 = vmatprep.subr.mxu0 0.0
        %1029 = vmatpush1.xpose.msra.mxu0 %v996
        %1030 = vmatprep.subr.mxu0 0.0
        %1031 = vmatpush2.xpose.msra.mxu0 0.0
        %1032 = vmatprep.subr.mxu0 0.0
        %1033 = vmatpush2.xpose.msra.mxu0 0.0
        %1034 = vmatprep.subr.mxu0 0.0
        %1035 = vmatpush2.xpose.msra.mxu0 0.0
        %1036 = vmatprep.subr.mxu0 0.0
        %1037 = vmatpush2.xpose.msra.mxu0 0.0
        %1038 = vmatprep.subr.mxu0 0.0
        %1039 = vmatpush2.xpose.msra.mxu0 0.0
        %1040 = vmatprep.subr.mxu0 0.0
        %1041 = vmatpush2.xpose.msra.mxu0 0.0
        %1042 = vmatprep.subr.mxu0 0.0
        %1043 = vmatpush2.xpose.msra.mxu0 0.0
        %1044 = vmatprep.subr.mxu0 0.0
        %1045 = vmatpush2.xpose.msra.mxu0 0.0
        %1046 = vmatprep.subr.mxu0 0.0
        %1047 = vmatpush2.xpose.msra.mxu0 0.0
        %1048 = vmatprep.subr.mxu0 0.0
        %1049 = vmatpush2.xpose.msra.mxu0 0.0
        %1050 = vmatprep.subr.mxu0 0.0
        %1051 = vmatpush2.xpose.msra.mxu0 0.0
        %1052 = vmatprep.subr.mxu0 0.0
        %1053 = vmatpush2.xpose.msra.mxu0 0.0
        %1054 = vmatprep.subr.mxu0 0.0
        %1055 = vmatpush2.xpose.msra.mxu0 0.0
        %1056 = vmatprep.subr.mxu0 0.0
        %1057 = vmatpush2.xpose.msra.mxu0 0.0
        %1058 = vmatprep.subr.mxu0 0.0
        %1059 = vmatpush2.xpose.msra.mxu0 0.0
        %1060 = vmatprep.subr.mxu0 0.0
        %1061 = vmatpush2.xpose.msra.mxu0 0.0
        %1062 = vmatprep.mubr.f32.mxu0 0.0
        %1063 = vmatmul.mubr.f32.gmra.mxu0 %v994
        %v1064 = vpop.f32.mrf.mxu0
        %v1065 = vadd.f32 %v826, %v1064
        %v1066 = vpop.f32.mrf.mxu0
        %1067 = vdwg.mxu0
        %v1068 = vsel %vm904, %v1065, -inf
        %1069 = vmax.xlane.f32.xlu0 %v1068
        %v1070 = vpop.xlane.xlu0 %1069
        %v1071 = vsub.f32 %v1065, %v1070
        %v1072 = vmul.f32 %v1071, 1.442695
        %v1073 = vpow.pop %v1072
        %v1074 = vsel %vm904, %v1073, 0.0
        %1075 = vadd.xlane.f32.xlu0 %v1074
        %v1076 = vpop.xlane.xlu0 %1075
        %v1077 = vrcp.pop %v1076
        %v1078 = vmul.f32 %v1073, %v1077
        %1080 = vrot.lane.b32.xlu0 %v821, 126
        %v1081 = vpop.permute.xlu0 %1080
        %v1084 = vsel %vm904, %v1078, 0
        %1086 = vmatprep.subr.mxu0 0.0
        %1087 = vmatpush1.msra.mxu0 0.0
        %1088 = vmatprep.subr.mxu0 0.0
        %1089 = vmatpush1.msra.mxu0 0.0
        %1090 = vmatprep.subr.mxu0 0.0
        %1091 = vmatpush1.msra.mxu0 0.0
        %1092 = vmatprep.subr.mxu0 0.0
        %1093 = vmatpush1.msra.mxu0 0.0
        %1094 = vmatprep.subr.mxu0 0.0
        %1095 = vmatpush1.msra.mxu0 0.0
        %1096 = vmatprep.subr.mxu0 0.0
        %1097 = vmatpush1.msra.mxu0 0.0
        %1098 = vmatprep.subr.mxu0 0.0
        %1099 = vmatpush1.msra.mxu0 0.0
        %1100 = vmatprep.subr.mxu0 0.0
        %1101 = vmatpush1.msra.mxu0 0.0
        %1102 = vmatprep.subr.mxu0 0.0
        %1103 = vmatpush1.msra.mxu0 0.0
        %1104 = vmatprep.subr.mxu0 0.0
        %1105 = vmatpush1.msra.mxu0 0.0
        %1106 = vmatprep.subr.mxu0 0.0
        %1107 = vmatpush1.msra.mxu0 0.0
        %1108 = vmatprep.subr.mxu0 0.0
        %1109 = vmatpush1.msra.mxu0 0.0
        %1110 = vmatprep.subr.mxu0 0.0
        %1111 = vmatpush1.msra.mxu0 0.0
        %1112 = vmatprep.subr.mxu0 0.0
        %1113 = vmatpush1.msra.mxu0 0.0
        %1114 = vmatprep.subr.mxu0 0.0
        %1115 = vmatpush1.msra.mxu0 0.0
        %1116 = vmatprep.subr.mxu0 0.0
        %1117 = vmatpush1.msra.mxu0 %v1081
        %1118 = vmatprep.subr.mxu0 0.0
        %1119 = vmatpush2.msra.mxu0 0.0
        %1120 = vmatprep.subr.mxu0 0.0
        %1121 = vmatpush2.msra.mxu0 0.0
        %1122 = vmatprep.subr.mxu0 0.0
        %1123 = vmatpush2.msra.mxu0 0.0
        %1124 = vmatprep.subr.mxu0 0.0
        %1125 = vmatpush2.msra.mxu0 0.0
        %1126 = vmatprep.subr.mxu0 0.0
        %1127 = vmatpush2.msra.mxu0 0.0
        %1128 = vmatprep.subr.mxu0 0.0
        %1129 = vmatpush2.msra.mxu0 0.0
        %1130 = vmatprep.subr.mxu0 0.0
        %1131 = vmatpush2.msra.mxu0 0.0
        %1132 = vmatprep.subr.mxu0 0.0
        %1133 = vmatpush2.msra.mxu0 0.0
        %1134 = vmatprep.subr.mxu0 0.0
        %1135 = vmatpush2.msra.mxu0 0.0
        %1136 = vmatprep.subr.mxu0 0.0
        %1137 = vmatpush2.msra.mxu0 0.0
        %1138 = vmatprep.subr.mxu0 0.0
        %1139 = vmatpush2.msra.mxu0 0.0
        %1140 = vmatprep.subr.mxu0 0.0
        %1141 = vmatpush2.msra.mxu0 0.0
        %1142 = vmatprep.subr.mxu0 0.0
        %1143 = vmatpush2.msra.mxu0 0.0
        %1144 = vmatprep.subr.mxu0 0.0
        %1145 = vmatpush2.msra.mxu0 0.0
        %1146 = vmatprep.subr.mxu0 0.0
        %1147 = vmatpush2.msra.mxu0 0.0
        %1148 = vmatprep.subr.mxu0 0.0
        %1149 = vmatpush2.msra.mxu0 0.0
        %1150 = vmatprep.mubr.f32.mxu0 0.0
        %1151 = vmatmul.mubr.f32.gmra.mxu0 %v1084
        %v1152 = vpop.f32.mrf.mxu0
        %v1153 = vadd.f32 0.0, %v1152
        %v1154 = vpop.f32.mrf.mxu0
        %1155 = vdwg.mxu0
        %1157 = vrot.lane.b32.xlu0 %v1153, 2
        %v1158 = vpop.permute.xlu0 %1157
        %vm1160 = vcmask 31760
        %1161 = vst.msk [vmem:[#allocation2] sm:$0xff] %vm1160, %v1158
        %1162 = vrot.lane.b32.xlu0 %v702, 124
        %v1163 = vpop.permute.xlu0 %1162
        %1164 = vrot.lane.b32.xlu0 %v758, 124
        %v1165 = vpop.permute.xlu0 %1164
        %v1166 = vsel %vm827, %v1163, 0
        %v1168 = vsel %vm827, %v1165, 0
        %1170 = vmatprep.subr.mxu0 0.0
        %1171 = vmatpush1.xpose.msra.mxu0 0.0
        %1172 = vmatprep.subr.mxu0 0.0
        %1173 = vmatpush1.xpose.msra.mxu0 0.0
        %1174 = vmatprep.subr.mxu0 0.0
        %1175 = vmatpush1.xpose.msra.mxu0 0.0
        %1176 = vmatprep.subr.mxu0 0.0
        %1177 = vmatpush1.xpose.msra.mxu0 0.0
        %1178 = vmatprep.subr.mxu0 0.0
        %1179 = vmatpush1.xpose.msra.mxu0 0.0
        %1180 = vmatprep.subr.mxu0 0.0
        %1181 = vmatpush1.xpose.msra.mxu0 0.0
        %1182 = vmatprep.subr.mxu0 0.0
        %1183 = vmatpush1.xpose.msra.mxu0 0.0
        %1184 = vmatprep.subr.mxu0 0.0
        %1185 = vmatpush1.xpose.msra.mxu0 0.0
        %1186 = vmatprep.subr.mxu0 0.0
        %1187 = vmatpush1.xpose.msra.mxu0 0.0
        %1188 = vmatprep.subr.mxu0 0.0
        %1189 = vmatpush1.xpose.msra.mxu0 0.0
        %1190 = vmatprep.subr.mxu0 0.0
        %1191 = vmatpush1.xpose.msra.mxu0 0.0
        %1192 = vmatprep.subr.mxu0 0.0
        %1193 = vmatpush1.xpose.msra.mxu0 0.0
        %1194 = vmatprep.subr.mxu0 0.0
        %1195 = vmatpush1.xpose.msra.mxu0 0.0
        %1196 = vmatprep.subr.mxu0 0.0
        %1197 = vmatpush1.xpose.msra.mxu0 0.0
        %1198 = vmatprep.subr.mxu0 0.0
        %1199 = vmatpush1.xpose.msra.mxu0 0.0
        %1200 = vmatprep.subr.mxu0 0.0
        %1201 = vmatpush1.xpose.msra.mxu0 %v1168
        %1202 = vmatprep.subr.mxu0 0.0
        %1203 = vmatpush2.xpose.msra.mxu0 0.0
        %1204 = vmatprep.subr.mxu0 0.0
        %1205 = vmatpush2.xpose.msra.mxu0 0.0
        %1206 = vmatprep.subr.mxu0 0.0
        %1207 = vmatpush2.xpose.msra.mxu0 0.0
        %1208 = vmatprep.subr.mxu0 0.0
        %1209 = vmatpush2.xpose.msra.mxu0 0.0
        %1210 = vmatprep.subr.mxu0 0.0
        %1211 = vmatpush2.xpose.msra.mxu0 0.0
        %1212 = vmatprep.subr.mxu0 0.0
        %1213 = vmatpush2.xpose.msra.mxu0 0.0
        %1214 = vmatprep.subr.mxu0 0.0
        %1215 = vmatpush2.xpose.msra.mxu0 0.0
        %1216 = vmatprep.subr.mxu0 0.0
        %1217 = vmatpush2.xpose.msra.mxu0 0.0
        %1218 = vmatprep.subr.mxu0 0.0
        %1219 = vmatpush2.xpose.msra.mxu0 0.0
        %1220 = vmatprep.subr.mxu0 0.0
        %1221 = vmatpush2.xpose.msra.mxu0 0.0
        %1222 = vmatprep.subr.mxu0 0.0
        %1223 = vmatpush2.xpose.msra.mxu0 0.0
        %1224 = vmatprep.subr.mxu0 0.0
        %1225 = vmatpush2.xpose.msra.mxu0 0.0
        %1226 = vmatprep.subr.mxu0 0.0
        %1227 = vmatpush2.xpose.msra.mxu0 0.0
        %1228 = vmatprep.subr.mxu0 0.0
        %1229 = vmatpush2.xpose.msra.mxu0 0.0
        %1230 = vmatprep.subr.mxu0 0.0
        %1231 = vmatpush2.xpose.msra.mxu0 0.0
        %1232 = vmatprep.subr.mxu0 0.0
        %1233 = vmatpush2.xpose.msra.mxu0 0.0
        %1234 = vmatprep.mubr.f32.mxu0 0.0
        %1235 = vmatmul.mubr.f32.gmra.mxu0 %v1166
        %v1236 = vpop.f32.mrf.mxu0
        %v1237 = vadd.f32 %v826, %v1236
        %v1238 = vpop.f32.mrf.mxu0
        %1239 = vdwg.mxu0
        %v1240 = vsel %vm904, %v1237, -inf
        %1241 = vmax.xlane.f32.xlu0 %v1240
        %v1242 = vpop.xlane.xlu0 %1241
        %v1243 = vsub.f32 %v1237, %v1242
        %v1244 = vmul.f32 %v1243, 1.442695
        %v1245 = vpow.pop %v1244
        %v1246 = vsel %vm904, %v1245, 0.0
        %1247 = vadd.xlane.f32.xlu0 %v1246
        %v1248 = vpop.xlane.xlu0 %1247
        %v1249 = vrcp.pop %v1248
        %v1250 = vmul.f32 %v1245, %v1249
        %1251 = vrot.lane.b32.xlu0 %v821, 124
        %v1252 = vpop.permute.xlu0 %1251
        %v1255 = vsel %vm904, %v1250, 0
        %1257 = vmatprep.subr.mxu0 0.0
        %1258 = vmatpush1.msra.mxu0 0.0
        %1259 = vmatprep.subr.mxu0 0.0
        %1260 = vmatpush1.msra.mxu0 0.0
        %1261 = vmatprep.subr.mxu0 0.0
        %1262 = vmatpush1.msra.mxu0 0.0
        %1263 = vmatprep.subr.mxu0 0.0
        %1264 = vmatpush1.msra.mxu0 0.0
        %1265 = vmatprep.subr.mxu0 0.0
        %1266 = vmatpush1.msra.mxu0 0.0
        %1267 = vmatprep.subr.mxu0 0.0
        %1268 = vmatpush1.msra.mxu0 0.0
        %1269 = vmatprep.subr.mxu0 0.0
        %1270 = vmatpush1.msra.mxu0 0.0
        %1271 = vmatprep.subr.mxu0 0.0
        %1272 = vmatpush1.msra.mxu0 0.0
        %1273 = vmatprep.subr.mxu0 0.0
        %1274 = vmatpush1.msra.mxu0 0.0
        %1275 = vmatprep.subr.mxu0 0.0
        %1276 = vmatpush1.msra.mxu0 0.0
        %1277 = vmatprep.subr.mxu0 0.0
        %1278 = vmatpush1.msra.mxu0 0.0
        %1279 = vmatprep.subr.mxu0 0.0
        %1280 = vmatpush1.msra.mxu0 0.0
        %1281 = vmatprep.subr.mxu0 0.0
        %1282 = vmatpush1.msra.mxu0 0.0
        %1283 = vmatprep.subr.mxu0 0.0
        %1284 = vmatpush1.msra.mxu0 0.0
        %1285 = vmatprep.subr.mxu0 0.0
        %1286 = vmatpush1.msra.mxu0 0.0
        %1287 = vmatprep.subr.mxu0 0.0
        %1288 = vmatpush1.msra.mxu0 %v1252
        %1289 = vmatprep.subr.mxu0 0.0
        %1290 = vmatpush2.msra.mxu0 0.0
        %1291 = vmatprep.subr.mxu0 0.0
        %1292 = vmatpush2.msra.mxu0 0.0
        %1293 = vmatprep.subr.mxu0 0.0
        %1294 = vmatpush2.msra.mxu0 0.0
        %1295 = vmatprep.subr.mxu0 0.0
        %1296 = vmatpush2.msra.mxu0 0.0
        %1297 = vmatprep.subr.mxu0 0.0
        %1298 = vmatpush2.msra.mxu0 0.0
        %1299 = vmatprep.subr.mxu0 0.0
        %1300 = vmatpush2.msra.mxu0 0.0
        %1301 = vmatprep.subr.mxu0 0.0
        %1302 = vmatpush2.msra.mxu0 0.0
        %1303 = vmatprep.subr.mxu0 0.0
        %1304 = vmatpush2.msra.mxu0 0.0
        %1305 = vmatprep.subr.mxu0 0.0
        %1306 = vmatpush2.msra.mxu0 0.0
        %1307 = vmatprep.subr.mxu0 0.0
        %1308 = vmatpush2.msra.mxu0 0.0
        %1309 = vmatprep.subr.mxu0 0.0
        %1310 = vmatpush2.msra.mxu0 0.0
        %1311 = vmatprep.subr.mxu0 0.0
        %1312 = vmatpush2.msra.mxu0 0.0
        %1313 = vmatprep.subr.mxu0 0.0
        %1314 = vmatpush2.msra.mxu0 0.0
        %1315 = vmatprep.subr.mxu0 0.0
        %1316 = vmatpush2.msra.mxu0 0.0
        %1317 = vmatprep.subr.mxu0 0.0
        %1318 = vmatpush2.msra.mxu0 0.0
        %1319 = vmatprep.subr.mxu0 0.0
        %1320 = vmatpush2.msra.mxu0 0.0
        %1321 = vmatprep.mubr.f32.mxu0 0.0
        %1322 = vmatmul.mubr.f32.gmra.mxu0 %v1255
        %v1323 = vpop.f32.mrf.mxu0
        %v1324 = vadd.f32 0.0, %v1323
        %v1325 = vpop.f32.mrf.mxu0
        %1326 = vdwg.mxu0
        %1328 = vrot.lane.b32.xlu0 %v1324, 4
        %v1329 = vpop.permute.xlu0 %1328
        %vm1331 = vcmask 48160
        %1332 = vst.msk [vmem:[#allocation2] sm:$0xff] %vm1331, %v1329
        %1333 = vrot.lane.b32.xlu0 %v702, 122
        %v1334 = vpop.permute.xlu0 %1333
        %1335 = vrot.lane.b32.xlu0 %v758, 122
        %v1336 = vpop.permute.xlu0 %1335
        %v1337 = vsel %vm827, %v1334, 0
        %v1339 = vsel %vm827, %v1336, 0
        %1341 = vmatprep.subr.mxu0 0.0
        %1342 = vmatpush1.xpose.msra.mxu0 0.0
        %1343 = vmatprep.subr.mxu0 0.0
        %1344 = vmatpush1.xpose.msra.mxu0 0.0
        %1345 = vmatprep.subr.mxu0 0.0
        %1346 = vmatpush1.xpose.msra.mxu0 0.0
        %1347 = vmatprep.subr.mxu0 0.0
        %1348 = vmatpush1.xpose.msra.mxu0 0.0
        %1349 = vmatprep.subr.mxu0 0.0
        %1350 = vmatpush1.xpose.msra.mxu0 0.0
        %1351 = vmatprep.subr.mxu0 0.0
        %1352 = vmatpush1.xpose.msra.mxu0 0.0
        %1353 = vmatprep.subr.mxu0 0.0
        %1354 = vmatpush1.xpose.msra.mxu0 0.0
        %1355 = vmatprep.subr.mxu0 0.0
        %1356 = vmatpush1.xpose.msra.mxu0 0.0
        %1357 = vmatprep.subr.mxu0 0.0
        %1358 = vmatpush1.xpose.msra.mxu0 0.0
        %1359 = vmatprep.subr.mxu0 0.0
        %1360 = vmatpush1.xpose.msra.mxu0 0.0
        %1361 = vmatprep.subr.mxu0 0.0
        %1362 = vmatpush1.xpose.msra.mxu0 0.0
        %1363 = vmatprep.subr.mxu0 0.0
        %1364 = vmatpush1.xpose.msra.mxu0 0.0
        %1365 = vmatprep.subr.mxu0 0.0
        %1366 = vmatpush1.xpose.msra.mxu0 0.0
        %1367 = vmatprep.subr.mxu0 0.0
        %1368 = vmatpush1.xpose.msra.mxu0 0.0
        %1369 = vmatprep.subr.mxu0 0.0
        %1370 = vmatpush1.xpose.msra.mxu0 0.0
        %1371 = vmatprep.subr.mxu0 0.0
        %1372 = vmatpush1.xpose.msra.mxu0 %v1339
        %1373 = vmatprep.subr.mxu0 0.0
        %1374 = vmatpush2.xpose.msra.mxu0 0.0
        %1375 = vmatprep.subr.mxu0 0.0
        %1376 = vmatpush2.xpose.msra.mxu0 0.0
        %1377 = vmatprep.subr.mxu0 0.0
        %1378 = vmatpush2.xpose.msra.mxu0 0.0
        %1379 = vmatprep.subr.mxu0 0.0
        %1380 = vmatpush2.xpose.msra.mxu0 0.0
        %1381 = vmatprep.subr.mxu0 0.0
        %1382 = vmatpush2.xpose.msra.mxu0 0.0
        %1383 = vmatprep.subr.mxu0 0.0
        %1384 = vmatpush2.xpose.msra.mxu0 0.0
        %1385 = vmatprep.subr.mxu0 0.0
        %1386 = vmatpush2.xpose.msra.mxu0 0.0
        %1387 = vmatprep.subr.mxu0 0.0
        %1388 = vmatpush2.xpose.msra.mxu0 0.0
        %1389 = vmatprep.subr.mxu0 0.0
        %1390 = vmatpush2.xpose.msra.mxu0 0.0
        %1391 = vmatprep.subr.mxu0 0.0
        %1392 = vmatpush2.xpose.msra.mxu0 0.0
        %1393 = vmatprep.subr.mxu0 0.0
        %1394 = vmatpush2.xpose.msra.mxu0 0.0
        %1395 = vmatprep.subr.mxu0 0.0
        %1396 = vmatpush2.xpose.msra.mxu0 0.0
        %1397 = vmatprep.subr.mxu0 0.0
        %1398 = vmatpush2.xpose.msra.mxu0 0.0
        %1399 = vmatprep.subr.mxu0 0.0
        %1400 = vmatpush2.xpose.msra.mxu0 0.0
        %1401 = vmatprep.subr.mxu0 0.0
        %1402 = vmatpush2.xpose.msra.mxu0 0.0
        %1403 = vmatprep.subr.mxu0 0.0
        %1404 = vmatpush2.xpose.msra.mxu0 0.0
        %1405 = vmatprep.mubr.f32.mxu0 0.0
        %1406 = vmatmul.mubr.f32.gmra.mxu0 %v1337
        %v1407 = vpop.f32.mrf.mxu0
        %v1408 = vadd.f32 %v826, %v1407
        %v1409 = vpop.f32.mrf.mxu0
        %1410 = vdwg.mxu0
        %v1411 = vsel %vm904, %v1408, -inf
        %1412 = vmax.xlane.f32.xlu0 %v1411
        %v1413 = vpop.xlane.xlu0 %1412
        %v1414 = vsub.f32 %v1408, %v1413
        %v1415 = vmul.f32 %v1414, 1.442695
        %v1416 = vpow.pop %v1415
        %v1417 = vsel %vm904, %v1416, 0.0
        %1418 = vadd.xlane.f32.xlu0 %v1417
        %v1419 = vpop.xlane.xlu0 %1418
        %v1420 = vrcp.pop %v1419
        %v1421 = vmul.f32 %v1416, %v1420
        %1422 = vrot.lane.b32.xlu0 %v821, 122
        %v1423 = vpop.permute.xlu0 %1422
        %v1426 = vsel %vm904, %v1421, 0
        %1428 = vmatprep.subr.mxu0 0.0
        %1429 = vmatpush1.msra.mxu0 0.0
        %1430 = vmatprep.subr.mxu0 0.0
        %1431 = vmatpush1.msra.mxu0 0.0
        %1432 = vmatprep.subr.mxu0 0.0
        %1433 = vmatpush1.msra.mxu0 0.0
        %1434 = vmatprep.subr.mxu0 0.0
        %1435 = vmatpush1.msra.mxu0 0.0
        %1436 = vmatprep.subr.mxu0 0.0
        %1437 = vmatpush1.msra.mxu0 0.0
        %1438 = vmatprep.subr.mxu0 0.0
        %1439 = vmatpush1.msra.mxu0 0.0
        %1440 = vmatprep.subr.mxu0 0.0
        %1441 = vmatpush1.msra.mxu0 0.0
        %1442 = vmatprep.subr.mxu0 0.0
        %1443 = vmatpush1.msra.mxu0 0.0
        %1444 = vmatprep.subr.mxu0 0.0
        %1445 = vmatpush1.msra.mxu0 0.0
        %1446 = vmatprep.subr.mxu0 0.0
        %1447 = vmatpush1.msra.mxu0 0.0
        %1448 = vmatprep.subr.mxu0 0.0
        %1449 = vmatpush1.msra.mxu0 0.0
        %1450 = vmatprep.subr.mxu0 0.0
        %1451 = vmatpush1.msra.mxu0 0.0
        %1452 = vmatprep.subr.mxu0 0.0
        %1453 = vmatpush1.msra.mxu0 0.0
        %1454 = vmatprep.subr.mxu0 0.0
        %1455 = vmatpush1.msra.mxu0 0.0
        %1456 = vmatprep.subr.mxu0 0.0
        %1457 = vmatpush1.msra.mxu0 0.0
        %1458 = vmatprep.subr.mxu0 0.0
        %1459 = vmatpush1.msra.mxu0 %v1423
        %1460 = vmatprep.subr.mxu0 0.0
        %1461 = vmatpush2.msra.mxu0 0.0
        %1462 = vmatprep.subr.mxu0 0.0
        %1463 = vmatpush2.msra.mxu0 0.0
        %1464 = vmatprep.subr.mxu0 0.0
        %1465 = vmatpush2.msra.mxu0 0.0
        %1466 = vmatprep.subr.mxu0 0.0
        %1467 = vmatpush2.msra.mxu0 0.0
        %1468 = vmatprep.subr.mxu0 0.0
        %1469 = vmatpush2.msra.mxu0 0.0
        %1470 = vmatprep.subr.mxu0 0.0
        %1471 = vmatpush2.msra.mxu0 0.0
        %1472 = vmatprep.subr.mxu0 0.0
        %1473 = vmatpush2.msra.mxu0 0.0
        %1474 = vmatprep.subr.mxu0 0.0
        %1475 = vmatpush2.msra.mxu0 0.0
        %1476 = vmatprep.subr.mxu0 0.0
        %1477 = vmatpush2.msra.mxu0 0.0
        %1478 = vmatprep.subr.mxu0 0.0
        %1479 = vmatpush2.msra.mxu0 0.0
        %1480 = vmatprep.subr.mxu0 0.0
        %1481 = vmatpush2.msra.mxu0 0.0
        %1482 = vmatprep.subr.mxu0 0.0
        %1483 = vmatpush2.msra.mxu0 0.0
        %1484 = vmatprep.subr.mxu0 0.0
        %1485 = vmatpush2.msra.mxu0 0.0
        %1486 = vmatprep.subr.mxu0 0.0
        %1487 = vmatpush2.msra.mxu0 0.0
        %1488 = vmatprep.subr.mxu0 0.0
        %1489 = vmatpush2.msra.mxu0 0.0
        %1490 = vmatprep.subr.mxu0 0.0
        %1491 = vmatpush2.msra.mxu0 0.0
        %1492 = vmatprep.mubr.f32.mxu0 0.0
        %1493 = vmatmul.mubr.f32.gmra.mxu0 %v1426
        %v1494 = vpop.f32.mrf.mxu0
        %v1495 = vadd.f32 0.0, %v1494
        %v1496 = vpop.f32.mrf.mxu0
        %1497 = vdwg.mxu0
        %1499 = vrot.lane.b32.xlu0 %v1495, 6
        %v1500 = vpop.permute.xlu0 %1499
        %vm1502 = vcmask 64560
        %1503 = vst.msk [vmem:[#allocation2] sm:$0xff] %vm1502, %v1500
        %1504 = vrot.lane.b32.xlu0 %v702, 120
        %v1505 = vpop.permute.xlu0 %1504
        %1506 = vrot.lane.b32.xlu0 %v758, 120
        %v1507 = vpop.permute.xlu0 %1506
        %v1508 = vsel %vm827, %v1505, 0
        %v1510 = vsel %vm827, %v1507, 0
        %1512 = vmatprep.subr.mxu0 0.0
        %1513 = vmatpush1.xpose.msra.mxu0 0.0
        %1514 = vmatprep.subr.mxu0 0.0
        %1515 = vmatpush1.xpose.msra.mxu0 0.0
        %1516 = vmatprep.subr.mxu0 0.0
        %1517 = vmatpush1.xpose.msra.mxu0 0.0
        %1518 = vmatprep.subr.mxu0 0.0
        %1519 = vmatpush1.xpose.msra.mxu0 0.0
        %1520 = vmatprep.subr.mxu0 0.0
        %1521 = vmatpush1.xpose.msra.mxu0 0.0
        %1522 = vmatprep.subr.mxu0 0.0
        %1523 = vmatpush1.xpose.msra.mxu0 0.0
        %1524 = vmatprep.subr.mxu0 0.0
        %1525 = vmatpush1.xpose.msra.mxu0 0.0
        %1526 = vmatprep.subr.mxu0 0.0
        %1527 = vmatpush1.xpose.msra.mxu0 0.0
        %1528 = vmatprep.subr.mxu0 0.0
        %1529 = vmatpush1.xpose.msra.mxu0 0.0
        %1530 = vmatprep.subr.mxu0 0.0
        %1531 = vmatpush1.xpose.msra.mxu0 0.0
        %1532 = vmatprep.subr.mxu0 0.0
        %1533 = vmatpush1.xpose.msra.mxu0 0.0
        %1534 = vmatprep.subr.mxu0 0.0
        %1535 = vmatpush1.xpose.msra.mxu0 0.0
        %1536 = vmatprep.subr.mxu0 0.0
        %1537 = vmatpush1.xpose.msra.mxu0 0.0
        %1538 = vmatprep.subr.mxu0 0.0
        %1539 = vmatpush1.xpose.msra.mxu0 0.0
        %1540 = vmatprep.subr.mxu0 0.0
        %1541 = vmatpush1.xpose.msra.mxu0 0.0
        %1542 = vmatprep.subr.mxu0 0.0
        %1543 = vmatpush1.xpose.msra.mxu0 %v1510
        %1544 = vmatprep.subr.mxu0 0.0
        %1545 = vmatpush2.xpose.msra.mxu0 0.0
        %1546 = vmatprep.subr.mxu0 0.0
        %1547 = vmatpush2.xpose.msra.mxu0 0.0
        %1548 = vmatprep.subr.mxu0 0.0
        %1549 = vmatpush2.xpose.msra.mxu0 0.0
        %1550 = vmatprep.subr.mxu0 0.0
        %1551 = vmatpush2.xpose.msra.mxu0 0.0
        %1552 = vmatprep.subr.mxu0 0.0
        %1553 = vmatpush2.xpose.msra.mxu0 0.0
        %1554 = vmatprep.subr.mxu0 0.0
        %1555 = vmatpush2.xpose.msra.mxu0 0.0
        %1556 = vmatprep.subr.mxu0 0.0
        %1557 = vmatpush2.xpose.msra.mxu0 0.0
        %1558 = vmatprep.subr.mxu0 0.0
        %1559 = vmatpush2.xpose.msra.mxu0 0.0
        %1560 = vmatprep.subr.mxu0 0.0
        %1561 = vmatpush2.xpose.msra.mxu0 0.0
        %1562 = vmatprep.subr.mxu0 0.0
        %1563 = vmatpush2.xpose.msra.mxu0 0.0
        %1564 = vmatprep.subr.mxu0 0.0
        %1565 = vmatpush2.xpose.msra.mxu0 0.0
        %1566 = vmatprep.subr.mxu0 0.0
        %1567 = vmatpush2.xpose.msra.mxu0 0.0
        %1568 = vmatprep.subr.mxu0 0.0
        %1569 = vmatpush2.xpose.msra.mxu0 0.0
        %1570 = vmatprep.subr.mxu0 0.0
        %1571 = vmatpush2.xpose.msra.mxu0 0.0
        %1572 = vmatprep.subr.mxu0 0.0
        %1573 = vmatpush2.xpose.msra.mxu0 0.0
        %1574 = vmatprep.subr.mxu0 0.0
        %1575 = vmatpush2.xpose.msra.mxu0 0.0
        %1576 = vmatprep.mubr.f32.mxu0 0.0
        %1577 = vmatmul.mubr.f32.gmra.mxu0 %v1508
        %v1578 = vpop.f32.mrf.mxu0
        %v1579 = vadd.f32 %v826, %v1578
        %v1580 = vpop.f32.mrf.mxu0
        %1581 = vdwg.mxu0
        %v1582 = vsel %vm904, %v1579, -inf
        %1583 = vmax.xlane.f32.xlu0 %v1582
        %v1584 = vpop.xlane.xlu0 %1583
        %v1585 = vsub.f32 %v1579, %v1584
        %v1586 = vmul.f32 %v1585, 1.442695
        %v1587 = vpow.pop %v1586
        %v1588 = vsel %vm904, %v1587, 0.0
        %1589 = vadd.xlane.f32.xlu0 %v1588
        %v1590 = vpop.xlane.xlu0 %1589
        %v1591 = vrcp.pop %v1590
        %v1592 = vmul.f32 %v1587, %v1591
        %1593 = vrot.lane.b32.xlu0 %v821, 120
        %v1594 = vpop.permute.xlu0 %1593
        %v1597 = vsel %vm904, %v1592, 0
        %1599 = vmatprep.subr.mxu0 0.0
        %1600 = vmatpush1.msra.mxu0 0.0
        %1601 = vmatprep.subr.mxu0 0.0
        %1602 = vmatpush1.msra.mxu0 0.0
        %1603 = vmatprep.subr.mxu0 0.0
        %1604 = vmatpush1.msra.mxu0 0.0
        %1605 = vmatprep.subr.mxu0 0.0
        %1606 = vmatpush1.msra.mxu0 0.0
        %1607 = vmatprep.subr.mxu0 0.0
        %1608 = vmatpush1.msra.mxu0 0.0
        %1609 = vmatprep.subr.mxu0 0.0
        %1610 = vmatpush1.msra.mxu0 0.0
        %1611 = vmatprep.subr.mxu0 0.0
        %1612 = vmatpush1.msra.mxu0 0.0
        %1613 = vmatprep.subr.mxu0 0.0
        %1614 = vmatpush1.msra.mxu0 0.0
        %1615 = vmatprep.subr.mxu0 0.0
        %1616 = vmatpush1.msra.mxu0 0.0
        %1617 = vmatprep.subr.mxu0 0.0
        %1618 = vmatpush1.msra.mxu0 0.0
        %1619 = vmatprep.subr.mxu0 0.0
        %1620 = vmatpush1.msra.mxu0 0.0
        %1621 = vmatprep.subr.mxu0 0.0
        %1622 = vmatpush1.msra.mxu0 0.0
        %1623 = vmatprep.subr.mxu0 0.0
        %1624 = vmatpush1.msra.mxu0 0.0
        %1625 = vmatprep.subr.mxu0 0.0
        %1626 = vmatpush1.msra.mxu0 0.0
        %1627 = vmatprep.subr.mxu0 0.0
        %1628 = vmatpush1.msra.mxu0 0.0
        %1629 = vmatprep.subr.mxu0 0.0
        %1630 = vmatpush1.msra.mxu0 %v1594
        %1631 = vmatprep.subr.mxu0 0.0
        %1632 = vmatpush2.msra.mxu0 0.0
        %1633 = vmatprep.subr.mxu0 0.0
        %1634 = vmatpush2.msra.mxu0 0.0
        %1635 = vmatprep.subr.mxu0 0.0
        %1636 = vmatpush2.msra.mxu0 0.0
        %1637 = vmatprep.subr.mxu0 0.0
        %1638 = vmatpush2.msra.mxu0 0.0
        %1639 = vmatprep.subr.mxu0 0.0
        %1640 = vmatpush2.msra.mxu0 0.0
        %1641 = vmatprep.subr.mxu0 0.0
        %1642 = vmatpush2.msra.mxu0 0.0
        %1643 = vmatprep.subr.mxu0 0.0
        %1644 = vmatpush2.msra.mxu0 0.0
        %1645 = vmatprep.subr.mxu0 0.0
        %1646 = vmatpush2.msra.mxu0 0.0
        %1647 = vmatprep.subr.mxu0 0.0
        %1648 = vmatpush2.msra.mxu0 0.0
        %1649 = vmatprep.subr.mxu0 0.0
        %1650 = vmatpush2.msra.mxu0 0.0
        %1651 = vmatprep.subr.mxu0 0.0
        %1652 = vmatpush2.msra.mxu0 0.0
        %1653 = vmatprep.subr.mxu0 0.0
        %1654 = vmatpush2.msra.mxu0 0.0
        %1655 = vmatprep.subr.mxu0 0.0
        %1656 = vmatpush2.msra.mxu0 0.0
        %1657 = vmatprep.subr.mxu0 0.0
        %1658 = vmatpush2.msra.mxu0 0.0
        %1659 = vmatprep.subr.mxu0 0.0
        %1660 = vmatpush2.msra.mxu0 0.0
        %1661 = vmatprep.subr.mxu0 0.0
        %1662 = vmatpush2.msra.mxu0 0.0
        %1663 = vmatprep.mubr.f32.mxu0 0.0
        %1664 = vmatmul.mubr.f32.gmra.mxu0 %v1597
        %v1665 = vpop.f32.mrf.mxu0
        %v1666 = vadd.f32 0.0, %v1665
        %v1667 = vpop.f32.mrf.mxu0
        %1668 = vdwg.mxu0
        %1670 = vrot.lane.b32.xlu0 %v1666, 8
        %v1671 = vpop.permute.xlu0 %1670
        %vm1673 = vcmask 80960
        %1674 = vst.msk [vmem:[#allocation2] sm:$0xff] %vm1673, %v1671
        %1675 = vrot.lane.b32.xlu0 %v702, 118
        %v1676 = vpop.permute.xlu0 %1675
        %1677 = vrot.lane.b32.xlu0 %v758, 118
        %v1678 = vpop.permute.xlu0 %1677
        %v1679 = vsel %vm827, %v1676, 0
        %v1681 = vsel %vm827, %v1678, 0
        %1683 = vmatprep.subr.mxu0 0.0
        %1684 = vmatpush1.xpose.msra.mxu0 0.0
        %1685 = vmatprep.subr.mxu0 0.0
        %1686 = vmatpush1.xpose.msra.mxu0 0.0
        %1687 = vmatprep.subr.mxu0 0.0
        %1688 = vmatpush1.xpose.msra.mxu0 0.0
        %1689 = vmatprep.subr.mxu0 0.0
        %1690 = vmatpush1.xpose.msra.mxu0 0.0
        %1691 = vmatprep.subr.mxu0 0.0
        %1692 = vmatpush1.xpose.msra.mxu0 0.0
        %1693 = vmatprep.subr.mxu0 0.0
        %1694 = vmatpush1.xpose.msra.mxu0 0.0
        %1695 = vmatprep.subr.mxu0 0.0
        %1696 = vmatpush1.xpose.msra.mxu0 0.0
        %1697 = vmatprep.subr.mxu0 0.0
        %1698 = vmatpush1.xpose.msra.mxu0 0.0
        %1699 = vmatprep.subr.mxu0 0.0
        %1700 = vmatpush1.xpose.msra.mxu0 0.0
        %1701 = vmatprep.subr.mxu0 0.0
        %1702 = vmatpush1.xpose.msra.mxu0 0.0
        %1703 = vmatprep.subr.mxu0 0.0
        %1704 = vmatpush1.xpose.msra.mxu0 0.0
        %1705 = vmatprep.subr.mxu0 0.0
        %1706 = vmatpush1.xpose.msra.mxu0 0.0
        %1707 = vmatprep.subr.mxu0 0.0
        %1708 = vmatpush1.xpose.msra.mxu0 0.0
        %1709 = vmatprep.subr.mxu0 0.0
        %1710 = vmatpush1.xpose.msra.mxu0 0.0
        %1711 = vmatprep.subr.mxu0 0.0
        %1712 = vmatpush1.xpose.msra.mxu0 0.0
        %1713 = vmatprep.subr.mxu0 0.0
        %1714 = vmatpush1.xpose.msra.mxu0 %v1681
        %1715 = vmatprep.subr.mxu0 0.0
        %1716 = vmatpush2.xpose.msra.mxu0 0.0
        %1717 = vmatprep.subr.mxu0 0.0
        %1718 = vmatpush2.xpose.msra.mxu0 0.0
        %1719 = vmatprep.subr.mxu0 0.0
        %1720 = vmatpush2.xpose.msra.mxu0 0.0
        %1721 = vmatprep.subr.mxu0 0.0
        %1722 = vmatpush2.xpose.msra.mxu0 0.0
        %1723 = vmatprep.subr.mxu0 0.0
        %1724 = vmatpush2.xpose.msra.mxu0 0.0
        %1725 = vmatprep.subr.mxu0 0.0
        %1726 = vmatpush2.xpose.msra.mxu0 0.0
        %1727 = vmatprep.subr.mxu0 0.0
        %1728 = vmatpush2.xpose.msra.mxu0 0.0
        %1729 = vmatprep.subr.mxu0 0.0
        %1730 = vmatpush2.xpose.msra.mxu0 0.0
        %1731 = vmatprep.subr.mxu0 0.0
        %1732 = vmatpush2.xpose.msra.mxu0 0.0
        %1733 = vmatprep.subr.mxu0 0.0
        %1734 = vmatpush2.xpose.msra.mxu0 0.0
        %1735 = vmatprep.subr.mxu0 0.0
        %1736 = vmatpush2.xpose.msra.mxu0 0.0
        %1737 = vmatprep.subr.mxu0 0.0
        %1738 = vmatpush2.xpose.msra.mxu0 0.0
        %1739 = vmatprep.subr.mxu0 0.0
        %1740 = vmatpush2.xpose.msra.mxu0 0.0
        %1741 = vmatprep.subr.mxu0 0.0
        %1742 = vmatpush2.xpose.msra.mxu0 0.0
        %1743 = vmatprep.subr.mxu0 0.0
        %1744 = vmatpush2.xpose.msra.mxu0 0.0
        %1745 = vmatprep.subr.mxu0 0.0
        %1746 = vmatpush2.xpose.msra.mxu0 0.0
        %1747 = vmatprep.mubr.f32.mxu0 0.0
        %1748 = vmatmul.mubr.f32.gmra.mxu0 %v1679
        %v1749 = vpop.f32.mrf.mxu0
        %v1750 = vadd.f32 %v826, %v1749
        %v1751 = vpop.f32.mrf.mxu0
        %1752 = vdwg.mxu0
        %v1753 = vsel %vm904, %v1750, -inf
        %1754 = vmax.xlane.f32.xlu0 %v1753
        %v1755 = vpop.xlane.xlu0 %1754
        %v1756 = vsub.f32 %v1750, %v1755
        %v1757 = vmul.f32 %v1756, 1.442695
        %v1758 = vpow.pop %v1757
        %v1759 = vsel %vm904, %v1758, 0.0
        %1760 = vadd.xlane.f32.xlu0 %v1759
        %v1761 = vpop.xlane.xlu0 %1760
        %v1762 = vrcp.pop %v1761
        %v1763 = vmul.f32 %v1758, %v1762
        %1764 = vrot.lane.b32.xlu0 %v821, 118
        %v1765 = vpop.permute.xlu0 %1764
        %v1768 = vsel %vm904, %v1763, 0
        %1770 = vmatprep.subr.mxu0 0.0
        %1771 = vmatpush1.msra.mxu0 0.0
        %1772 = vmatprep.subr.mxu0 0.0
        %1773 = vmatpush1.msra.mxu0 0.0
        %1774 = vmatprep.subr.mxu0 0.0
        %1775 = vmatpush1.msra.mxu0 0.0
        %1776 = vmatprep.subr.mxu0 0.0
        %1777 = vmatpush1.msra.mxu0 0.0
        %1778 = vmatprep.subr.mxu0 0.0
        %1779 = vmatpush1.msra.mxu0 0.0
        %1780 = vmatprep.subr.mxu0 0.0
        %1781 = vmatpush1.msra.mxu0 0.0
        %1782 = vmatprep.subr.mxu0 0.0
        %1783 = vmatpush1.msra.mxu0 0.0
        %1784 = vmatprep.subr.mxu0 0.0
        %1785 = vmatpush1.msra.mxu0 0.0
        %1786 = vmatprep.subr.mxu0 0.0
        %1787 = vmatpush1.msra.mxu0 0.0
        %1788 = vmatprep.subr.mxu0 0.0
        %1789 = vmatpush1.msra.mxu0 0.0
        %1790 = vmatprep.subr.mxu0 0.0
        %1791 = vmatpush1.msra.mxu0 0.0
        %1792 = vmatprep.subr.mxu0 0.0
        %1793 = vmatpush1.msra.mxu0 0.0
        %1794 = vmatprep.subr.mxu0 0.0
        %1795 = vmatpush1.msra.mxu0 0.0
        %1796 = vmatprep.subr.mxu0 0.0
        %1797 = vmatpush1.msra.mxu0 0.0
        %1798 = vmatprep.subr.mxu0 0.0
        %1799 = vmatpush1.msra.mxu0 0.0
        %1800 = vmatprep.subr.mxu0 0.0
        %1801 = vmatpush1.msra.mxu0 %v1765
        %1802 = vmatprep.subr.mxu0 0.0
        %1803 = vmatpush2.msra.mxu0 0.0
        %1804 = vmatprep.subr.mxu0 0.0
        %1805 = vmatpush2.msra.mxu0 0.0
        %1806 = vmatprep.subr.mxu0 0.0
        %1807 = vmatpush2.msra.mxu0 0.0
        %1808 = vmatprep.subr.mxu0 0.0
        %1809 = vmatpush2.msra.mxu0 0.0
        %1810 = vmatprep.subr.mxu0 0.0
        %1811 = vmatpush2.msra.mxu0 0.0
        %1812 = vmatprep.subr.mxu0 0.0
        %1813 = vmatpush2.msra.mxu0 0.0
        %1814 = vmatprep.subr.mxu0 0.0
        %1815 = vmatpush2.msra.mxu0 0.0
        %1816 = vmatprep.subr.mxu0 0.0
        %1817 = vmatpush2.msra.mxu0 0.0
        %1818 = vmatprep.subr.mxu0 0.0
        %1819 = vmatpush2.msra.mxu0 0.0
        %1820 = vmatprep.subr.mxu0 0.0
        %1821 = vmatpush2.msra.mxu0 0.0
        %1822 = vmatprep.subr.mxu0 0.0
        %1823 = vmatpush2.msra.mxu0 0.0
        %1824 = vmatprep.subr.mxu0 0.0
        %1825 = vmatpush2.msra.mxu0 0.0
        %1826 = vmatprep.subr.mxu0 0.0
        %1827 = vmatpush2.msra.mxu0 0.0
        %1828 = vmatprep.subr.mxu0 0.0
        %1829 = vmatpush2.msra.mxu0 0.0
        %1830 = vmatprep.subr.mxu0 0.0
        %1831 = vmatpush2.msra.mxu0 0.0
        %1832 = vmatprep.subr.mxu0 0.0
        %1833 = vmatpush2.msra.mxu0 0.0
        %1834 = vmatprep.mubr.f32.mxu0 0.0
        %1835 = vmatmul.mubr.f32.gmra.mxu0 %v1768
        %v1836 = vpop.f32.mrf.mxu0
        %v1837 = vadd.f32 0.0, %v1836
        %v1838 = vpop.f32.mrf.mxu0
        %1839 = vdwg.mxu0
        %1841 = vrot.lane.b32.xlu0 %v1837, 10
        %v1842 = vpop.permute.xlu0 %1841
        %vm1844 = vcmask 97360
        %1845 = vst.msk [vmem:[#allocation2] sm:$0xff] %vm1844, %v1842
        %1846 = vrot.lane.b32.xlu0 %v702, 116
        %v1847 = vpop.permute.xlu0 %1846
        %1848 = vrot.lane.b32.xlu0 %v758, 116
        %v1849 = vpop.permute.xlu0 %1848
        %v1850 = vsel %vm827, %v1847, 0
        %v1852 = vsel %vm827, %v1849, 0
        %1854 = vmatprep.subr.mxu0 0.0
        %1855 = vmatpush1.xpose.msra.mxu0 0.0
        %1856 = vmatprep.subr.mxu0 0.0
        %1857 = vmatpush1.xpose.msra.mxu0 0.0
        %1858 = vmatprep.subr.mxu0 0.0
        %1859 = vmatpush1.xpose.msra.mxu0 0.0
        %1860 = vmatprep.subr.mxu0 0.0
        %1861 = vmatpush1.xpose.msra.mxu0 0.0
        %1862 = vmatprep.subr.mxu0 0.0
        %1863 = vmatpush1.xpose.msra.mxu0 0.0
        %1864 = vmatprep.subr.mxu0 0.0
        %1865 = vmatpush1.xpose.msra.mxu0 0.0
        %1866 = vmatprep.subr.mxu0 0.0
        %1867 = vmatpush1.xpose.msra.mxu0 0.0
        %1868 = vmatprep.subr.mxu0 0.0
        %1869 = vmatpush1.xpose.msra.mxu0 0.0
        %1870 = vmatprep.subr.mxu0 0.0
        %1871 = vmatpush1.xpose.msra.mxu0 0.0
        %1872 = vmatprep.subr.mxu0 0.0
        %1873 = vmatpush1.xpose.msra.mxu0 0.0
        %1874 = vmatprep.subr.mxu0 0.0
        %1875 = vmatpush1.xpose.msra.mxu0 0.0
        %1876 = vmatprep.subr.mxu0 0.0
        %1877 = vmatpush1.xpose.msra.mxu0 0.0
        %1878 = vmatprep.subr.mxu0 0.0
        %1879 = vmatpush1.xpose.msra.mxu0 0.0
        %1880 = vmatprep.subr.mxu0 0.0
        %1881 = vmatpush1.xpose.msra.mxu0 0.0
        %1882 = vmatprep.subr.mxu0 0.0
        %1883 = vmatpush1.xpose.msra.mxu0 0.0
        %1884 = vmatprep.subr.mxu0 0.0
        %1885 = vmatpush1.xpose.msra.mxu0 %v1852
        %1886 = vmatprep.subr.mxu0 0.0
        %1887 = vmatpush2.xpose.msra.mxu0 0.0
        %1888 = vmatprep.subr.mxu0 0.0
        %1889 = vmatpush2.xpose.msra.mxu0 0.0
        %1890 = vmatprep.subr.mxu0 0.0
        %1891 = vmatpush2.xpose.msra.mxu0 0.0
        %1892 = vmatprep.subr.mxu0 0.0
        %1893 = vmatpush2.xpose.msra.mxu0 0.0
        %1894 = vmatprep.subr.mxu0 0.0
        %1895 = vmatpush2.xpose.msra.mxu0 0.0
        %1896 = vmatprep.subr.mxu0 0.0
        %1897 = vmatpush2.xpose.msra.mxu0 0.0
        %1898 = vmatprep.subr.mxu0 0.0
        %1899 = vmatpush2.xpose.msra.mxu0 0.0
        %1900 = vmatprep.subr.mxu0 0.0
        %1901 = vmatpush2.xpose.msra.mxu0 0.0
        %1902 = vmatprep.subr.mxu0 0.0
        %1903 = vmatpush2.xpose.msra.mxu0 0.0
        %1904 = vmatprep.subr.mxu0 0.0
        %1905 = vmatpush2.xpose.msra.mxu0 0.0
        %1906 = vmatprep.subr.mxu0 0.0
        %1907 = vmatpush2.xpose.msra.mxu0 0.0
        %1908 = vmatprep.subr.mxu0 0.0
        %1909 = vmatpush2.xpose.msra.mxu0 0.0
        %1910 = vmatprep.subr.mxu0 0.0
        %1911 = vmatpush2.xpose.msra.mxu0 0.0
        %1912 = vmatprep.subr.mxu0 0.0
        %1913 = vmatpush2.xpose.msra.mxu0 0.0
        %1914 = vmatprep.subr.mxu0 0.0
        %1915 = vmatpush2.xpose.msra.mxu0 0.0
        %1916 = vmatprep.subr.mxu0 0.0
        %1917 = vmatpush2.xpose.msra.mxu0 0.0
        %1918 = vmatprep.mubr.f32.mxu0 0.0
        %1919 = vmatmul.mubr.f32.gmra.mxu0 %v1850
        %v1920 = vpop.f32.mrf.mxu0
        %v1921 = vadd.f32 %v826, %v1920
        %v1922 = vpop.f32.mrf.mxu0
        %1923 = vdwg.mxu0
        %v1924 = vsel %vm904, %v1921, -inf
        %1925 = vmax.xlane.f32.xlu0 %v1924
        %v1926 = vpop.xlane.xlu0 %1925
        %v1927 = vsub.f32 %v1921, %v1926
        %v1928 = vmul.f32 %v1927, 1.442695
        %v1929 = vpow.pop %v1928
        %v1930 = vsel %vm904, %v1929, 0.0
        %1931 = vadd.xlane.f32.xlu0 %v1930
        %v1932 = vpop.xlane.xlu0 %1931
        %v1933 = vrcp.pop %v1932
        %v1934 = vmul.f32 %v1929, %v1933
        %1935 = vrot.lane.b32.xlu0 %v821, 116
        %v1936 = vpop.permute.xlu0 %1935
        %v1939 = vsel %vm904, %v1934, 0
        %1941 = vmatprep.subr.mxu0 0.0
        %1942 = vmatpush1.msra.mxu0 0.0
        %1943 = vmatprep.subr.mxu0 0.0
        %1944 = vmatpush1.msra.mxu0 0.0
        %1945 = vmatprep.subr.mxu0 0.0
        %1946 = vmatpush1.msra.mxu0 0.0
        %1947 = vmatprep.subr.mxu0 0.0
        %1948 = vmatpush1.msra.mxu0 0.0
        %1949 = vmatprep.subr.mxu0 0.0
        %1950 = vmatpush1.msra.mxu0 0.0
        %1951 = vmatprep.subr.mxu0 0.0
        %1952 = vmatpush1.msra.mxu0 0.0
        %1953 = vmatprep.subr.mxu0 0.0
        %1954 = vmatpush1.msra.mxu0 0.0
        %1955 = vmatprep.subr.mxu0 0.0
        %1956 = vmatpush1.msra.mxu0 0.0
        %1957 = vmatprep.subr.mxu0 0.0
        %1958 = vmatpush1.msra.mxu0 0.0
        %1959 = vmatprep.subr.mxu0 0.0
        %1960 = vmatpush1.msra.mxu0 0.0
        %1961 = vmatprep.subr.mxu0 0.0
        %1962 = vmatpush1.msra.mxu0 0.0
        %1963 = vmatprep.subr.mxu0 0.0
        %1964 = vmatpush1.msra.mxu0 0.0
        %1965 = vmatprep.subr.mxu0 0.0
        %1966 = vmatpush1.msra.mxu0 0.0
        %1967 = vmatprep.subr.mxu0 0.0
        %1968 = vmatpush1.msra.mxu0 0.0
        %1969 = vmatprep.subr.mxu0 0.0
        %1970 = vmatpush1.msra.mxu0 0.0
        %1971 = vmatprep.subr.mxu0 0.0
        %1972 = vmatpush1.msra.mxu0 %v1936
        %1973 = vmatprep.subr.mxu0 0.0
        %1974 = vmatpush2.msra.mxu0 0.0
        %1975 = vmatprep.subr.mxu0 0.0
        %1976 = vmatpush2.msra.mxu0 0.0
        %1977 = vmatprep.subr.mxu0 0.0
        %1978 = vmatpush2.msra.mxu0 0.0
        %1979 = vmatprep.subr.mxu0 0.0
        %1980 = vmatpush2.msra.mxu0 0.0
        %1981 = vmatprep.subr.mxu0 0.0
        %1982 = vmatpush2.msra.mxu0 0.0
        %1983 = vmatprep.subr.mxu0 0.0
        %1984 = vmatpush2.msra.mxu0 0.0
        %1985 = vmatprep.subr.mxu0 0.0
        %1986 = vmatpush2.msra.mxu0 0.0
        %1987 = vmatprep.subr.mxu0 0.0
        %1988 = vmatpush2.msra.mxu0 0.0
        %1989 = vmatprep.subr.mxu0 0.0
        %1990 = vmatpush2.msra.mxu0 0.0
        %1991 = vmatprep.subr.mxu0 0.0
        %1992 = vmatpush2.msra.mxu0 0.0
        %1993 = vmatprep.subr.mxu0 0.0
        %1994 = vmatpush2.msra.mxu0 0.0
        %1995 = vmatprep.subr.mxu0 0.0
        %1996 = vmatpush2.msra.mxu0 0.0
        %1997 = vmatprep.subr.mxu0 0.0
        %1998 = vmatpush2.msra.mxu0 0.0
        %1999 = vmatprep.subr.mxu0 0.0
        %2000 = vmatpush2.msra.mxu0 0.0
        %2001 = vmatprep.subr.mxu0 0.0
        %2002 = vmatpush2.msra.mxu0 0.0
        %2003 = vmatprep.subr.mxu0 0.0
        %2004 = vmatpush2.msra.mxu0 0.0
        %2005 = vmatprep.mubr.f32.mxu0 0.0
        %2006 = vmatmul.mubr.f32.gmra.mxu0 %v1939
        %v2007 = vpop.f32.mrf.mxu0
        %v2008 = vadd.f32 0.0, %v2007
        %v2009 = vpop.f32.mrf.mxu0
        %2010 = vdwg.mxu0
        %2012 = vrot.lane.b32.xlu0 %v2008, 12
        %v2013 = vpop.permute.xlu0 %2012
        %vm2015 = vcmask 113760
        %2016 = vst.msk [vmem:[#allocation2] sm:$0xff] %vm2015, %v2013
        %2017 = vrot.lane.b32.xlu0 %v702, 114
        %v2018 = vpop.permute.xlu0 %2017
        %2019 = vrot.lane.b32.xlu0 %v758, 114
        %v2020 = vpop.permute.xlu0 %2019
        %v2021 = vsel %vm827, %v2018, 0
        %v2023 = vsel %vm827, %v2020, 0
        %2025 = vmatprep.subr.mxu0 0.0
        %2026 = vmatpush1.xpose.msra.mxu0 0.0
        %2027 = vmatprep.subr.mxu0 0.0
        %2028 = vmatpush1.xpose.msra.mxu0 0.0
        %2029 = vmatprep.subr.mxu0 0.0
        %2030 = vmatpush1.xpose.msra.mxu0 0.0
        %2031 = vmatprep.subr.mxu0 0.0
        %2032 = vmatpush1.xpose.msra.mxu0 0.0
        %2033 = vmatprep.subr.mxu0 0.0
        %2034 = vmatpush1.xpose.msra.mxu0 0.0
        %2035 = vmatprep.subr.mxu0 0.0
        %2036 = vmatpush1.xpose.msra.mxu0 0.0
        %2037 = vmatprep.subr.mxu0 0.0
        %2038 = vmatpush1.xpose.msra.mxu0 0.0
        %2039 = vmatprep.subr.mxu0 0.0
        %2040 = vmatpush1.xpose.msra.mxu0 0.0
        %2041 = vmatprep.subr.mxu0 0.0
        %2042 = vmatpush1.xpose.msra.mxu0 0.0
        %2043 = vmatprep.subr.mxu0 0.0
        %2044 = vmatpush1.xpose.msra.mxu0 0.0
        %2045 = vmatprep.subr.mxu0 0.0
        %2046 = vmatpush1.xpose.msra.mxu0 0.0
        %2047 = vmatprep.subr.mxu0 0.0
        %2048 = vmatpush1.xpose.msra.mxu0 0.0
        %2049 = vmatprep.subr.mxu0 0.0
        %2050 = vmatpush1.xpose.msra.mxu0 0.0
        %2051 = vmatprep.subr.mxu0 0.0
        %2052 = vmatpush1.xpose.msra.mxu0 0.0
        %2053 = vmatprep.subr.mxu0 0.0
        %2054 = vmatpush1.xpose.msra.mxu0 0.0
        %2055 = vmatprep.subr.mxu0 0.0
        %2056 = vmatpush1.xpose.msra.mxu0 %v2023
        %2057 = vmatprep.subr.mxu0 0.0
        %2058 = vmatpush2.xpose.msra.mxu0 0.0
        %2059 = vmatprep.subr.mxu0 0.0
        %2060 = vmatpush2.xpose.msra.mxu0 0.0
        %2061 = vmatprep.subr.mxu0 0.0
        %2062 = vmatpush2.xpose.msra.mxu0 0.0
        %2063 = vmatprep.subr.mxu0 0.0
        %2064 = vmatpush2.xpose.msra.mxu0 0.0
        %2065 = vmatprep.subr.mxu0 0.0
        %2066 = vmatpush2.xpose.msra.mxu0 0.0
        %2067 = vmatprep.subr.mxu0 0.0
        %2068 = vmatpush2.xpose.msra.mxu0 0.0
        %2069 = vmatprep.subr.mxu0 0.0
        %2070 = vmatpush2.xpose.msra.mxu0 0.0
        %2071 = vmatprep.subr.mxu0 0.0
        %2072 = vmatpush2.xpose.msra.mxu0 0.0
        %2073 = vmatprep.subr.mxu0 0.0
        %2074 = vmatpush2.xpose.msra.mxu0 0.0
        %2075 = vmatprep.subr.mxu0 0.0
        %2076 = vmatpush2.xpose.msra.mxu0 0.0
        %2077 = vmatprep.subr.mxu0 0.0
        %2078 = vmatpush2.xpose.msra.mxu0 0.0
        %2079 = vmatprep.subr.mxu0 0.0
        %2080 = vmatpush2.xpose.msra.mxu0 0.0
        %2081 = vmatprep.subr.mxu0 0.0
        %2082 = vmatpush2.xpose.msra.mxu0 0.0
        %2083 = vmatprep.subr.mxu0 0.0
        %2084 = vmatpush2.xpose.msra.mxu0 0.0
        %2085 = vmatprep.subr.mxu0 0.0
        %2086 = vmatpush2.xpose.msra.mxu0 0.0
        %2087 = vmatprep.subr.mxu0 0.0
        %2088 = vmatpush2.xpose.msra.mxu0 0.0
        %2089 = vmatprep.mubr.f32.mxu0 0.0
        %2090 = vmatmul.mubr.f32.gmra.mxu0 %v2021
        %v2091 = vpop.f32.mrf.mxu0
        %v2092 = vadd.f32 %v826, %v2091
        %v2093 = vpop.f32.mrf.mxu0
        %2094 = vdwg.mxu0
        %v2095 = vsel %vm904, %v2092, -inf
        %2096 = vmax.xlane.f32.xlu0 %v2095
        %v2097 = vpop.xlane.xlu0 %2096
        %v2098 = vsub.f32 %v2092, %v2097
        %v2099 = vmul.f32 %v2098, 1.442695
        %v2100 = vpow.pop %v2099
        %v2101 = vsel %vm904, %v2100, 0.0
        %2102 = vadd.xlane.f32.xlu0 %v2101
        %v2103 = vpop.xlane.xlu0 %2102
        %v2104 = vrcp.pop %v2103
        %v2105 = vmul.f32 %v2100, %v2104
        %2106 = vrot.lane.b32.xlu0 %v821, 114
        %v2107 = vpop.permute.xlu0 %2106
        %v2110 = vsel %vm904, %v2105, 0
        %2112 = vmatprep.subr.mxu0 0.0
        %2113 = vmatpush1.msra.mxu0 0.0
        %2114 = vmatprep.subr.mxu0 0.0
        %2115 = vmatpush1.msra.mxu0 0.0
        %2116 = vmatprep.subr.mxu0 0.0
        %2117 = vmatpush1.msra.mxu0 0.0
        %2118 = vmatprep.subr.mxu0 0.0
        %2119 = vmatpush1.msra.mxu0 0.0
        %2120 = vmatprep.subr.mxu0 0.0
        %2121 = vmatpush1.msra.mxu0 0.0
        %2122 = vmatprep.subr.mxu0 0.0
        %2123 = vmatpush1.msra.mxu0 0.0
        %2124 = vmatprep.subr.mxu0 0.0
        %2125 = vmatpush1.msra.mxu0 0.0
        %2126 = vmatprep.subr.mxu0 0.0
        %2127 = vmatpush1.msra.mxu0 0.0
        %2128 = vmatprep.subr.mxu0 0.0
        %2129 = vmatpush1.msra.mxu0 0.0
        %2130 = vmatprep.subr.mxu0 0.0
        %2131 = vmatpush1.msra.mxu0 0.0
        %2132 = vmatprep.subr.mxu0 0.0
        %2133 = vmatpush1.msra.mxu0 0.0
        %2134 = vmatprep.subr.mxu0 0.0
        %2135 = vmatpush1.msra.mxu0 0.0
        %2136 = vmatprep.subr.mxu0 0.0
        %2137 = vmatpush1.msra.mxu0 0.0
        %2138 = vmatprep.subr.mxu0 0.0
        %2139 = vmatpush1.msra.mxu0 0.0
        %2140 = vmatprep.subr.mxu0 0.0
        %2141 = vmatpush1.msra.mxu0 0.0
        %2142 = vmatprep.subr.mxu0 0.0
        %2143 = vmatpush1.msra.mxu0 %v2107
        %2144 = vmatprep.subr.mxu0 0.0
        %2145 = vmatpush2.msra.mxu0 0.0
        %2146 = vmatprep.subr.mxu0 0.0
        %2147 = vmatpush2.msra.mxu0 0.0
        %2148 = vmatprep.subr.mxu0 0.0
        %2149 = vmatpush2.msra.mxu0 0.0
        %2150 = vmatprep.subr.mxu0 0.0
        %2151 = vmatpush2.msra.mxu0 0.0
        %2152 = vmatprep.subr.mxu0 0.0
        %2153 = vmatpush2.msra.mxu0 0.0
        %2154 = vmatprep.subr.mxu0 0.0
        %2155 = vmatpush2.msra.mxu0 0.0
        %2156 = vmatprep.subr.mxu0 0.0
        %2157 = vmatpush2.msra.mxu0 0.0
        %2158 = vmatprep.subr.mxu0 0.0
        %2159 = vmatpush2.msra.mxu0 0.0
        %2160 = vmatprep.subr.mxu0 0.0
        %2161 = vmatpush2.msra.mxu0 0.0
        %2162 = vmatprep.subr.mxu0 0.0
        %2163 = vmatpush2.msra.mxu0 0.0
        %2164 = vmatprep.subr.mxu0 0.0
        %2165 = vmatpush2.msra.mxu0 0.0
        %2166 = vmatprep.subr.mxu0 0.0
        %2167 = vmatpush2.msra.mxu0 0.0
        %2168 = vmatprep.subr.mxu0 0.0
        %2169 = vmatpush2.msra.mxu0 0.0
        %2170 = vmatprep.subr.mxu0 0.0
        %2171 = vmatpush2.msra.mxu0 0.0
        %2172 = vmatprep.subr.mxu0 0.0
        %2173 = vmatpush2.msra.mxu0 0.0
        %2174 = vmatprep.subr.mxu0 0.0
        %2175 = vmatpush2.msra.mxu0 0.0
        %2176 = vmatprep.mubr.f32.mxu0 0.0
        %2177 = vmatmul.mubr.f32.gmra.mxu0 %v2110
        %v2178 = vpop.f32.mrf.mxu0
        %v2179 = vadd.f32 0.0, %v2178
        %v2180 = vpop.f32.mrf.mxu0
        %2181 = vdwg.mxu0
        %2183 = vrot.lane.b32.xlu0 %v2179, 14
        %v2184 = vpop.permute.xlu0 %2183
        %vm2186 = vcmask 130160
        %2187 = vst.msk [vmem:[#allocation2] sm:$0xff] %vm2186, %v2184
        %2188 = vrot.lane.b32.xlu0 %v702, 112
        %v2189 = vpop.permute.xlu0 %2188
        %2190 = vrot.lane.b32.xlu0 %v758, 112
        %v2191 = vpop.permute.xlu0 %2190
        %v2192 = vsel %vm827, %v2189, 0
        %v2194 = vsel %vm827, %v2191, 0
        %2196 = vmatprep.subr.mxu0 0.0
        %2197 = vmatpush1.xpose.msra.mxu0 0.0
        %2198 = vmatprep.subr.mxu0 0.0
        %2199 = vmatpush1.xpose.msra.mxu0 0.0
        %2200 = vmatprep.subr.mxu0 0.0
        %2201 = vmatpush1.xpose.msra.mxu0 0.0
        %2202 = vmatprep.subr.mxu0 0.0
        %2203 = vmatpush1.xpose.msra.mxu0 0.0
        %2204 = vmatprep.subr.mxu0 0.0
        %2205 = vmatpush1.xpose.msra.mxu0 0.0
        %2206 = vmatprep.subr.mxu0 0.0
        %2207 = vmatpush1.xpose.msra.mxu0 0.0
        %2208 = vmatprep.subr.mxu0 0.0
        %2209 = vmatpush1.xpose.msra.mxu0 0.0
        %2210 = vmatprep.subr.mxu0 0.0
        %2211 = vmatpush1.xpose.msra.mxu0 0.0
        %2212 = vmatprep.subr.mxu0 0.0
        %2213 = vmatpush1.xpose.msra.mxu0 0.0
        %2214 = vmatprep.subr.mxu0 0.0
        %2215 = vmatpush1.xpose.msra.mxu0 0.0
        %2216 = vmatprep.subr.mxu0 0.0
        %2217 = vmatpush1.xpose.msra.mxu0 0.0
        %2218 = vmatprep.subr.mxu0 0.0
        %2219 = vmatpush1.xpose.msra.mxu0 0.0
        %2220 = vmatprep.subr.mxu0 0.0
        %2221 = vmatpush1.xpose.msra.mxu0 0.0
        %2222 = vmatprep.subr.mxu0 0.0
        %2223 = vmatpush1.xpose.msra.mxu0 0.0
        %2224 = vmatprep.subr.mxu0 0.0
        %2225 = vmatpush1.xpose.msra.mxu0 0.0
        %2226 = vmatprep.subr.mxu0 0.0
        %2227 = vmatpush1.xpose.msra.mxu0 %v2194
        %2228 = vmatprep.subr.mxu0 0.0
        %2229 = vmatpush2.xpose.msra.mxu0 0.0
        %2230 = vmatprep.subr.mxu0 0.0
        %2231 = vmatpush2.xpose.msra.mxu0 0.0
        %2232 = vmatprep.subr.mxu0 0.0
        %2233 = vmatpush2.xpose.msra.mxu0 0.0
        %2234 = vmatprep.subr.mxu0 0.0
        %2235 = vmatpush2.xpose.msra.mxu0 0.0
        %2236 = vmatprep.subr.mxu0 0.0
        %2237 = vmatpush2.xpose.msra.mxu0 0.0
        %2238 = vmatprep.subr.mxu0 0.0
        %2239 = vmatpush2.xpose.msra.mxu0 0.0
        %2240 = vmatprep.subr.mxu0 0.0
        %2241 = vmatpush2.xpose.msra.mxu0 0.0
        %2242 = vmatprep.subr.mxu0 0.0
        %2243 = vmatpush2.xpose.msra.mxu0 0.0
        %2244 = vmatprep.subr.mxu0 0.0
        %2245 = vmatpush2.xpose.msra.mxu0 0.0
        %2246 = vmatprep.subr.mxu0 0.0
        %2247 = vmatpush2.xpose.msra.mxu0 0.0
        %2248 = vmatprep.subr.mxu0 0.0
        %2249 = vmatpush2.xpose.msra.mxu0 0.0
        %2250 = vmatprep.subr.mxu0 0.0
        %2251 = vmatpush2.xpose.msra.mxu0 0.0
        %2252 = vmatprep.subr.mxu0 0.0
        %2253 = vmatpush2.xpose.msra.mxu0 0.0
        %2254 = vmatprep.subr.mxu0 0.0
        %2255 = vmatpush2.xpose.msra.mxu0 0.0
        %2256 = vmatprep.subr.mxu0 0.0
        %2257 = vmatpush2.xpose.msra.mxu0 0.0
        %2258 = vmatprep.subr.mxu0 0.0
        %2259 = vmatpush2.xpose.msra.mxu0 0.0
        %2260 = vmatprep.mubr.f32.mxu0 0.0
        %2261 = vmatmul.mubr.f32.gmra.mxu0 %v2192
        %v2262 = vpop.f32.mrf.mxu0
        %v2263 = vadd.f32 %v826, %v2262
        %v2264 = vpop.f32.mrf.mxu0
        %2265 = vdwg.mxu0
        %v2266 = vsel %vm904, %v2263, -inf
        %2267 = vmax.xlane.f32.xlu0 %v2266
        %v2268 = vpop.xlane.xlu0 %2267
        %v2269 = vsub.f32 %v2263, %v2268
        %v2270 = vmul.f32 %v2269, 1.442695
        %v2271 = vpow.pop %v2270
        %v2272 = vsel %vm904, %v2271, 0.0
        %2273 = vadd.xlane.f32.xlu0 %v2272
        %v2274 = vpop.xlane.xlu0 %2273
        %v2275 = vrcp.pop %v2274
        %v2276 = vmul.f32 %v2271, %v2275
        %2277 = vrot.lane.b32.xlu0 %v821, 112
        %v2278 = vpop.permute.xlu0 %2277
        %v2281 = vsel %vm904, %v2276, 0
        %2283 = vmatprep.subr.mxu0 0.0
        %2284 = vmatpush1.msra.mxu0 0.0
        %2285 = vmatprep.subr.mxu0 0.0
        %2286 = vmatpush1.msra.mxu0 0.0
        %2287 = vmatprep.subr.mxu0 0.0
        %2288 = vmatpush1.msra.mxu0 0.0
        %2289 = vmatprep.subr.mxu0 0.0
        %2290 = vmatpush1.msra.mxu0 0.0
        %2291 = vmatprep.subr.mxu0 0.0
        %2292 = vmatpush1.msra.mxu0 0.0
        %2293 = vmatprep.subr.mxu0 0.0
        %2294 = vmatpush1.msra.mxu0 0.0
        %2295 = vmatprep.subr.mxu0 0.0
        %2296 = vmatpush1.msra.mxu0 0.0
        %2297 = vmatprep.subr.mxu0 0.0
        %2298 = vmatpush1.msra.mxu0 0.0
        %2299 = vmatprep.subr.mxu0 0.0
        %2300 = vmatpush1.msra.mxu0 0.0
        %2301 = vmatprep.subr.mxu0 0.0
        %2302 = vmatpush1.msra.mxu0 0.0
        %2303 = vmatprep.subr.mxu0 0.0
        %2304 = vmatpush1.msra.mxu0 0.0
        %2305 = vmatprep.subr.mxu0 0.0
        %2306 = vmatpush1.msra.mxu0 0.0
        %2307 = vmatprep.subr.mxu0 0.0
        %2308 = vmatpush1.msra.mxu0 0.0
        %2309 = vmatprep.subr.mxu0 0.0
        %2310 = vmatpush1.msra.mxu0 0.0
        %2311 = vmatprep.subr.mxu0 0.0
        %2312 = vmatpush1.msra.mxu0 0.0
        %2313 = vmatprep.subr.mxu0 0.0
        %2314 = vmatpush1.msra.mxu0 %v2278
        %2315 = vmatprep.subr.mxu0 0.0
        %2316 = vmatpush2.msra.mxu0 0.0
        %2317 = vmatprep.subr.mxu0 0.0
        %2318 = vmatpush2.msra.mxu0 0.0
        %2319 = vmatprep.subr.mxu0 0.0
        %2320 = vmatpush2.msra.mxu0 0.0
        %2321 = vmatprep.subr.mxu0 0.0
        %2322 = vmatpush2.msra.mxu0 0.0
        %2323 = vmatprep.subr.mxu0 0.0
        %2324 = vmatpush2.msra.mxu0 0.0
        %2325 = vmatprep.subr.mxu0 0.0
        %2326 = vmatpush2.msra.mxu0 0.0
        %2327 = vmatprep.subr.mxu0 0.0
        %2328 = vmatpush2.msra.mxu0 0.0
        %2329 = vmatprep.subr.mxu0 0.0
        %2330 = vmatpush2.msra.mxu0 0.0
        %2331 = vmatprep.subr.mxu0 0.0
        %2332 = vmatpush2.msra.mxu0 0.0
        %2333 = vmatprep.subr.mxu0 0.0
        %2334 = vmatpush2.msra.mxu0 0.0
        %2335 = vmatprep.subr.mxu0 0.0
        %2336 = vmatpush2.msra.mxu0 0.0
        %2337 = vmatprep.subr.mxu0 0.0
        %2338 = vmatpush2.msra.mxu0 0.0
        %2339 = vmatprep.subr.mxu0 0.0
        %2340 = vmatpush2.msra.mxu0 0.0
        %2341 = vmatprep.subr.mxu0 0.0
        %2342 = vmatpush2.msra.mxu0 0.0
        %2343 = vmatprep.subr.mxu0 0.0
        %2344 = vmatpush2.msra.mxu0 0.0
        %2345 = vmatprep.subr.mxu0 0.0
        %2346 = vmatpush2.msra.mxu0 0.0
        %2347 = vmatprep.mubr.f32.mxu0 0.0
        %2348 = vmatmul.mubr.f32.gmra.mxu0 %v2281
        %v2349 = vpop.f32.mrf.mxu0
        %v2350 = vadd.f32 0.0, %v2349
        %v2351 = vpop.f32.mrf.mxu0
        %2352 = vdwg.mxu0
        %2354 = vrot.lane.b32.xlu0 %v2350, 16
        %v2355 = vpop.permute.xlu0 %2354
        %vm2357 = vcmask 146560
        %2358 = vst.msk [vmem:[#allocation2] sm:$0xff] %vm2357, %v2355
        %2359 = vrot.lane.b32.xlu0 %v702, 110
        %v2360 = vpop.permute.xlu0 %2359
        %2361 = vrot.lane.b32.xlu0 %v758, 110
        %v2362 = vpop.permute.xlu0 %2361
        %v2363 = vsel %vm827, %v2360, 0
        %v2365 = vsel %vm827, %v2362, 0
        %2367 = vmatprep.subr.mxu0 0.0
        %2368 = vmatpush1.xpose.msra.mxu0 0.0
        %2369 = vmatprep.subr.mxu0 0.0
        %2370 = vmatpush1.xpose.msra.mxu0 0.0
        %2371 = vmatprep.subr.mxu0 0.0
        %2372 = vmatpush1.xpose.msra.mxu0 0.0
        %2373 = vmatprep.subr.mxu0 0.0
        %2374 = vmatpush1.xpose.msra.mxu0 0.0
        %2375 = vmatprep.subr.mxu0 0.0
        %2376 = vmatpush1.xpose.msra.mxu0 0.0
        %2377 = vmatprep.subr.mxu0 0.0
        %2378 = vmatpush1.xpose.msra.mxu0 0.0
        %2379 = vmatprep.subr.mxu0 0.0
        %2380 = vmatpush1.xpose.msra.mxu0 0.0
        %2381 = vmatprep.subr.mxu0 0.0
        %2382 = vmatpush1.xpose.msra.mxu0 0.0
        %2383 = vmatprep.subr.mxu0 0.0
        %2384 = vmatpush1.xpose.msra.mxu0 0.0
        %2385 = vmatprep.subr.mxu0 0.0
        %2386 = vmatpush1.xpose.msra.mxu0 0.0
        %2387 = vmatprep.subr.mxu0 0.0
        %2388 = vmatpush1.xpose.msra.mxu0 0.0
        %2389 = vmatprep.subr.mxu0 0.0
        %2390 = vmatpush1.xpose.msra.mxu0 0.0
        %2391 = vmatprep.subr.mxu0 0.0
        %2392 = vmatpush1.xpose.msra.mxu0 0.0
        %2393 = vmatprep.subr.mxu0 0.0
        %2394 = vmatpush1.xpose.msra.mxu0 0.0
        %2395 = vmatprep.subr.mxu0 0.0
        %2396 = vmatpush1.xpose.msra.mxu0 0.0
        %2397 = vmatprep.subr.mxu0 0.0
        %2398 = vmatpush1.xpose.msra.mxu0 %v2365
        %2399 = vmatprep.subr.mxu0 0.0
        %2400 = vmatpush2.xpose.msra.mxu0 0.0
        %2401 = vmatprep.subr.mxu0 0.0
        %2402 = vmatpush2.xpose.msra.mxu0 0.0
        %2403 = vmatprep.subr.mxu0 0.0
        %2404 = vmatpush2.xpose.msra.mxu0 0.0
        %2405 = vmatprep.subr.mxu0 0.0
        %2406 = vmatpush2.xpose.msra.mxu0 0.0
        %2407 = vmatprep.subr.mxu0 0.0
        %2408 = vmatpush2.xpose.msra.mxu0 0.0
        %2409 = vmatprep.subr.mxu0 0.0
        %2410 = vmatpush2.xpose.msra.mxu0 0.0
        %2411 = vmatprep.subr.mxu0 0.0
        %2412 = vmatpush2.xpose.msra.mxu0 0.0
        %2413 = vmatprep.subr.mxu0 0.0
        %2414 = vmatpush2.xpose.msra.mxu0 0.0
        %2415 = vmatprep.subr.mxu0 0.0
        %2416 = vmatpush2.xpose.msra.mxu0 0.0
        %2417 = vmatprep.subr.mxu0 0.0
        %2418 = vmatpush2.xpose.msra.mxu0 0.0
        %2419 = vmatprep.subr.mxu0 0.0
        %2420 = vmatpush2.xpose.msra.mxu0 0.0
        %2421 = vmatprep.subr.mxu0 0.0
        %2422 = vmatpush2.xpose.msra.mxu0 0.0
        %2423 = vmatprep.subr.mxu0 0.0
        %2424 = vmatpush2.xpose.msra.mxu0 0.0
        %2425 = vmatprep.subr.mxu0 0.0
        %2426 = vmatpush2.xpose.msra.mxu0 0.0
        %2427 = vmatprep.subr.mxu0 0.0
        %2428 = vmatpush2.xpose.msra.mxu0 0.0
        %2429 = vmatprep.subr.mxu0 0.0
        %2430 = vmatpush2.xpose.msra.mxu0 0.0
        %2431 = vmatprep.mubr.f32.mxu0 0.0
        %2432 = vmatmul.mubr.f32.gmra.mxu0 %v2363
        %v2433 = vpop.f32.mrf.mxu0
        %v2434 = vadd.f32 %v826, %v2433
        %v2435 = vpop.f32.mrf.mxu0
        %2436 = vdwg.mxu0
        %v2437 = vsel %vm904, %v2434, -inf
        %2438 = vmax.xlane.f32.xlu0 %v2437
        %v2439 = vpop.xlane.xlu0 %2438
        %v2440 = vsub.f32 %v2434, %v2439
        %v2441 = vmul.f32 %v2440, 1.442695
        %v2442 = vpow.pop %v2441
        %v2443 = vsel %vm904, %v2442, 0.0
        %2444 = vadd.xlane.f32.xlu0 %v2443
        %v2445 = vpop.xlane.xlu0 %2444
        %v2446 = vrcp.pop %v2445
        %v2447 = vmul.f32 %v2442, %v2446
        %2448 = vrot.lane.b32.xlu0 %v821, 110
        %v2449 = vpop.permute.xlu0 %2448
        %v2452 = vsel %vm904, %v2447, 0
        %2454 = vmatprep.subr.mxu0 0.0
        %2455 = vmatpush1.msra.mxu0 0.0
        %2456 = vmatprep.subr.mxu0 0.0
        %2457 = vmatpush1.msra.mxu0 0.0
        %2458 = vmatprep.subr.mxu0 0.0
        %2459 = vmatpush1.msra.mxu0 0.0
        %2460 = vmatprep.subr.mxu0 0.0
        %2461 = vmatpush1.msra.mxu0 0.0
        %2462 = vmatprep.subr.mxu0 0.0
        %2463 = vmatpush1.msra.mxu0 0.0
        %2464 = vmatprep.subr.mxu0 0.0
        %2465 = vmatpush1.msra.mxu0 0.0
        %2466 = vmatprep.subr.mxu0 0.0
        %2467 = vmatpush1.msra.mxu0 0.0
        %2468 = vmatprep.subr.mxu0 0.0
        %2469 = vmatpush1.msra.mxu0 0.0
        %2470 = vmatprep.subr.mxu0 0.0
        %2471 = vmatpush1.msra.mxu0 0.0
        %2472 = vmatprep.subr.mxu0 0.0
        %2473 = vmatpush1.msra.mxu0 0.0
        %2474 = vmatprep.subr.mxu0 0.0
        %2475 = vmatpush1.msra.mxu0 0.0
        %2476 = vmatprep.subr.mxu0 0.0
        %2477 = vmatpush1.msra.mxu0 0.0
        %2478 = vmatprep.subr.mxu0 0.0
        %2479 = vmatpush1.msra.mxu0 0.0
        %2480 = vmatprep.subr.mxu0 0.0
        %2481 = vmatpush1.msra.mxu0 0.0
        %2482 = vmatprep.subr.mxu0 0.0
        %2483 = vmatpush1.msra.mxu0 0.0
        %2484 = vmatprep.subr.mxu0 0.0
        %2485 = vmatpush1.msra.mxu0 %v2449
        %2486 = vmatprep.subr.mxu0 0.0
        %2487 = vmatpush2.msra.mxu0 0.0
        %2488 = vmatprep.subr.mxu0 0.0
        %2489 = vmatpush2.msra.mxu0 0.0
        %2490 = vmatprep.subr.mxu0 0.0
        %2491 = vmatpush2.msra.mxu0 0.0
        %2492 = vmatprep.subr.mxu0 0.0
        %2493 = vmatpush2.msra.mxu0 0.0
        %2494 = vmatprep.subr.mxu0 0.0
        %2495 = vmatpush2.msra.mxu0 0.0
        %2496 = vmatprep.subr.mxu0 0.0
        %2497 = vmatpush2.msra.mxu0 0.0
        %2498 = vmatprep.subr.mxu0 0.0
        %2499 = vmatpush2.msra.mxu0 0.0
        %2500 = vmatprep.subr.mxu0 0.0
        %2501 = vmatpush2.msra.mxu0 0.0
        %2502 = vmatprep.subr.mxu0 0.0
        %2503 = vmatpush2.msra.mxu0 0.0
        %2504 = vmatprep.subr.mxu0 0.0
        %2505 = vmatpush2.msra.mxu0 0.0
        %2506 = vmatprep.subr.mxu0 0.0
        %2507 = vmatpush2.msra.mxu0 0.0
        %2508 = vmatprep.subr.mxu0 0.0
        %2509 = vmatpush2.msra.mxu0 0.0
        %2510 = vmatprep.subr.mxu0 0.0
        %2511 = vmatpush2.msra.mxu0 0.0
        %2512 = vmatprep.subr.mxu0 0.0
        %2513 = vmatpush2.msra.mxu0 0.0
        %2514 = vmatprep.subr.mxu0 0.0
        %2515 = vmatpush2.msra.mxu0 0.0
        %2516 = vmatprep.subr.mxu0 0.0
        %2517 = vmatpush2.msra.mxu0 0.0
        %2518 = vmatprep.mubr.f32.mxu0 0.0
        %2519 = vmatmul.mubr.f32.gmra.mxu0 %v2452
        %v2520 = vpop.f32.mrf.mxu0
        %v2521 = vadd.f32 0.0, %v2520
        %v2522 = vpop.f32.mrf.mxu0
        %2523 = vdwg.mxu0
        %2525 = vrot.lane.b32.xlu0 %v2521, 18
        %v2526 = vpop.permute.xlu0 %2525
        %vm2528 = vcmask 162960
        %2529 = vst.msk [vmem:[#allocation2] sm:$0xff] %vm2528, %v2526
        %2530 = vrot.lane.b32.xlu0 %v702, 108
        %v2531 = vpop.permute.xlu0 %2530
        %2532 = vrot.lane.b32.xlu0 %v758, 108
        %v2533 = vpop.permute.xlu0 %2532
        %v2534 = vsel %vm827, %v2531, 0
        %v2536 = vsel %vm827, %v2533, 0
        %2538 = vmatprep.subr.mxu0 0.0
        %2539 = vmatpush1.xpose.msra.mxu0 0.0
        %2540 = vmatprep.subr.mxu0 0.0
        %2541 = vmatpush1.xpose.msra.mxu0 0.0
        %2542 = vmatprep.subr.mxu0 0.0
        %2543 = vmatpush1.xpose.msra.mxu0 0.0
        %2544 = vmatprep.subr.mxu0 0.0
        %2545 = vmatpush1.xpose.msra.mxu0 0.0
        %2546 = vmatprep.subr.mxu0 0.0
        %2547 = vmatpush1.xpose.msra.mxu0 0.0
        %2548 = vmatprep.subr.mxu0 0.0
        %2549 = vmatpush1.xpose.msra.mxu0 0.0
        %2550 = vmatprep.subr.mxu0 0.0
        %2551 = vmatpush1.xpose.msra.mxu0 0.0
        %2552 = vmatprep.subr.mxu0 0.0
        %2553 = vmatpush1.xpose.msra.mxu0 0.0
        %2554 = vmatprep.subr.mxu0 0.0
        %2555 = vmatpush1.xpose.msra.mxu0 0.0
        %2556 = vmatprep.subr.mxu0 0.0
        %2557 = vmatpush1.xpose.msra.mxu0 0.0
        %2558 = vmatprep.subr.mxu0 0.0
        %2559 = vmatpush1.xpose.msra.mxu0 0.0
        %2560 = vmatprep.subr.mxu0 0.0
        %2561 = vmatpush1.xpose.msra.mxu0 0.0
        %2562 = vmatprep.subr.mxu0 0.0
        %2563 = vmatpush1.xpose.msra.mxu0 0.0
        %2564 = vmatprep.subr.mxu0 0.0
        %2565 = vmatpush1.xpose.msra.mxu0 0.0
        %2566 = vmatprep.subr.mxu0 0.0
        %2567 = vmatpush1.xpose.msra.mxu0 0.0
        %2568 = vmatprep.subr.mxu0 0.0
        %2569 = vmatpush1.xpose.msra.mxu0 %v2536
        %2570 = vmatprep.subr.mxu0 0.0
        %2571 = vmatpush2.xpose.msra.mxu0 0.0
        %2572 = vmatprep.subr.mxu0 0.0
        %2573 = vmatpush2.xpose.msra.mxu0 0.0
        %2574 = vmatprep.subr.mxu0 0.0
        %2575 = vmatpush2.xpose.msra.mxu0 0.0
        %2576 = vmatprep.subr.mxu0 0.0
        %2577 = vmatpush2.xpose.msra.mxu0 0.0
        %2578 = vmatprep.subr.mxu0 0.0
        %2579 = vmatpush2.xpose.msra.mxu0 0.0
        %2580 = vmatprep.subr.mxu0 0.0
        %2581 = vmatpush2.xpose.msra.mxu0 0.0
        %2582 = vmatprep.subr.mxu0 0.0
        %2583 = vmatpush2.xpose.msra.mxu0 0.0
        %2584 = vmatprep.subr.mxu0 0.0
        %2585 = vmatpush2.xpose.msra.mxu0 0.0
        %2586 = vmatprep.subr.mxu0 0.0
        %2587 = vmatpush2.xpose.msra.mxu0 0.0
        %2588 = vmatprep.subr.mxu0 0.0
        %2589 = vmatpush2.xpose.msra.mxu0 0.0
        %2590 = vmatprep.subr.mxu0 0.0
        %2591 = vmatpush2.xpose.msra.mxu0 0.0
        %2592 = vmatprep.subr.mxu0 0.0
        %2593 = vmatpush2.xpose.msra.mxu0 0.0
        %2594 = vmatprep.subr.mxu0 0.0
        %2595 = vmatpush2.xpose.msra.mxu0 0.0
        %2596 = vmatprep.subr.mxu0 0.0
        %2597 = vmatpush2.xpose.msra.mxu0 0.0
        %2598 = vmatprep.subr.mxu0 0.0
        %2599 = vmatpush2.xpose.msra.mxu0 0.0
        %2600 = vmatprep.subr.mxu0 0.0
        %2601 = vmatpush2.xpose.msra.mxu0 0.0
        %2602 = vmatprep.mubr.f32.mxu0 0.0
        %2603 = vmatmul.mubr.f32.gmra.mxu0 %v2534
        %v2604 = vpop.f32.mrf.mxu0
        %v2605 = vadd.f32 %v826, %v2604
        %v2606 = vpop.f32.mrf.mxu0
        %2607 = vdwg.mxu0
        %v2608 = vsel %vm904, %v2605, -inf
        %2609 = vmax.xlane.f32.xlu0 %v2608
        %v2610 = vpop.xlane.xlu0 %2609
        %v2611 = vsub.f32 %v2605, %v2610
        %v2612 = vmul.f32 %v2611, 1.442695
        %v2613 = vpow.pop %v2612
        %v2614 = vsel %vm904, %v2613, 0.0
        %2615 = vadd.xlane.f32.xlu0 %v2614
        %v2616 = vpop.xlane.xlu0 %2615
        %v2617 = vrcp.pop %v2616
        %v2618 = vmul.f32 %v2613, %v2617
        %2619 = vrot.lane.b32.xlu0 %v821, 108
        %v2620 = vpop.permute.xlu0 %2619
        %v2623 = vsel %vm904, %v2618, 0
        %2625 = vmatprep.subr.mxu0 0.0
        %2626 = vmatpush1.msra.mxu0 0.0
        %2627 = vmatprep.subr.mxu0 0.0
        %2628 = vmatpush1.msra.mxu0 0.0
        %2629 = vmatprep.subr.mxu0 0.0
        %2630 = vmatpush1.msra.mxu0 0.0
        %2631 = vmatprep.subr.mxu0 0.0
        %2632 = vmatpush1.msra.mxu0 0.0
        %2633 = vmatprep.subr.mxu0 0.0
        %2634 = vmatpush1.msra.mxu0 0.0
        %2635 = vmatprep.subr.mxu0 0.0
        %2636 = vmatpush1.msra.mxu0 0.0
        %2637 = vmatprep.subr.mxu0 0.0
        %2638 = vmatpush1.msra.mxu0 0.0
        %2639 = vmatprep.subr.mxu0 0.0
        %2640 = vmatpush1.msra.mxu0 0.0
        %2641 = vmatprep.subr.mxu0 0.0
        %2642 = vmatpush1.msra.mxu0 0.0
        %2643 = vmatprep.subr.mxu0 0.0
        %2644 = vmatpush1.msra.mxu0 0.0
        %2645 = vmatprep.subr.mxu0 0.0
        %2646 = vmatpush1.msra.mxu0 0.0
        %2647 = vmatprep.subr.mxu0 0.0
        %2648 = vmatpush1.msra.mxu0 0.0
        %2649 = vmatprep.subr.mxu0 0.0
        %2650 = vmatpush1.msra.mxu0 0.0
        %2651 = vmatprep.subr.mxu0 0.0
        %2652 = vmatpush1.msra.mxu0 0.0
        %2653 = vmatprep.subr.mxu0 0.0
        %2654 = vmatpush1.msra.mxu0 0.0
        %2655 = vmatprep.subr.mxu0 0.0
        %2656 = vmatpush1.msra.mxu0 %v2620
        %2657 = vmatprep.subr.mxu0 0.0
        %2658 = vmatpush2.msra.mxu0 0.0
        %2659 = vmatprep.subr.mxu0 0.0
        %2660 = vmatpush2.msra.mxu0 0.0
        %2661 = vmatprep.subr.mxu0 0.0
        %2662 = vmatpush2.msra.mxu0 0.0
        %2663 = vmatprep.subr.mxu0 0.0
        %2664 = vmatpush2.msra.mxu0 0.0
        %2665 = vmatprep.subr.mxu0 0.0
        %2666 = vmatpush2.msra.mxu0 0.0
        %2667 = vmatprep.subr.mxu0 0.0
        %2668 = vmatpush2.msra.mxu0 0.0
        %2669 = vmatprep.subr.mxu0 0.0
        %2670 = vmatpush2.msra.mxu0 0.0
        %2671 = vmatprep.subr.mxu0 0.0
        %2672 = vmatpush2.msra.mxu0 0.0
        %2673 = vmatprep.subr.mxu0 0.0
        %2674 = vmatpush2.msra.mxu0 0.0
        %2675 = vmatprep.subr.mxu0 0.0
        %2676 = vmatpush2.msra.mxu0 0.0
        %2677 = vmatprep.subr.mxu0 0.0
        %2678 = vmatpush2.msra.mxu0 0.0
        %2679 = vmatprep.subr.mxu0 0.0
        %2680 = vmatpush2.msra.mxu0 0.0
        %2681 = vmatprep.subr.mxu0 0.0
        %2682 = vmatpush2.msra.mxu0 0.0
        %2683 = vmatprep.subr.mxu0 0.0
        %2684 = vmatpush2.msra.mxu0 0.0
        %2685 = vmatprep.subr.mxu0 0.0
        %2686 = vmatpush2.msra.mxu0 0.0
        %2687 = vmatprep.subr.mxu0 0.0
        %2688 = vmatpush2.msra.mxu0 0.0
        %2689 = vmatprep.mubr.f32.mxu0 0.0
        %2690 = vmatmul.mubr.f32.gmra.mxu0 %v2623
        %v2691 = vpop.f32.mrf.mxu0
        %v2692 = vadd.f32 0.0, %v2691
        %v2693 = vpop.f32.mrf.mxu0
        %2694 = vdwg.mxu0
        %2696 = vrot.lane.b32.xlu0 %v2692, 20
        %v2697 = vpop.permute.xlu0 %2696
        %vm2699 = vcmask 179360
        %2700 = vst.msk [vmem:[#allocation2] sm:$0xff] %vm2699, %v2697
        %2701 = vrot.lane.b32.xlu0 %v702, 106
        %v2702 = vpop.permute.xlu0 %2701
        %2703 = vrot.lane.b32.xlu0 %v758, 106
        %v2704 = vpop.permute.xlu0 %2703
        %v2705 = vsel %vm827, %v2702, 0
        %v2707 = vsel %vm827, %v2704, 0
        %2709 = vmatprep.subr.mxu0 0.0
        %2710 = vmatpush1.xpose.msra.mxu0 0.0
        %2711 = vmatprep.subr.mxu0 0.0
        %2712 = vmatpush1.xpose.msra.mxu0 0.0
        %2713 = vmatprep.subr.mxu0 0.0
        %2714 = vmatpush1.xpose.msra.mxu0 0.0
        %2715 = vmatprep.subr.mxu0 0.0
        %2716 = vmatpush1.xpose.msra.mxu0 0.0
        %2717 = vmatprep.subr.mxu0 0.0
        %2718 = vmatpush1.xpose.msra.mxu0 0.0
        %2719 = vmatprep.subr.mxu0 0.0
        %2720 = vmatpush1.xpose.msra.mxu0 0.0
        %2721 = vmatprep.subr.mxu0 0.0
        %2722 = vmatpush1.xpose.msra.mxu0 0.0
        %2723 = vmatprep.subr.mxu0 0.0
        %2724 = vmatpush1.xpose.msra.mxu0 0.0
        %2725 = vmatprep.subr.mxu0 0.0
        %2726 = vmatpush1.xpose.msra.mxu0 0.0
        %2727 = vmatprep.subr.mxu0 0.0
        %2728 = vmatpush1.xpose.msra.mxu0 0.0
        %2729 = vmatprep.subr.mxu0 0.0
        %2730 = vmatpush1.xpose.msra.mxu0 0.0
        %2731 = vmatprep.subr.mxu0 0.0
        %2732 = vmatpush1.xpose.msra.mxu0 0.0
        %2733 = vmatprep.subr.mxu0 0.0
        %2734 = vmatpush1.xpose.msra.mxu0 0.0
        %2735 = vmatprep.subr.mxu0 0.0
        %2736 = vmatpush1.xpose.msra.mxu0 0.0
        %2737 = vmatprep.subr.mxu0 0.0
        %2738 = vmatpush1.xpose.msra.mxu0 0.0
        %2739 = vmatprep.subr.mxu0 0.0
        %2740 = vmatpush1.xpose.msra.mxu0 %v2707
        %2741 = vmatprep.subr.mxu0 0.0
        %2742 = vmatpush2.xpose.msra.mxu0 0.0
        %2743 = vmatprep.subr.mxu0 0.0
        %2744 = vmatpush2.xpose.msra.mxu0 0.0
        %2745 = vmatprep.subr.mxu0 0.0
        %2746 = vmatpush2.xpose.msra.mxu0 0.0
        %2747 = vmatprep.subr.mxu0 0.0
        %2748 = vmatpush2.xpose.msra.mxu0 0.0
        %2749 = vmatprep.subr.mxu0 0.0
        %2750 = vmatpush2.xpose.msra.mxu0 0.0
        %2751 = vmatprep.subr.mxu0 0.0
        %2752 = vmatpush2.xpose.msra.mxu0 0.0
        %2753 = vmatprep.subr.mxu0 0.0
        %2754 = vmatpush2.xpose.msra.mxu0 0.0
        %2755 = vmatprep.subr.mxu0 0.0
        %2756 = vmatpush2.xpose.msra.mxu0 0.0
        %2757 = vmatprep.subr.mxu0 0.0
        %2758 = vmatpush2.xpose.msra.mxu0 0.0
        %2759 = vmatprep.subr.mxu0 0.0
        %2760 = vmatpush2.xpose.msra.mxu0 0.0
        %2761 = vmatprep.subr.mxu0 0.0
        %2762 = vmatpush2.xpose.msra.mxu0 0.0
        %2763 = vmatprep.subr.mxu0 0.0
        %2764 = vmatpush2.xpose.msra.mxu0 0.0
        %2765 = vmatprep.subr.mxu0 0.0
        %2766 = vmatpush2.xpose.msra.mxu0 0.0
        %2767 = vmatprep.subr.mxu0 0.0
        %2768 = vmatpush2.xpose.msra.mxu0 0.0
        %2769 = vmatprep.subr.mxu0 0.0
        %2770 = vmatpush2.xpose.msra.mxu0 0.0
        %2771 = vmatprep.subr.mxu0 0.0
        %2772 = vmatpush2.xpose.msra.mxu0 0.0
        %2773 = vmatprep.mubr.f32.mxu0 0.0
        %2774 = vmatmul.mubr.f32.gmra.mxu0 %v2705
        %v2775 = vpop.f32.mrf.mxu0
        %v2776 = vadd.f32 %v826, %v2775
        %v2777 = vpop.f32.mrf.mxu0
        %2778 = vdwg.mxu0
        %v2779 = vsel %vm904, %v2776, -inf
        %2780 = vmax.xlane.f32.xlu0 %v2779
        %v2781 = vpop.xlane.xlu0 %2780
        %v2782 = vsub.f32 %v2776, %v2781
        %v2783 = vmul.f32 %v2782, 1.442695
        %v2784 = vpow.pop %v2783
        %v2785 = vsel %vm904, %v2784, 0.0
        %2786 = vadd.xlane.f32.xlu0 %v2785
        %v2787 = vpop.xlane.xlu0 %2786
        %v2788 = vrcp.pop %v2787
        %v2789 = vmul.f32 %v2784, %v2788
        %2790 = vrot.lane.b32.xlu0 %v821, 106
        %v2791 = vpop.permute.xlu0 %2790
        %v2794 = vsel %vm904, %v2789, 0
        %2796 = vmatprep.subr.mxu0 0.0
        %2797 = vmatpush1.msra.mxu0 0.0
        %2798 = vmatprep.subr.mxu0 0.0
        %2799 = vmatpush1.msra.mxu0 0.0
        %2800 = vmatprep.subr.mxu0 0.0
        %2801 = vmatpush1.msra.mxu0 0.0
        %2802 = vmatprep.subr.mxu0 0.0
        %2803 = vmatpush1.msra.mxu0 0.0
        %2804 = vmatprep.subr.mxu0 0.0
        %2805 = vmatpush1.msra.mxu0 0.0
        %2806 = vmatprep.subr.mxu0 0.0
        %2807 = vmatpush1.msra.mxu0 0.0
        %2808 = vmatprep.subr.mxu0 0.0
        %2809 = vmatpush1.msra.mxu0 0.0
        %2810 = vmatprep.subr.mxu0 0.0
        %2811 = vmatpush1.msra.mxu0 0.0
        %2812 = vmatprep.subr.mxu0 0.0
        %2813 = vmatpush1.msra.mxu0 0.0
        %2814 = vmatprep.subr.mxu0 0.0
        %2815 = vmatpush1.msra.mxu0 0.0
        %2816 = vmatprep.subr.mxu0 0.0
        %2817 = vmatpush1.msra.mxu0 0.0
        %2818 = vmatprep.subr.mxu0 0.0
        %2819 = vmatpush1.msra.mxu0 0.0
        %2820 = vmatprep.subr.mxu0 0.0
        %2821 = vmatpush1.msra.mxu0 0.0
        %2822 = vmatprep.subr.mxu0 0.0
        %2823 = vmatpush1.msra.mxu0 0.0
        %2824 = vmatprep.subr.mxu0 0.0
        %2825 = vmatpush1.msra.mxu0 0.0
        %2826 = vmatprep.subr.mxu0 0.0
        %2827 = vmatpush1.msra.mxu0 %v2791
        %2828 = vmatprep.subr.mxu0 0.0
        %2829 = vmatpush2.msra.mxu0 0.0
        %2830 = vmatprep.subr.mxu0 0.0
        %2831 = vmatpush2.msra.mxu0 0.0
        %2832 = vmatprep.subr.mxu0 0.0
        %2833 = vmatpush2.msra.mxu0 0.0
        %2834 = vmatprep.subr.mxu0 0.0
        %2835 = vmatpush2.msra.mxu0 0.0
        %2836 = vmatprep.subr.mxu0 0.0
        %2837 = vmatpush2.msra.mxu0 0.0
        %2838 = vmatprep.subr.mxu0 0.0
        %2839 = vmatpush2.msra.mxu0 0.0
        %2840 = vmatprep.subr.mxu0 0.0
        %2841 = vmatpush2.msra.mxu0 0.0
        %2842 = vmatprep.subr.mxu0 0.0
        %2843 = vmatpush2.msra.mxu0 0.0
        %2844 = vmatprep.subr.mxu0 0.0
        %2845 = vmatpush2.msra.mxu0 0.0
        %2846 = vmatprep.subr.mxu0 0.0
        %2847 = vmatpush2.msra.mxu0 0.0
        %2848 = vmatprep.subr.mxu0 0.0
        %2849 = vmatpush2.msra.mxu0 0.0
        %2850 = vmatprep.subr.mxu0 0.0
        %2851 = vmatpush2.msra.mxu0 0.0
        %2852 = vmatprep.subr.mxu0 0.0
        %2853 = vmatpush2.msra.mxu0 0.0
        %2854 = vmatprep.subr.mxu0 0.0
        %2855 = vmatpush2.msra.mxu0 0.0
        %2856 = vmatprep.subr.mxu0 0.0
        %2857 = vmatpush2.msra.mxu0 0.0
        %2858 = vmatprep.subr.mxu0 0.0
        %2859 = vmatpush2.msra.mxu0 0.0
        %2860 = vmatprep.mubr.f32.mxu0 0.0
        %2861 = vmatmul.mubr.f32.gmra.mxu0 %v2794
        %v2862 = vpop.f32.mrf.mxu0
        %v2863 = vadd.f32 0.0, %v2862
        %v2864 = vpop.f32.mrf.mxu0
        %2865 = vdwg.mxu0
        %2867 = vrot.lane.b32.xlu0 %v2863, 22
        %v2868 = vpop.permute.xlu0 %2867
        %vm2870 = vcmask 195760
        %2871 = vst.msk [vmem:[#allocation2] sm:$0xff] %vm2870, %v2868
        %2872 = vrot.lane.b32.xlu0 %v702, 104
        %v2873 = vpop.permute.xlu0 %2872
        %2874 = vrot.lane.b32.xlu0 %v758, 104
        %v2875 = vpop.permute.xlu0 %2874
        %v2876 = vsel %vm827, %v2873, 0
        %v2878 = vsel %vm827, %v2875, 0
        %2880 = vmatprep.subr.mxu0 0.0
        %2881 = vmatpush1.xpose.msra.mxu0 0.0
        %2882 = vmatprep.subr.mxu0 0.0
        %2883 = vmatpush1.xpose.msra.mxu0 0.0
        %2884 = vmatprep.subr.mxu0 0.0
        %2885 = vmatpush1.xpose.msra.mxu0 0.0
        %2886 = vmatprep.subr.mxu0 0.0
        %2887 = vmatpush1.xpose.msra.mxu0 0.0
        %2888 = vmatprep.subr.mxu0 0.0
        %2889 = vmatpush1.xpose.msra.mxu0 0.0
        %2890 = vmatprep.subr.mxu0 0.0
        %2891 = vmatpush1.xpose.msra.mxu0 0.0
        %2892 = vmatprep.subr.mxu0 0.0
        %2893 = vmatpush1.xpose.msra.mxu0 0.0
        %2894 = vmatprep.subr.mxu0 0.0
        %2895 = vmatpush1.xpose.msra.mxu0 0.0
        %2896 = vmatprep.subr.mxu0 0.0
        %2897 = vmatpush1.xpose.msra.mxu0 0.0
        %2898 = vmatprep.subr.mxu0 0.0
        %2899 = vmatpush1.xpose.msra.mxu0 0.0
        %2900 = vmatprep.subr.mxu0 0.0
        %2901 = vmatpush1.xpose.msra.mxu0 0.0
        %2902 = vmatprep.subr.mxu0 0.0
        %2903 = vmatpush1.xpose.msra.mxu0 0.0
        %2904 = vmatprep.subr.mxu0 0.0
        %2905 = vmatpush1.xpose.msra.mxu0 0.0
        %2906 = vmatprep.subr.mxu0 0.0
        %2907 = vmatpush1.xpose.msra.mxu0 0.0
        %2908 = vmatprep.subr.mxu0 0.0
        %2909 = vmatpush1.xpose.msra.mxu0 0.0
        %2910 = vmatprep.subr.mxu0 0.0
        %2911 = vmatpush1.xpose.msra.mxu0 %v2878
        %2912 = vmatprep.subr.mxu0 0.0
        %2913 = vmatpush2.xpose.msra.mxu0 0.0
        %2914 = vmatprep.subr.mxu0 0.0
        %2915 = vmatpush2.xpose.msra.mxu0 0.0
        %2916 = vmatprep.subr.mxu0 0.0
        %2917 = vmatpush2.xpose.msra.mxu0 0.0
        %2918 = vmatprep.subr.mxu0 0.0
        %2919 = vmatpush2.xpose.msra.mxu0 0.0
        %2920 = vmatprep.subr.mxu0 0.0
        %2921 = vmatpush2.xpose.msra.mxu0 0.0
        %2922 = vmatprep.subr.mxu0 0.0
        %2923 = vmatpush2.xpose.msra.mxu0 0.0
        %2924 = vmatprep.subr.mxu0 0.0
        %2925 = vmatpush2.xpose.msra.mxu0 0.0
        %2926 = vmatprep.subr.mxu0 0.0
        %2927 = vmatpush2.xpose.msra.mxu0 0.0
        %2928 = vmatprep.subr.mxu0 0.0
        %2929 = vmatpush2.xpose.msra.mxu0 0.0
        %2930 = vmatprep.subr.mxu0 0.0
        %2931 = vmatpush2.xpose.msra.mxu0 0.0
        %2932 = vmatprep.subr.mxu0 0.0
        %2933 = vmatpush2.xpose.msra.mxu0 0.0
        %2934 = vmatprep.subr.mxu0 0.0
        %2935 = vmatpush2.xpose.msra.mxu0 0.0
        %2936 = vmatprep.subr.mxu0 0.0
        %2937 = vmatpush2.xpose.msra.mxu0 0.0
        %2938 = vmatprep.subr.mxu0 0.0
        %2939 = vmatpush2.xpose.msra.mxu0 0.0
        %2940 = vmatprep.subr.mxu0 0.0
        %2941 = vmatpush2.xpose.msra.mxu0 0.0
        %2942 = vmatprep.subr.mxu0 0.0
        %2943 = vmatpush2.xpose.msra.mxu0 0.0
        %2944 = vmatprep.mubr.f32.mxu0 0.0
        %2945 = vmatmul.mubr.f32.gmra.mxu0 %v2876
        %v2946 = vpop.f32.mrf.mxu0
        %v2947 = vadd.f32 %v826, %v2946
        %v2948 = vpop.f32.mrf.mxu0
        %2949 = vdwg.mxu0
        %v2950 = vsel %vm904, %v2947, -inf
        %2951 = vmax.xlane.f32.xlu0 %v2950
        %v2952 = vpop.xlane.xlu0 %2951
        %v2953 = vsub.f32 %v2947, %v2952
        %v2954 = vmul.f32 %v2953, 1.442695
        %v2955 = vpow.pop %v2954
        %v2956 = vsel %vm904, %v2955, 0.0
        %2957 = vadd.xlane.f32.xlu0 %v2956
        %v2958 = vpop.xlane.xlu0 %2957
        %v2959 = vrcp.pop %v2958
        %v2960 = vmul.f32 %v2955, %v2959
        %2961 = vrot.lane.b32.xlu0 %v821, 104
        %v2962 = vpop.permute.xlu0 %2961
        %v2965 = vsel %vm904, %v2960, 0
        %2967 = vmatprep.subr.mxu0 0.0
        %2968 = vmatpush1.msra.mxu0 0.0
        %2969 = vmatprep.subr.mxu0 0.0
        %2970 = vmatpush1.msra.mxu0 0.0
        %2971 = vmatprep.subr.mxu0 0.0
        %2972 = vmatpush1.msra.mxu0 0.0
        %2973 = vmatprep.subr.mxu0 0.0
        %2974 = vmatpush1.msra.mxu0 0.0
        %2975 = vmatprep.subr.mxu0 0.0
        %2976 = vmatpush1.msra.mxu0 0.0
        %2977 = vmatprep.subr.mxu0 0.0
        %2978 = vmatpush1.msra.mxu0 0.0
        %2979 = vmatprep.subr.mxu0 0.0
        %2980 = vmatpush1.msra.mxu0 0.0
        %2981 = vmatprep.subr.mxu0 0.0
        %2982 = vmatpush1.msra.mxu0 0.0
        %2983 = vmatprep.subr.mxu0 0.0
        %2984 = vmatpush1.msra.mxu0 0.0
        %2985 = vmatprep.subr.mxu0 0.0
        %2986 = vmatpush1.msra.mxu0 0.0
        %2987 = vmatprep.subr.mxu0 0.0
        %2988 = vmatpush1.msra.mxu0 0.0
        %2989 = vmatprep.subr.mxu0 0.0
        %2990 = vmatpush1.msra.mxu0 0.0
        %2991 = vmatprep.subr.mxu0 0.0
        %2992 = vmatpush1.msra.mxu0 0.0
        %2993 = vmatprep.subr.mxu0 0.0
        %2994 = vmatpush1.msra.mxu0 0.0
        %2995 = vmatprep.subr.mxu0 0.0
        %2996 = vmatpush1.msra.mxu0 0.0
        %2997 = vmatprep.subr.mxu0 0.0
        %2998 = vmatpush1.msra.mxu0 %v2962
        %2999 = vmatprep.subr.mxu0 0.0
        %3000 = vmatpush2.msra.mxu0 0.0
        %3001 = vmatprep.subr.mxu0 0.0
        %3002 = vmatpush2.msra.mxu0 0.0
        %3003 = vmatprep.subr.mxu0 0.0
        %3004 = vmatpush2.msra.mxu0 0.0
        %3005 = vmatprep.subr.mxu0 0.0
        %3006 = vmatpush2.msra.mxu0 0.0
        %3007 = vmatprep.subr.mxu0 0.0
        %3008 = vmatpush2.msra.mxu0 0.0
        %3009 = vmatprep.subr.mxu0 0.0
        %3010 = vmatpush2.msra.mxu0 0.0
        %3011 = vmatprep.subr.mxu0 0.0
        %3012 = vmatpush2.msra.mxu0 0.0
        %3013 = vmatprep.subr.mxu0 0.0
        %3014 = vmatpush2.msra.mxu0 0.0
        %3015 = vmatprep.subr.mxu0 0.0
        %3016 = vmatpush2.msra.mxu0 0.0
        %3017 = vmatprep.subr.mxu0 0.0
        %3018 = vmatpush2.msra.mxu0 0.0
        %3019 = vmatprep.subr.mxu0 0.0
        %3020 = vmatpush2.msra.mxu0 0.0
        %3021 = vmatprep.subr.mxu0 0.0
        %3022 = vmatpush2.msra.mxu0 0.0
        %3023 = vmatprep.subr.mxu0 0.0
        %3024 = vmatpush2.msra.mxu0 0.0
        %3025 = vmatprep.subr.mxu0 0.0
        %3026 = vmatpush2.msra.mxu0 0.0
        %3027 = vmatprep.subr.mxu0 0.0
        %3028 = vmatpush2.msra.mxu0 0.0
        %3029 = vmatprep.subr.mxu0 0.0
        %3030 = vmatpush2.msra.mxu0 0.0
        %3031 = vmatprep.mubr.f32.mxu0 0.0
        %3032 = vmatmul.mubr.f32.gmra.mxu0 %v2965
        %v3033 = vpop.f32.mrf.mxu0
        %v3034 = vadd.f32 0.0, %v3033
        %v3035 = vpop.f32.mrf.mxu0
        %3036 = vdwg.mxu0
        %3038 = vrot.lane.b32.xlu0 %v3034, 24
        %v3039 = vpop.permute.xlu0 %3038
        %vm3041 = vcmask 212160
        %3042 = vst.msk [vmem:[#allocation2] sm:$0xff] %vm3041, %v3039
        %3043 = vrot.lane.b32.xlu0 %v702, 102
        %v3044 = vpop.permute.xlu0 %3043
        %3045 = vrot.lane.b32.xlu0 %v758, 102
        %v3046 = vpop.permute.xlu0 %3045
        %v3047 = vsel %vm827, %v3044, 0
        %v3049 = vsel %vm827, %v3046, 0
        %3051 = vmatprep.subr.mxu0 0.0
        %3052 = vmatpush1.xpose.msra.mxu0 0.0
        %3053 = vmatprep.subr.mxu0 0.0
        %3054 = vmatpush1.xpose.msra.mxu0 0.0
        %3055 = vmatprep.subr.mxu0 0.0
        %3056 = vmatpush1.xpose.msra.mxu0 0.0
        %3057 = vmatprep.subr.mxu0 0.0
        %3058 = vmatpush1.xpose.msra.mxu0 0.0
        %3059 = vmatprep.subr.mxu0 0.0
        %3060 = vmatpush1.xpose.msra.mxu0 0.0
        %3061 = vmatprep.subr.mxu0 0.0
        %3062 = vmatpush1.xpose.msra.mxu0 0.0
        %3063 = vmatprep.subr.mxu0 0.0
        %3064 = vmatpush1.xpose.msra.mxu0 0.0
        %3065 = vmatprep.subr.mxu0 0.0
        %3066 = vmatpush1.xpose.msra.mxu0 0.0
        %3067 = vmatprep.subr.mxu0 0.0
        %3068 = vmatpush1.xpose.msra.mxu0 0.0
        %3069 = vmatprep.subr.mxu0 0.0
        %3070 = vmatpush1.xpose.msra.mxu0 0.0
        %3071 = vmatprep.subr.mxu0 0.0
        %3072 = vmatpush1.xpose.msra.mxu0 0.0
        %3073 = vmatprep.subr.mxu0 0.0
        %3074 = vmatpush1.xpose.msra.mxu0 0.0
        %3075 = vmatprep.subr.mxu0 0.0
        %3076 = vmatpush1.xpose.msra.mxu0 0.0
        %3077 = vmatprep.subr.mxu0 0.0
        %3078 = vmatpush1.xpose.msra.mxu0 0.0
        %3079 = vmatprep.subr.mxu0 0.0
        %3080 = vmatpush1.xpose.msra.mxu0 0.0
        %3081 = vmatprep.subr.mxu0 0.0
        %3082 = vmatpush1.xpose.msra.mxu0 %v3049
        %3083 = vmatprep.subr.mxu0 0.0
        %3084 = vmatpush2.xpose.msra.mxu0 0.0
        %3085 = vmatprep.subr.mxu0 0.0
        %3086 = vmatpush2.xpose.msra.mxu0 0.0
        %3087 = vmatprep.subr.mxu0 0.0
        %3088 = vmatpush2.xpose.msra.mxu0 0.0
        %3089 = vmatprep.subr.mxu0 0.0
        %3090 = vmatpush2.xpose.msra.mxu0 0.0
        %3091 = vmatprep.subr.mxu0 0.0
        %3092 = vmatpush2.xpose.msra.mxu0 0.0
        %3093 = vmatprep.subr.mxu0 0.0
        %3094 = vmatpush2.xpose.msra.mxu0 0.0
        %3095 = vmatprep.subr.mxu0 0.0
        %3096 = vmatpush2.xpose.msra.mxu0 0.0
        %3097 = vmatprep.subr.mxu0 0.0
        %3098 = vmatpush2.xpose.msra.mxu0 0.0
        %3099 = vmatprep.subr.mxu0 0.0
        %3100 = vmatpush2.xpose.msra.mxu0 0.0
        %3101 = vmatprep.subr.mxu0 0.0
        %3102 = vmatpush2.xpose.msra.mxu0 0.0
        %3103 = vmatprep.subr.mxu0 0.0
        %3104 = vmatpush2.xpose.msra.mxu0 0.0
        %3105 = vmatprep.subr.mxu0 0.0
        %3106 = vmatpush2.xpose.msra.mxu0 0.0
        %3107 = vmatprep.subr.mxu0 0.0
        %3108 = vmatpush2.xpose.msra.mxu0 0.0
        %3109 = vmatprep.subr.mxu0 0.0
        %3110 = vmatpush2.xpose.msra.mxu0 0.0
        %3111 = vmatprep.subr.mxu0 0.0
        %3112 = vmatpush2.xpose.msra.mxu0 0.0
        %3113 = vmatprep.subr.mxu0 0.0
        %3114 = vmatpush2.xpose.msra.mxu0 0.0
        %3115 = vmatprep.mubr.f32.mxu0 0.0
        %3116 = vmatmul.mubr.f32.gmra.mxu0 %v3047
        %v3117 = vpop.f32.mrf.mxu0
        %v3118 = vadd.f32 %v826, %v3117
        %v3119 = vpop.f32.mrf.mxu0
        %3120 = vdwg.mxu0
        %v3121 = vsel %vm904, %v3118, -inf
        %3122 = vmax.xlane.f32.xlu0 %v3121
        %v3123 = vpop.xlane.xlu0 %3122
        %v3124 = vsub.f32 %v3118, %v3123
        %v3125 = vmul.f32 %v3124, 1.442695
        %v3126 = vpow.pop %v3125
        %v3127 = vsel %vm904, %v3126, 0.0
        %3128 = vadd.xlane.f32.xlu0 %v3127
        %v3129 = vpop.xlane.xlu0 %3128
        %v3130 = vrcp.pop %v3129
        %v3131 = vmul.f32 %v3126, %v3130
        %3132 = vrot.lane.b32.xlu0 %v821, 102
        %v3133 = vpop.permute.xlu0 %3132
        %v3136 = vsel %vm904, %v3131, 0
        %3138 = vmatprep.subr.mxu0 0.0
        %3139 = vmatpush1.msra.mxu0 0.0
        %3140 = vmatprep.subr.mxu0 0.0
        %3141 = vmatpush1.msra.mxu0 0.0
        %3142 = vmatprep.subr.mxu0 0.0
        %3143 = vmatpush1.msra.mxu0 0.0
        %3144 = vmatprep.subr.mxu0 0.0
        %3145 = vmatpush1.msra.mxu0 0.0
        %3146 = vmatprep.subr.mxu0 0.0
        %3147 = vmatpush1.msra.mxu0 0.0
        %3148 = vmatprep.subr.mxu0 0.0
        %3149 = vmatpush1.msra.mxu0 0.0
        %3150 = vmatprep.subr.mxu0 0.0
        %3151 = vmatpush1.msra.mxu0 0.0
        %3152 = vmatprep.subr.mxu0 0.0
        %3153 = vmatpush1.msra.mxu0 0.0
        %3154 = vmatprep.subr.mxu0 0.0
        %3155 = vmatpush1.msra.mxu0 0.0
        %3156 = vmatprep.subr.mxu0 0.0
        %3157 = vmatpush1.msra.mxu0 0.0
        %3158 = vmatprep.subr.mxu0 0.0
        %3159 = vmatpush1.msra.mxu0 0.0
        %3160 = vmatprep.subr.mxu0 0.0
        %3161 = vmatpush1.msra.mxu0 0.0
        %3162 = vmatprep.subr.mxu0 0.0
        %3163 = vmatpush1.msra.mxu0 0.0
        %3164 = vmatprep.subr.mxu0 0.0
        %3165 = vmatpush1.msra.mxu0 0.0
        %3166 = vmatprep.subr.mxu0 0.0
        %3167 = vmatpush1.msra.mxu0 0.0
        %3168 = vmatprep.subr.mxu0 0.0
        %3169 = vmatpush1.msra.mxu0 %v3133
        %3170 = vmatprep.subr.mxu0 0.0
        %3171 = vmatpush2.msra.mxu0 0.0
        %3172 = vmatprep.subr.mxu0 0.0
        %3173 = vmatpush2.msra.mxu0 0.0
        %3174 = vmatprep.subr.mxu0 0.0
        %3175 = vmatpush2.msra.mxu0 0.0
        %3176 = vmatprep.subr.mxu0 0.0
        %3177 = vmatpush2.msra.mxu0 0.0
        %3178 = vmatprep.subr.mxu0 0.0
        %3179 = vmatpush2.msra.mxu0 0.0
        %3180 = vmatprep.subr.mxu0 0.0
        %3181 = vmatpush2.msra.mxu0 0.0
        %3182 = vmatprep.subr.mxu0 0.0
        %3183 = vmatpush2.msra.mxu0 0.0
        %3184 = vmatprep.subr.mxu0 0.0
        %3185 = vmatpush2.msra.mxu0 0.0
        %3186 = vmatprep.subr.mxu0 0.0
        %3187 = vmatpush2.msra.mxu0 0.0
        %3188 = vmatprep.subr.mxu0 0.0
        %3189 = vmatpush2.msra.mxu0 0.0
        %3190 = vmatprep.subr.mxu0 0.0
        %3191 = vmatpush2.msra.mxu0 0.0
        %3192 = vmatprep.subr.mxu0 0.0
        %3193 = vmatpush2.msra.mxu0 0.0
        %3194 = vmatprep.subr.mxu0 0.0
        %3195 = vmatpush2.msra.mxu0 0.0
        %3196 = vmatprep.subr.mxu0 0.0
        %3197 = vmatpush2.msra.mxu0 0.0
        %3198 = vmatprep.subr.mxu0 0.0
        %3199 = vmatpush2.msra.mxu0 0.0
        %3200 = vmatprep.subr.mxu0 0.0
        %3201 = vmatpush2.msra.mxu0 0.0
        %3202 = vmatprep.mubr.f32.mxu0 0.0
        %3203 = vmatmul.mubr.f32.gmra.mxu0 %v3136
        %v3204 = vpop.f32.mrf.mxu0
        %v3205 = vadd.f32 0.0, %v3204
        %v3206 = vpop.f32.mrf.mxu0
        %3207 = vdwg.mxu0
        %3209 = vrot.lane.b32.xlu0 %v3205, 26
        %v3210 = vpop.permute.xlu0 %3209
        %vm3212 = vcmask 228560
        %3213 = vst.msk [vmem:[#allocation2] sm:$0xff] %vm3212, %v3210
        %3214 = vrot.lane.b32.xlu0 %v702, 100
        %v3215 = vpop.permute.xlu0 %3214
        %3216 = vrot.lane.b32.xlu0 %v758, 100
        %v3217 = vpop.permute.xlu0 %3216
        %v3218 = vsel %vm827, %v3215, 0
        %v3220 = vsel %vm827, %v3217, 0
        %3222 = vmatprep.subr.mxu0 0.0
        %3223 = vmatpush1.xpose.msra.mxu0 0.0
        %3224 = vmatprep.subr.mxu0 0.0
        %3225 = vmatpush1.xpose.msra.mxu0 0.0
        %3226 = vmatprep.subr.mxu0 0.0
        %3227 = vmatpush1.xpose.msra.mxu0 0.0
        %3228 = vmatprep.subr.mxu0 0.0
        %3229 = vmatpush1.xpose.msra.mxu0 0.0
        %3230 = vmatprep.subr.mxu0 0.0
        %3231 = vmatpush1.xpose.msra.mxu0 0.0
        %3232 = vmatprep.subr.mxu0 0.0
        %3233 = vmatpush1.xpose.msra.mxu0 0.0
        %3234 = vmatprep.subr.mxu0 0.0
        %3235 = vmatpush1.xpose.msra.mxu0 0.0
        %3236 = vmatprep.subr.mxu0 0.0
        %3237 = vmatpush1.xpose.msra.mxu0 0.0
        %3238 = vmatprep.subr.mxu0 0.0
        %3239 = vmatpush1.xpose.msra.mxu0 0.0
        %3240 = vmatprep.subr.mxu0 0.0
        %3241 = vmatpush1.xpose.msra.mxu0 0.0
        %3242 = vmatprep.subr.mxu0 0.0
        %3243 = vmatpush1.xpose.msra.mxu0 0.0
        %3244 = vmatprep.subr.mxu0 0.0
        %3245 = vmatpush1.xpose.msra.mxu0 0.0
        %3246 = vmatprep.subr.mxu0 0.0
        %3247 = vmatpush1.xpose.msra.mxu0 0.0
        %3248 = vmatprep.subr.mxu0 0.0
        %3249 = vmatpush1.xpose.msra.mxu0 0.0
        %3250 = vmatprep.subr.mxu0 0.0
        %3251 = vmatpush1.xpose.msra.mxu0 0.0
        %3252 = vmatprep.subr.mxu0 0.0
        %3253 = vmatpush1.xpose.msra.mxu0 %v3220
        %3254 = vmatprep.subr.mxu0 0.0
        %3255 = vmatpush2.xpose.msra.mxu0 0.0
        %3256 = vmatprep.subr.mxu0 0.0
        %3257 = vmatpush2.xpose.msra.mxu0 0.0
        %3258 = vmatprep.subr.mxu0 0.0
        %3259 = vmatpush2.xpose.msra.mxu0 0.0
        %3260 = vmatprep.subr.mxu0 0.0
        %3261 = vmatpush2.xpose.msra.mxu0 0.0
        %3262 = vmatprep.subr.mxu0 0.0
        %3263 = vmatpush2.xpose.msra.mxu0 0.0
        %3264 = vmatprep.subr.mxu0 0.0
        %3265 = vmatpush2.xpose.msra.mxu0 0.0
        %3266 = vmatprep.subr.mxu0 0.0
        %3267 = vmatpush2.xpose.msra.mxu0 0.0
        %3268 = vmatprep.subr.mxu0 0.0
        %3269 = vmatpush2.xpose.msra.mxu0 0.0
        %3270 = vmatprep.subr.mxu0 0.0
        %3271 = vmatpush2.xpose.msra.mxu0 0.0
        %3272 = vmatprep.subr.mxu0 0.0
        %3273 = vmatpush2.xpose.msra.mxu0 0.0
        %3274 = vmatprep.subr.mxu0 0.0
        %3275 = vmatpush2.xpose.msra.mxu0 0.0
        %3276 = vmatprep.subr.mxu0 0.0
        %3277 = vmatpush2.xpose.msra.mxu0 0.0
        %3278 = vmatprep.subr.mxu0 0.0
        %3279 = vmatpush2.xpose.msra.mxu0 0.0
        %3280 = vmatprep.subr.mxu0 0.0
        %3281 = vmatpush2.xpose.msra.mxu0 0.0
        %3282 = vmatprep.subr.mxu0 0.0
        %3283 = vmatpush2.xpose.msra.mxu0 0.0
        %3284 = vmatprep.subr.mxu0 0.0
        %3285 = vmatpush2.xpose.msra.mxu0 0.0
        %3286 = vmatprep.mubr.f32.mxu0 0.0
        %3287 = vmatmul.mubr.f32.gmra.mxu0 %v3218
        %v3288 = vpop.f32.mrf.mxu0
        %v3289 = vadd.f32 %v826, %v3288
        %v3290 = vpop.f32.mrf.mxu0
        %3291 = vdwg.mxu0
        %v3292 = vsel %vm904, %v3289, -inf
        %3293 = vmax.xlane.f32.xlu0 %v3292
        %v3294 = vpop.xlane.xlu0 %3293
        %v3295 = vsub.f32 %v3289, %v3294
        %v3296 = vmul.f32 %v3295, 1.442695
        %v3297 = vpow.pop %v3296
        %v3298 = vsel %vm904, %v3297, 0.0
        %3299 = vadd.xlane.f32.xlu0 %v3298
        %v3300 = vpop.xlane.xlu0 %3299
        %v3301 = vrcp.pop %v3300
        %v3302 = vmul.f32 %v3297, %v3301
        %3303 = vrot.lane.b32.xlu0 %v821, 100
        %v3304 = vpop.permute.xlu0 %3303
        %v3307 = vsel %vm904, %v3302, 0
        %3309 = vmatprep.subr.mxu0 0.0
        %3310 = vmatpush1.msra.mxu0 0.0
        %3311 = vmatprep.subr.mxu0 0.0
        %3312 = vmatpush1.msra.mxu0 0.0
        %3313 = vmatprep.subr.mxu0 0.0
        %3314 = vmatpush1.msra.mxu0 0.0
        %3315 = vmatprep.subr.mxu0 0.0
        %3316 = vmatpush1.msra.mxu0 0.0
        %3317 = vmatprep.subr.mxu0 0.0
        %3318 = vmatpush1.msra.mxu0 0.0
        %3319 = vmatprep.subr.mxu0 0.0
        %3320 = vmatpush1.msra.mxu0 0.0
        %3321 = vmatprep.subr.mxu0 0.0
        %3322 = vmatpush1.msra.mxu0 0.0
        %3323 = vmatprep.subr.mxu0 0.0
        %3324 = vmatpush1.msra.mxu0 0.0
        %3325 = vmatprep.subr.mxu0 0.0
        %3326 = vmatpush1.msra.mxu0 0.0
        %3327 = vmatprep.subr.mxu0 0.0
        %3328 = vmatpush1.msra.mxu0 0.0
        %3329 = vmatprep.subr.mxu0 0.0
        %3330 = vmatpush1.msra.mxu0 0.0
        %3331 = vmatprep.subr.mxu0 0.0
        %3332 = vmatpush1.msra.mxu0 0.0
        %3333 = vmatprep.subr.mxu0 0.0
        %3334 = vmatpush1.msra.mxu0 0.0
        %3335 = vmatprep.subr.mxu0 0.0
        %3336 = vmatpush1.msra.mxu0 0.0
        %3337 = vmatprep.subr.mxu0 0.0
        %3338 = vmatpush1.msra.mxu0 0.0
        %3339 = vmatprep.subr.mxu0 0.0
        %3340 = vmatpush1.msra.mxu0 %v3304
        %3341 = vmatprep.subr.mxu0 0.0
        %3342 = vmatpush2.msra.mxu0 0.0
        %3343 = vmatprep.subr.mxu0 0.0
        %3344 = vmatpush2.msra.mxu0 0.0
        %3345 = vmatprep.subr.mxu0 0.0
        %3346 = vmatpush2.msra.mxu0 0.0
        %3347 = vmatprep.subr.mxu0 0.0
        %3348 = vmatpush2.msra.mxu0 0.0
        %3349 = vmatprep.subr.mxu0 0.0
        %3350 = vmatpush2.msra.mxu0 0.0
        %3351 = vmatprep.subr.mxu0 0.0
        %3352 = vmatpush2.msra.mxu0 0.0
        %3353 = vmatprep.subr.mxu0 0.0
        %3354 = vmatpush2.msra.mxu0 0.0
        %3355 = vmatprep.subr.mxu0 0.0
        %3356 = vmatpush2.msra.mxu0 0.0
        %3357 = vmatprep.subr.mxu0 0.0
        %3358 = vmatpush2.msra.mxu0 0.0
        %3359 = vmatprep.subr.mxu0 0.0
        %3360 = vmatpush2.msra.mxu0 0.0
        %3361 = vmatprep.subr.mxu0 0.0
        %3362 = vmatpush2.msra.mxu0 0.0
        %3363 = vmatprep.subr.mxu0 0.0
        %3364 = vmatpush2.msra.mxu0 0.0
        %3365 = vmatprep.subr.mxu0 0.0
        %3366 = vmatpush2.msra.mxu0 0.0
        %3367 = vmatprep.subr.mxu0 0.0
        %3368 = vmatpush2.msra.mxu0 0.0
        %3369 = vmatprep.subr.mxu0 0.0
        %3370 = vmatpush2.msra.mxu0 0.0
        %3371 = vmatprep.subr.mxu0 0.0
        %3372 = vmatpush2.msra.mxu0 0.0
        %3373 = vmatprep.mubr.f32.mxu0 0.0
        %3374 = vmatmul.mubr.f32.gmra.mxu0 %v3307
        %v3375 = vpop.f32.mrf.mxu0
        %v3376 = vadd.f32 0.0, %v3375
        %v3377 = vpop.f32.mrf.mxu0
        %3378 = vdwg.mxu0
        %3380 = vrot.lane.b32.xlu0 %v3376, 28
        %v3381 = vpop.permute.xlu0 %3380
        %vm3383 = vcmask 244960
        %3384 = vst.msk [vmem:[#allocation2] sm:$0xff] %vm3383, %v3381
        %3385 = vrot.lane.b32.xlu0 %v702, 98
        %v3386 = vpop.permute.xlu0 %3385
        %3387 = vrot.lane.b32.xlu0 %v758, 98
        %v3388 = vpop.permute.xlu0 %3387
        %v3389 = vsel %vm827, %v3386, 0
        %v3391 = vsel %vm827, %v3388, 0
        %3393 = vmatprep.subr.mxu0 0.0
        %3394 = vmatpush1.xpose.msra.mxu0 0.0
        %3395 = vmatprep.subr.mxu0 0.0
        %3396 = vmatpush1.xpose.msra.mxu0 0.0
        %3397 = vmatprep.subr.mxu0 0.0
        %3398 = vmatpush1.xpose.msra.mxu0 0.0
        %3399 = vmatprep.subr.mxu0 0.0
        %3400 = vmatpush1.xpose.msra.mxu0 0.0
        %3401 = vmatprep.subr.mxu0 0.0
        %3402 = vmatpush1.xpose.msra.mxu0 0.0
        %3403 = vmatprep.subr.mxu0 0.0
        %3404 = vmatpush1.xpose.msra.mxu0 0.0
        %3405 = vmatprep.subr.mxu0 0.0
        %3406 = vmatpush1.xpose.msra.mxu0 0.0
        %3407 = vmatprep.subr.mxu0 0.0
        %3408 = vmatpush1.xpose.msra.mxu0 0.0
        %3409 = vmatprep.subr.mxu0 0.0
        %3410 = vmatpush1.xpose.msra.mxu0 0.0
        %3411 = vmatprep.subr.mxu0 0.0
        %3412 = vmatpush1.xpose.msra.mxu0 0.0
        %3413 = vmatprep.subr.mxu0 0.0
        %3414 = vmatpush1.xpose.msra.mxu0 0.0
        %3415 = vmatprep.subr.mxu0 0.0
        %3416 = vmatpush1.xpose.msra.mxu0 0.0
        %3417 = vmatprep.subr.mxu0 0.0
        %3418 = vmatpush1.xpose.msra.mxu0 0.0
        %3419 = vmatprep.subr.mxu0 0.0
        %3420 = vmatpush1.xpose.msra.mxu0 0.0
        %3421 = vmatprep.subr.mxu0 0.0
        %3422 = vmatpush1.xpose.msra.mxu0 0.0
        %3423 = vmatprep.subr.mxu0 0.0
        %3424 = vmatpush1.xpose.msra.mxu0 %v3391
        %3425 = vmatprep.subr.mxu0 0.0
        %3426 = vmatpush2.xpose.msra.mxu0 0.0
        %3427 = vmatprep.subr.mxu0 0.0
        %3428 = vmatpush2.xpose.msra.mxu0 0.0
        %3429 = vmatprep.subr.mxu0 0.0
        %3430 = vmatpush2.xpose.msra.mxu0 0.0
        %3431 = vmatprep.subr.mxu0 0.0
        %3432 = vmatpush2.xpose.msra.mxu0 0.0
        %3433 = vmatprep.subr.mxu0 0.0
        %3434 = vmatpush2.xpose.msra.mxu0 0.0
        %3435 = vmatprep.subr.mxu0 0.0
        %3436 = vmatpush2.xpose.msra.mxu0 0.0
        %3437 = vmatprep.subr.mxu0 0.0
        %3438 = vmatpush2.xpose.msra.mxu0 0.0
        %3439 = vmatprep.subr.mxu0 0.0
        %3440 = vmatpush2.xpose.msra.mxu0 0.0
        %3441 = vmatprep.subr.mxu0 0.0
        %3442 = vmatpush2.xpose.msra.mxu0 0.0
        %3443 = vmatprep.subr.mxu0 0.0
        %3444 = vmatpush2.xpose.msra.mxu0 0.0
        %3445 = vmatprep.subr.mxu0 0.0
        %3446 = vmatpush2.xpose.msra.mxu0 0.0
        %3447 = vmatprep.subr.mxu0 0.0
        %3448 = vmatpush2.xpose.msra.mxu0 0.0
        %3449 = vmatprep.subr.mxu0 0.0
        %3450 = vmatpush2.xpose.msra.mxu0 0.0
        %3451 = vmatprep.subr.mxu0 0.0
        %3452 = vmatpush2.xpose.msra.mxu0 0.0
        %3453 = vmatprep.subr.mxu0 0.0
        %3454 = vmatpush2.xpose.msra.mxu0 0.0
        %3455 = vmatprep.subr.mxu0 0.0
        %3456 = vmatpush2.xpose.msra.mxu0 0.0
        %3457 = vmatprep.mubr.f32.mxu0 0.0
        %3458 = vmatmul.mubr.f32.gmra.mxu0 %v3389
        %v3459 = vpop.f32.mrf.mxu0
        %v3460 = vadd.f32 %v826, %v3459
        %v3461 = vpop.f32.mrf.mxu0
        %3462 = vdwg.mxu0
        %v3463 = vsel %vm904, %v3460, -inf
        %3464 = vmax.xlane.f32.xlu0 %v3463
        %v3465 = vpop.xlane.xlu0 %3464
        %v3466 = vsub.f32 %v3460, %v3465
        %v3467 = vmul.f32 %v3466, 1.442695
        %v3468 = vpow.pop %v3467
        %v3469 = vsel %vm904, %v3468, 0.0
        %3470 = vadd.xlane.f32.xlu0 %v3469
        %v3471 = vpop.xlane.xlu0 %3470
        %v3472 = vrcp.pop %v3471
        %v3473 = vmul.f32 %v3468, %v3472
        %3474 = vrot.lane.b32.xlu0 %v821, 98
        %v3475 = vpop.permute.xlu0 %3474
        %v3478 = vsel %vm904, %v3473, 0
        %3480 = vmatprep.subr.mxu0 0.0
        %3481 = vmatpush1.msra.mxu0 0.0
        %3482 = vmatprep.subr.mxu0 0.0
        %3483 = vmatpush1.msra.mxu0 0.0
        %3484 = vmatprep.subr.mxu0 0.0
        %3485 = vmatpush1.msra.mxu0 0.0
        %3486 = vmatprep.subr.mxu0 0.0
        %3487 = vmatpush1.msra.mxu0 0.0
        %3488 = vmatprep.subr.mxu0 0.0
        %3489 = vmatpush1.msra.mxu0 0.0
        %3490 = vmatprep.subr.mxu0 0.0
        %3491 = vmatpush1.msra.mxu0 0.0
        %3492 = vmatprep.subr.mxu0 0.0
        %3493 = vmatpush1.msra.mxu0 0.0
        %3494 = vmatprep.subr.mxu0 0.0
        %3495 = vmatpush1.msra.mxu0 0.0
        %3496 = vmatprep.subr.mxu0 0.0
        %3497 = vmatpush1.msra.mxu0 0.0
        %3498 = vmatprep.subr.mxu0 0.0
        %3499 = vmatpush1.msra.mxu0 0.0
        %3500 = vmatprep.subr.mxu0 0.0
        %3501 = vmatpush1.msra.mxu0 0.0
        %3502 = vmatprep.subr.mxu0 0.0
        %3503 = vmatpush1.msra.mxu0 0.0
        %3504 = vmatprep.subr.mxu0 0.0
        %3505 = vmatpush1.msra.mxu0 0.0
        %3506 = vmatprep.subr.mxu0 0.0
        %3507 = vmatpush1.msra.mxu0 0.0
        %3508 = vmatprep.subr.mxu0 0.0
        %3509 = vmatpush1.msra.mxu0 0.0
        %3510 = vmatprep.subr.mxu0 0.0
        %3511 = vmatpush1.msra.mxu0 %v3475
        %3512 = vmatprep.subr.mxu0 0.0
        %3513 = vmatpush2.msra.mxu0 0.0
        %3514 = vmatprep.subr.mxu0 0.0
        %3515 = vmatpush2.msra.mxu0 0.0
        %3516 = vmatprep.subr.mxu0 0.0
        %3517 = vmatpush2.msra.mxu0 0.0
        %3518 = vmatprep.subr.mxu0 0.0
        %3519 = vmatpush2.msra.mxu0 0.0
        %3520 = vmatprep.subr.mxu0 0.0
        %3521 = vmatpush2.msra.mxu0 0.0
        %3522 = vmatprep.subr.mxu0 0.0
        %3523 = vmatpush2.msra.mxu0 0.0
        %3524 = vmatprep.subr.mxu0 0.0
        %3525 = vmatpush2.msra.mxu0 0.0
        %3526 = vmatprep.subr.mxu0 0.0
        %3527 = vmatpush2.msra.mxu0 0.0
        %3528 = vmatprep.subr.mxu0 0.0
        %3529 = vmatpush2.msra.mxu0 0.0
        %3530 = vmatprep.subr.mxu0 0.0
        %3531 = vmatpush2.msra.mxu0 0.0
        %3532 = vmatprep.subr.mxu0 0.0
        %3533 = vmatpush2.msra.mxu0 0.0
        %3534 = vmatprep.subr.mxu0 0.0
        %3535 = vmatpush2.msra.mxu0 0.0
        %3536 = vmatprep.subr.mxu0 0.0
        %3537 = vmatpush2.msra.mxu0 0.0
        %3538 = vmatprep.subr.mxu0 0.0
        %3539 = vmatpush2.msra.mxu0 0.0
        %3540 = vmatprep.subr.mxu0 0.0
        %3541 = vmatpush2.msra.mxu0 0.0
        %3542 = vmatprep.subr.mxu0 0.0
        %3543 = vmatpush2.msra.mxu0 0.0
        %3544 = vmatprep.mubr.f32.mxu0 0.0
        %3545 = vmatmul.mubr.f32.gmra.mxu0 %v3478
        %v3546 = vpop.f32.mrf.mxu0
        %v3547 = vadd.f32 0.0, %v3546
        %v3548 = vpop.f32.mrf.mxu0
        %3549 = vdwg.mxu0
        %3551 = vrot.lane.b32.xlu0 %v3547, 30
        %v3552 = vpop.permute.xlu0 %3551
        %vm3554 = vcmask 261360
        %3555 = vst.msk [vmem:[#allocation2] sm:$0xff] %vm3554, %v3552
        %v3556 = vld [vmem:[#allocation2] sm:$0xff]
        %v3557 = vpack.c.bf16 %v3556, %v3556
        %v3558 = vld [vmem:[%s9] sm:$0xf]
        %v3559 = vld [vmem:[%s9 + $0x4] sm:$0xf]
        %v3560 = vld [vmem:[%s9 + $0x8] sm:$0xf]
        %v3561 = vld [vmem:[%s9 + $0xc] sm:$0xf]
        %v3562 = vld [vmem:[%s10] sm:$0x1]
        %v3564 = vlaneseq
        %v3565 = vshrl.u32 %v3564, 7
        %v3566 = vsub.s32 0, %v3565
        %v3567 = vrot.slane %v3562, %v3566
        %v3573 = vunpack.c.l.b16 %v3558
        %v3574 = vunpack.c.l.b16 %v3559
        %v3575 = vunpack.c.l.b16 %v3560
        %v3576 = vunpack.c.l.b16 %v3561
        %v3577 = vpack.c.b16 %v3574, %v3573
        %v3578 = vpack.c.b16 %v3576, %v3575
        %v3582 = vsel %vm611, %v3557, 0
        %3584 = vmatprep.subr.bf16.mxu0 0
        %3585 = vmatpush1.bf16.msra.mxu0 0
        %3586 = vmatprep.subr.bf16.mxu0 0
        %3587 = vmatpush1.bf16.msra.mxu0 0
        %3588 = vmatprep.subr.bf16.mxu0 0
        %3589 = vmatpush1.bf16.msra.mxu0 0
        %3590 = vmatprep.subr.bf16.mxu0 0
        %3591 = vmatpush1.bf16.msra.mxu0 0
        %3592 = vmatprep.subr.bf16.mxu0 0
        %3593 = vmatpush1.bf16.msra.mxu0 0
        %3594 = vmatprep.subr.bf16.mxu0 0
        %3595 = vmatpush1.bf16.msra.mxu0 0
        %3596 = vmatprep.subr.bf16.mxu0 0
        %3597 = vmatpush1.bf16.msra.mxu0 %v3578
        %3598 = vmatprep.subr.bf16.mxu0 0
        %3599 = vmatpush1.bf16.msra.mxu0 %v3577
        %3600 = vmatprep.subr.bf16.mxu0 0
        %3601 = vmatpush2.bf16.msra.mxu0 0
        %3602 = vmatprep.subr.bf16.mxu0 0
        %3603 = vmatpush2.bf16.msra.mxu0 0
        %3604 = vmatprep.subr.bf16.mxu0 0
        %3605 = vmatpush2.bf16.msra.mxu0 0
        %3606 = vmatprep.subr.bf16.mxu0 0
        %3607 = vmatpush2.bf16.msra.mxu0 0
        %3608 = vmatprep.subr.bf16.mxu0 0
        %3609 = vmatpush2.bf16.msra.mxu0 0
        %3610 = vmatprep.subr.bf16.mxu0 0
        %3611 = vmatpush2.bf16.msra.mxu0 0
        %3612 = vmatprep.subr.bf16.mxu0 0
        %3613 = vmatpush2.bf16.msra.mxu0 0
        %3614 = vmatprep.subr.bf16.mxu0 0
        %3615 = vmatpush2.bf16.msra.mxu0 0
        %3616 = vmatprep.mubr.bf16.mxu0 0
        %3617 = vmatmul.mubr.bf16.gmra.mxu0 %v3582
        %v3618 = vpop.f32.mrf.mxu0
        %v3619 = vadd.f32 %v3567, %v3618
        %v3620 = vpop.f32.mrf.mxu0
        %v3621 = vpop.f32.mrf.mxu0
        %v3622 = vpop.f32.mrf.mxu0
        %3623 = vdwg.mxu0
        %v3624 = vadd.f32 %v3619, %v608
        %v3625 = vld [vmem:[%s11] sm:$0x1]
        %v3626 = vld [vmem:[%s12] sm:$0x1]
        %v3627 = vsel %vm611, %v3624, 0.0
        %3628 = vadd.xlane.f32.xlu0 %v3627
        %v3629 = vpop.xlane.xlu0 %3628
        %v3630 = vmul.f32 %v3629, %v615
        %v3631 = vsub.f32 %v3624, %v3630
        %v3632 = vmul.f32 %v3631, %v3631
        %v3633 = vsel %vm611, %v3632, 0.0
        %3634 = vadd.xlane.f32.xlu0 %v3633
        %v3635 = vpop.xlane.xlu0 %3634
        %v3636 = vmul.f32 %v3635, %v615
        %v3637 = vadd.f32 %v3636, 1e-06
        %v3638 = vrsqrt.pop %v3637
        %v3639 = vmul.f32 %v3631, %v3638
        %v3641 = vlaneseq
        %v3642 = vshrl.u32 %v3641, 7
        %v3643 = vsub.s32 0, %v3642
        %v3644 = vrot.slane %v3625, %v3643
        %v3646 = vmul.f32 %v3639, %v3644
        %v3648 = vlaneseq
        %v3649 = vshrl.u32 %v3648, 7
        %v3650 = vsub.s32 0, %v3649
        %v3651 = vrot.slane %v3626, %v3650
        %v3653 = vadd.f32 %v3646, %v3651
        %v3654 = vpack.c.bf16 %v3653, %v3653
        %v3655 = vld [vmem:[%s13] sm:$0xf]
        %v3656 = vld [vmem:[%s13 + $0x4] sm:$0xf]
        %v3657 = vld [vmem:[%s13 + $0x8] sm:$0xf]
        %v3658 = vld [vmem:[%s13 + $0xc] sm:$0xf]
        %v3659 = vld [vmem:[%s14] sm:$0x1]
        %v3661 = vlaneseq
        %v3662 = vshrl.u32 %v3661, 7
        %v3663 = vsub.s32 0, %v3662
        %v3664 = vrot.slane %v3659, %v3663
        %v3670 = vunpack.c.l.b16 %v3655
        %v3671 = vunpack.c.l.b16 %v3656
        %v3672 = vunpack.c.l.b16 %v3657
        %v3673 = vunpack.c.l.b16 %v3658
        %v3674 = vpack.c.b16 %v3671, %v3670
        %v3675 = vpack.c.b16 %v3673, %v3672
        %v3679 = vsel %vm611, %v3654, 0
        %3681 = vmatprep.subr.bf16.mxu0 0
        %3682 = vmatpush1.bf16.msra.mxu0 0
        %3683 = vmatprep.subr.bf16.mxu0 0
        %3684 = vmatpush1.bf16.msra.mxu0 0
        %3685 = vmatprep.subr.bf16.mxu0 0
        %3686 = vmatpush1.bf16.msra.mxu0 0
        %3687 = vmatprep.subr.bf16.mxu0 0
        %3688 = vmatpush1.bf16.msra.mxu0 0
        %3689 = vmatprep.subr.bf16.mxu0 0
        %3690 = vmatpush1.bf16.msra.mxu0 0
        %3691 = vmatprep.subr.bf16.mxu0 0
        %3692 = vmatpush1.bf16.msra.mxu0 0
        %3693 = vmatprep.subr.bf16.mxu0 0
        %3694 = vmatpush1.bf16.msra.mxu0 %v3675
        %3695 = vmatprep.subr.bf16.mxu0 0
        %3696 = vmatpush1.bf16.msra.mxu0 %v3674
        %3697 = vmatprep.subr.bf16.mxu0 0
        %3698 = vmatpush2.bf16.msra.mxu0 0
        %3699 = vmatprep.subr.bf16.mxu0 0
        %3700 = vmatpush2.bf16.msra.mxu0 0
        %3701 = vmatprep.subr.bf16.mxu0 0
        %3702 = vmatpush2.bf16.msra.mxu0 0
        %3703 = vmatprep.subr.bf16.mxu0 0
        %3704 = vmatpush2.bf16.msra.mxu0 0
        %3705 = vmatprep.subr.bf16.mxu0 0
        %3706 = vmatpush2.bf16.msra.mxu0 0
        %3707 = vmatprep.subr.bf16.mxu0 0
        %3708 = vmatpush2.bf16.msra.mxu0 0
        %3709 = vmatprep.subr.bf16.mxu0 0
        %3710 = vmatpush2.bf16.msra.mxu0 0
        %3711 = vmatprep.subr.bf16.mxu0 0
        %3712 = vmatpush2.bf16.msra.mxu0 0
        %3713 = vmatprep.mubr.bf16.mxu0 0
        %3714 = vmatmul.mubr.bf16.gmra.mxu0 %v3679
        %v3715 = vpop.f32.mrf.mxu0
        %v3716 = vadd.f32 %v3664, %v3715
        %v3717 = vpop.f32.mrf.mxu0
        %v3718 = vpop.f32.mrf.mxu0
        %v3719 = vpop.f32.mrf.mxu0
        %3720 = vdwg.mxu0
        %v3721 = vmul.f32 %v3716, 0.5
        %v3722 = vmul.f32 %v3716, 0.70710677
        %v3723 = verf.f32.pop %v3722
        %v3724 = vadd.f32 %v3723, 1.0
        %v3725 = vmul.f32 %v3721, %v3724
        %v3726 = vpack.c.bf16 %v3725, %v3725
        %v3727 = vld [vmem:[%s15] sm:$0xf]
        %v3728 = vld [vmem:[%s15 + $0x4] sm:$0xf]
        %v3729 = vld [vmem:[%s15 + $0x8] sm:$0xf]
        %v3730 = vld [vmem:[%s15 + $0xc] sm:$0xf]
        %v3731 = vld [vmem:[%s15 + $0x10] sm:$0xf]
        %v3732 = vld [vmem:[%s15 + $0x14] sm:$0xf]
        %v3733 = vld [vmem:[%s15 + $0x18] sm:$0xf]
        %v3734 = vld [vmem:[%s15 + $0x1c] sm:$0xf]
        %v3735 = vld [vmem:[%s15 + $0x20] sm:$0xf]
        %v3736 = vld [vmem:[%s15 + $0x24] sm:$0xf]
        %v3737 = vld [vmem:[%s15 + $0x28] sm:$0xf]
        %v3738 = vld [vmem:[%s15 + $0x2c] sm:$0xf]
        %v3739 = vld [vmem:[%s15 + $0x30] sm:$0xf]
        %v3740 = vld [vmem:[%s15 + $0x34] sm:$0xf]
        %v3741 = vld [vmem:[%s15 + $0x38] sm:$0xf]
        %v3742 = vld [vmem:[%s15 + $0x3c] sm:$0xf]
        %v3743 = vld [vmem:[%s16] sm:$0x1]
        %v3745 = vlaneseq
        %v3746 = vshrl.u32 %v3745, 7
        %v3747 = vsub.s32 0, %v3746
        %v3748 = vrot.slane %v3743, %v3747
        %v3766 = vunpack.c.l.b16 %v3727
        %v3767 = vunpack.c.l.b16 %v3728
        %v3768 = vunpack.c.l.b16 %v3729
        %v3769 = vunpack.c.l.b16 %v3730
        %v3770 = vunpack.c.l.b16 %v3731
        %v3771 = vunpack.c.l.b16 %v3732
        %v3772 = vunpack.c.l.b16 %v3733
        %v3773 = vunpack.c.l.b16 %v3734
        %v3774 = vunpack.c.l.b16 %v3735
        %v3775 = vunpack.c.l.b16 %v3736
        %v3776 = vunpack.c.l.b16 %v3737
        %v3777 = vunpack.c.l.b16 %v3738
        %v3778 = vunpack.c.l.b16 %v3739
        %v3779 = vunpack.c.l.b16 %v3740
        %v3780 = vunpack.c.l.b16 %v3741
        %v3781 = vunpack.c.l.b16 %v3742
        %v3782 = vpack.c.b16 %v3767, %v3766
        %v3783 = vpack.c.b16 %v3769, %v3768
        %v3784 = vpack.c.b16 %v3771, %v3770
        %v3785 = vpack.c.b16 %v3773, %v3772
        %v3786 = vpack.c.b16 %v3775, %v3774
        %v3787 = vpack.c.b16 %v3777, %v3776
        %v3788 = vpack.c.b16 %v3779, %v3778
        %v3789 = vpack.c.b16 %v3781, %v3780
        %3798 = vmatprep.subr.bf16.mxu0 0
        %3799 = vmatpush1.bf16.msra.mxu0 %v3789
        %3800 = vmatprep.subr.bf16.mxu0 0
        %3801 = vmatpush1.bf16.msra.mxu0 %v3788
        %3802 = vmatprep.subr.bf16.mxu0 0
        %3803 = vmatpush1.bf16.msra.mxu0 %v3787
        %3804 = vmatprep.subr.bf16.mxu0 0
        %3805 = vmatpush1.bf16.msra.mxu0 %v3786
        %3806 = vmatprep.subr.bf16.mxu0 0
        %3807 = vmatpush1.bf16.msra.mxu0 %v3785
        %3808 = vmatprep.subr.bf16.mxu0 0
        %3809 = vmatpush1.bf16.msra.mxu0 %v3784
        %3810 = vmatprep.subr.bf16.mxu0 0
        %3811 = vmatpush1.bf16.msra.mxu0 %v3783
        %3812 = vmatprep.subr.bf16.mxu0 0
        %3813 = vmatpush1.bf16.msra.mxu0 %v3782
        %3814 = vmatprep.subr.bf16.mxu0 0
        %3815 = vmatpush2.bf16.msra.mxu0 0
        %3816 = vmatprep.subr.bf16.mxu0 0
        %3817 = vmatpush2.bf16.msra.mxu0 0
        %3818 = vmatprep.subr.bf16.mxu0 0
        %3819 = vmatpush2.bf16.msra.mxu0 0
        %3820 = vmatprep.subr.bf16.mxu0 0
        %3821 = vmatpush2.bf16.msra.mxu0 0
        %3822 = vmatprep.subr.bf16.mxu0 0
        %3823 = vmatpush2.bf16.msra.mxu0 0
        %3824 = vmatprep.subr.bf16.mxu0 0
        %3825 = vmatpush2.bf16.msra.mxu0 0
        %3826 = vmatprep.subr.bf16.mxu0 0
        %3827 = vmatpush2.bf16.msra.mxu0 0
        %3828 = vmatprep.subr.bf16.mxu0 0
        %3829 = vmatpush2.bf16.msra.mxu0 0
        %3830 = vmatprep.mubr.bf16.mxu0 0
        %3831 = vmatmul.mubr.bf16.gmra.mxu0 %v3726
        %v3832 = vpop.f32.mrf.mxu0
        %v3833 = vadd.f32 %v3748, %v3832
        %v3834 = vpop.f32.mrf.mxu0
        %v3835 = vpop.f32.mrf.mxu0
        %v3836 = vpop.f32.mrf.mxu0
        %3837 = vdwg.mxu0
        %v3838 = vadd.f32 %v3833, %v3624
        %3839 = vst.msk [vmem:[%s602] sm:$0xff] %vm611, %v3838
        %s3840 = sand.u32 %s404, 1
        %s3841 = scalar_lea.sflag [#allocation5], %s3840
        %s3842 = sand.u32 %s404, 1
        %s3843 = smul.addr %s3842, 8
        %s3844 = scalar_lea.vmem [#allocation12], %s3843
        // Predicated region
        $region109: #{tpu_custom_call.1} parent=87 // pred_check
          %p3845 = pneg %p414
        $region110: #{tpu_custom_call.1} parent=87 // pred_check_branch
          %3847 = sbr.rel (%p3845) target = $region112
        $region111: #{tpu_custom_call.1} parent=87 // pred_region
          %s3849 = ssub.s32 128, 128
          %3850 = vsyncadd %s3841, %s3849
          %s3851 = smul.addr %s34, 128
          %s3852 = scalar_lea.hbm %s17, %s3851
          %s3854 = sshll.u32 %s3844, 4
          %s3855 = int_to_ptr.vmem [resolvable:$true] %s3854
          %3857 = dma.vmem_to_hbm [thread:$0]  %s3855, 128, %s3852, %s3841
        $region112: #{tpu_custom_call.1} parent=87 // pred_fallthru
          _
      $region88: #{tpu_custom_call.1} parent=5 // pred_fallthru
        _
      %p3858 = scmp.le.s32.totalorder 2, %s29
      // Predicated region
      $region113: #{tpu_custom_call.1} parent=5 // pred_check
        %p3859 = pneg %p3858
      $region114: #{tpu_custom_call.1} parent=5 // pred_check_branch
        %3861 = sbr.rel (%p3859) target = $region116
      $region115: #{tpu_custom_call.1} parent=5 // pred_region
        %s3862 = ssub.s32 %s29, 2
        // Predicated region
        $region117: #{tpu_custom_call.1} parent=115 // pred_check
          %p3863 = pneg %p420
        $region118: #{tpu_custom_call.1} parent=115 // pred_check_branch
          %3865 = sbr.rel (%p3863) target = $region120
        $region119: #{tpu_custom_call.1} parent=115 // pred_region
          %s3866 = sand.u32 %s405, 1
          %s3867 = scalar_lea.sflag [#allocation5], %s3866
          %s3868 = sand.u32 %s405, 1
          %s3869 = smul.addr %s3868, 8
          %s3870 = scalar_lea.vmem [#allocation12], %s3869
          %3871 = dma.done %s3867, 128
        $region120: #{tpu_custom_call.1} parent=115 // pred_fallthru
          _
      $region116: #{tpu_custom_call.1} parent=5 // pred_fallthru
        _
    $region6: #{tpu_custom_call.1} parent=1 // loop_footer
      %s33 = sadd.s32 1, %s29
    $region7: #{tpu_custom_call.1} parent=1 // loop_footer_branch
      %28 = sbr.rel target = $region3
    $region8: #{tpu_custom_call.1} parent=1 // loop_exit
      _
    %3872 = vsyncpa [#allocation4], 1
    %s3873 = scalar_lea.sflag [#allocation4], 1
    %3874 = vsyncpa %s3873, 1
    %3875 = vsyncpa [#allocation7], 1
    %3876 = vsyncpa [#allocation10], 1
    %3877 = vsyncpa [#allocation5], 1
    %s3878 = scalar_lea.sflag [#allocation5], 1
    %3879 = vsyncpa %s3878, 1

</llo_original>
